<compile_context>
chip_gen: v7x
topology: tpu7x:2x2x1
jax: 0.10.0
libtpu: 0.0.40
codegen_flags: <defaults>
</compile_context>

<pallas_src>
import math

import jax
import jax.numpy as jnp
from jax import lax
from jax.experimental import pallas as pl
from jax.experimental.pallas import tpu as pltpu

LN_EPS = 1e-5
MATMUL_DTYPE = jnp.bfloat16        # MXU inputs; accumulation stays float32


def _round_up(x, m):
    return (x + m - 1) // m * m


def _vmem_capacity_bytes():
    """Physical VMEM of the local TPU generation (fallback: v7x-sized)."""
    try:
        return int(pltpu.get_tpu_info().vmem_capacity_bytes)
    except Exception:
        return 64 * 1024 * 1024


def _vmem_limit_bytes():
    # ~25% headroom for compiler-internal scratch & pipeline buffers:
    # -> ~96 MiB on 128 MiB v5e/v6e, ~48 MiB on 64 MiB v7x.
    return min(_vmem_capacity_bytes() * 3 // 4, 100 * 1024 * 1024)


# --------------------------------------------------------------------------
# Fused decoder stack kernel: grid=(B, num_layers).
#   * batch axis "parallel"  -> megacore sharding on v7x, per-batch blocks
#   * layer axis "arbitrary" -> activation carried in the resident out block
#   * shared weights use constant index maps -> DMA'd once (single-buffered)
# --------------------------------------------------------------------------
def make_decoder_stack_kernel(S, M, D, nhead):
    dh = D // nhead
    scale = 1.0 / math.sqrt(dh)

    def kernel(tgt_ref, mem_ref,
               ln_g_ref, ln_b_ref,
               sa_wqkv_ref, sa_bqkv_ref, sa_wo_ref, sa_bo_ref,
               ca_wq_ref, ca_bq_ref, ca_wkv_ref, ca_bkv_ref,
               ca_wo_ref, ca_bo_ref,
               w1_ref, b1_ref, w2_ref, b2_ref,
               out_ref,
               memk_scr, memv_scr):
        layer = pl.program_id(1)

        @pl.when(layer == 0)
        def _():
            # activation carry lives in the resident per-batch output block
            out_ref[...] = tgt_ref[...]
            # memory K/V identical for every shared-weight layer:
            # project once per batch element, keep in VMEM scratch (bf16).
            mem = mem_ref[...].astype(MATMUL_DTYPE)
            kv = jnp.dot(mem, ca_wkv_ref[...],
                         preferred_element_type=jnp.float32) + ca_bkv_ref[...]
            memk_scr[...] = kv[:, :D].astype(MATMUL_DTYPE)
            memv_scr[...] = kv[:, D:].astype(MATMUL_DTYPE)

        # Hoisted: one broadcast of gamma/beta reused by all 4 norm sites.
        gamma = jnp.broadcast_to(ln_g_ref[...], (S, D))
        beta = jnp.broadcast_to(ln_b_ref[...], (S, D))

        def layer_norm(x):
            mu = jnp.mean(x, axis=-1, keepdims=True)
            var = jnp.mean(jnp.square(x - mu), axis=-1, keepdims=True)
            return (x - mu) * lax.rsqrt(var + LN_EPS) * gamma + beta

        def mha(q, k, v, wo_ref, bo_ref):
            # q: (S, D), k/v: (Sk, D).  Per-head contexts stay in registers;
            # single full-width output projection at the end.
            q = q.astype(MATMUL_DTYPE)
            k = k.astype(MATMUL_DTYPE)
            v = v.astype(MATMUL_DTYPE)
            ohs = []
            for h in range(nhead):                       # static unroll
                lo = h * dh
                qh = q[:, lo:lo + dh]
                kh = k[:, lo:lo + dh]
                vh = v[:, lo:lo + dh]
                s = jnp.einsum('qd,kd->qk', qh, kh,
                               preferred_element_type=jnp.float32) * scale
                s = s - jnp.max(s, axis=-1, keepdims=True)
                p = jnp.exp(s)
                # approx reciprocal (EUP slot); use exact divide for bitwise
                # parity with the PyTorch reference if needed.
                p = p * pl.reciprocal(jnp.sum(p, axis=-1, keepdims=True),
                                      approx=True)
                ohs.append(jnp.dot(p.astype(MATMUL_DTYPE), vh,
                                   preferred_element_type=jnp.float32))
            ctx = jnp.concatenate(ohs, axis=-1)          # (S, D) in registers
            return jnp.dot(ctx.astype(MATMUL_DTYPE), wo_ref[...],
                           preferred_element_type=jnp.float32) + bo_ref[...]

        x = out_ref[...]                                 # (S, D) f32

        # 1) norm -> self-attention -> add(normed) -> norm
        normalized_tgt = layer_norm(x)
        qkv = jnp.dot(normalized_tgt.astype(MATMUL_DTYPE), sa_wqkv_ref[...],
                      preferred_element_type=jnp.float32) + sa_bqkv_ref[...]
        sa = mha(qkv[:, :D], qkv[:, D:2 * D], qkv[:, 2 * D:],
                 sa_wo_ref, sa_bo_ref)
        add_norm_1 = layer_norm(normalized_tgt + sa)

        # 2) cross attention (query = add_norm_1, K/V = cached memory proj)
        q_ca = jnp.dot(add_norm_1.astype(MATMUL_DTYPE), ca_wq_ref[...],
                       preferred_element_type=jnp.float32) + ca_bq_ref[...]
        ca = mha(q_ca, memk_scr[...], memv_scr[...], ca_wo_ref, ca_bo_ref)
        add_norm_2 = layer_norm(add_norm_1 + ca)

        # 3) feed forward: Linear1 -> ReLU -> Square -> Linear2
        h1 = jnp.dot(add_norm_2.astype(MATMUL_DTYPE), w1_ref[...],
                     preferred_element_type=jnp.float32) + b1_ref[...]
        h1 = jnp.square(jnp.maximum(h1, 0.0))
        ff = jnp.dot(h1.astype(MATMUL_DTYPE), w2_ref[...],
                     preferred_element_type=jnp.float32) + b2_ref[...]

        out_ref[...] = layer_norm(add_norm_2 + ff)

    return kernel


def decoder_stack(tgt_emb, memory, lp, nhead, num_layers):
    B, S, D = tgt_emb.shape
    M = memory.shape[1]
    tgt = tgt_emb.astype(jnp.float32)
    mem = memory.astype(jnp.float32)

    wdt = MATMUL_DTYPE
    weights = (
        lp['ln_g'], lp['ln_b'],
        lp['sa_wqkv'].astype(wdt), lp['sa_bqkv'],
        lp['sa_wo'].astype(wdt), lp['sa_bo'],
        lp['ca_wq'].astype(wdt), lp['ca_bq'],
        lp['ca_wkv'].astype(wdt), lp['ca_bkv'],
        lp['ca_wo'].astype(wdt), lp['ca_bo'],
        lp['w1'].astype(wdt), lp['b1'],
        lp['w2'].astype(wdt), lp['b2'],
    )

    act_spec = pl.BlockSpec((None, S, D), lambda b, l: (b, 0, 0))
    mem_spec = pl.BlockSpec((None, M, D), lambda b, l: (b, 0, 0))
    out_spec = pl.BlockSpec((None, S, D), lambda b, l: (b, 0, 0))

    def weight_spec(a, single_buffer):
        nd = a.ndim
        idx = lambda b, l, _nd=nd: (0,) * _nd    # shared weights: DMA once
        if single_buffer:
            # constant block index -> second pipeline buffer is dead VMEM
            return pl.BlockSpec(a.shape, idx, pipeline_mode=pl.Buffered(1))
        return pl.BlockSpec(a.shape, idx)

    kernel = make_decoder_stack_kernel(S, M, D, nhead)
    vmem_limit = _vmem_limit_bytes()

    def run(single_buffer):
        in_specs = ([act_spec, mem_spec]
                    + [weight_spec(a, single_buffer) for a in weights])
        return pl.pallas_call(
            kernel,
            out_shape=jax.ShapeDtypeStruct((B, S, D), jnp.float32),
            grid=(B, num_layers),
            in_specs=in_specs,
            out_specs=out_spec,
            scratch_shapes=[
                pltpu.VMEM((M, D), MATMUL_DTYPE),   # cached memory K
                pltpu.VMEM((M, D), MATMUL_DTYPE),   # cached memory V
            ],
            compiler_params=pltpu.CompilerParams(
                dimension_semantics=("parallel", "arbitrary"),
                vmem_limit_bytes=vmem_limit),
        )(tgt, mem, *weights)

    try:
        return run(True)
    except Exception:
        # pipeline_mode=pl.Buffered(1) not supported on this jax/Mosaic
        # version -> fall back to default double-buffered weight specs.
        return run(False)


# --------------------------------------------------------------------------
# Output linear: tiled over (row tiles, vocab tiles), vocab padded to 128
# lanes for dense vst; activation pre-cast to bf16 in the wrapper.
# --------------------------------------------------------------------------
def output_linear_kernel(x_ref, w_ref, b_ref, o_ref):
    y = jnp.dot(x_ref[...], w_ref[...],
                preferred_element_type=jnp.float32) + b_ref[...]
    o_ref[...] = y.astype(o_ref.dtype)


def output_linear(x, w, b, *, tm=None, tn=None):
    B, S, D = x.shape
    V = w.shape[1]
    rows = B * S

    if tm is None:
        tm = 256
    if tn is None:
        # bigger vocab tiles on the 128 MiB parts (v5e/v6e), 512 on v7x
        tn = 1024 if _vmem_capacity_bytes() >= 100 * 1024 * 1024 else 512

    # bf16 once in the wrapper: halves x-tile DMA bytes, no per-tile cast
    x2 = x.reshape(rows, D).astype(MATMUL_DTYPE)

    tn = min(tn, _round_up(V, 128))
    tm = min(tm, _round_up(rows, 8))
    rows_p = _round_up(rows, tm)
    v_p = _round_up(V, tn)

    if rows_p != rows:
        x2 = jnp.pad(x2, ((0, rows_p - rows), (0, 0)))
    w_p = w if v_p == V else jnp.pad(w, ((0, 0), (0, v_p - V)))
    b2 = b.reshape(1, V).astype(jnp.float32)
    b_p = b2 if v_p == V else jnp.pad(b2, ((0, 0), (0, v_p - V)))

    out = pl.pallas_call(
        output_linear_kernel,
        out_shape=jax.ShapeDtypeStruct((rows_p, v_p), jnp.float32),
        grid=(rows_p // tm, v_p // tn),
        in_specs=[pl.BlockSpec((tm, D), lambda i, j: (i, 0)),
                  pl.BlockSpec((D, tn), lambda i, j: (0, j)),
                  pl.BlockSpec((1, tn), lambda i, j: (0, j))],
        out_specs=pl.BlockSpec((tm, tn), lambda i, j: (i, j)),
        compiler_params=pltpu.CompilerParams(
            dimension_semantics=("parallel", "parallel"),
            vmem_limit_bytes=_vmem_limit_bytes()),
    )(x2, w_p.astype(MATMUL_DTYPE), b_p)
    return out[:rows, :V].reshape(B, S, V)


# --------------------------------------------------------------------------
# Glue (plain JAX): embedding lookup, sinusoidal positional encoding, params
# --------------------------------------------------------------------------
def positional_encoding(seq_len, d_model):
    pos = jnp.arange(seq_len, dtype=jnp.float32)[:, None]
    div = jnp.exp(jnp.arange(0, d_model, 2, dtype=jnp.float32) *
                  (-math.log(10000.0) / d_model))
    pe = jnp.zeros((seq_len, d_model), dtype=jnp.float32)
    pe = pe.at[:, 0::2].set(jnp.sin(pos * div))
    pe = pe.at[:, 1::2].set(jnp.cos(pos * div))
    return pe[None]  # (1, seq_len, d_model)


def init_params(key, vocab, d_model, nhead, dim_ff):
    keys = iter(jax.random.split(key, 24))

    def w(shape, scale=0.05):
        return (scale * jax.random.normal(next(keys), shape)).astype(jnp.float32)

    layer = dict(
        ln_g=jnp.ones((1, d_model), jnp.float32),
        ln_b=jnp.zeros((1, d_model), jnp.float32),
        # self-attn: fused QKV projection (d_model, 3*d_model)
        sa_wqkv=w((d_model, 3 * d_model)), sa_bqkv=w((1, 3 * d_model)),
        sa_wo=w((d_model, d_model)), sa_bo=w((1, d_model)),
        # cross-attn: Q separate, fused KV (d_model, 2*d_model)
        ca_wq=w((d_model, d_model)), ca_bq=w((1, d_model)),
        ca_wkv=w((d_model, 2 * d_model)), ca_bkv=w((1, 2 * d_model)),
        ca_wo=w((d_model, d_model)), ca_bo=w((1, d_model)),
        # FFN
        w1=w((d_model, dim_ff)), b1=w((1, dim_ff)),
        w2=w((dim_ff, d_model)), b2=w((1, d_model)),
    )
    return dict(
        embedding=w((vocab, d_model), scale=1.0),
        layer=layer,
        out_w=w((d_model, vocab)),
        out_b=w((vocab,)),
    )


def transformer_decoder(tgt_ids, memory, params, nhead, num_layers):
    d_model = params['embedding'].shape[1]
    # embedding lookup + scale (glue); dropout = identity (eval mode)
    x = params['embedding'][tgt_ids] * math.sqrt(d_model)
    x = x + positional_encoding(x.shape[1], d_model)
    # NOTE: PyTorch ModuleList reuses the SAME layer object num_layers times,
    # so all layers share one weight set -> fused into one pallas_call grid.
    x = decoder_stack(x, memory, params['layer'], nhead, num_layers)
    return output_linear(x, params['out_w'], params['out_b'])


if __name__ == "__main__":
    B, S_TGT, S_MEM = 2, 8, 12
    VOCAB, D_MODEL, NHEAD, NUM_LAYERS, DIM_FF = 16, 32, 4, 2, 64

    key = jax.random.PRNGKey(0)
    k_tgt, k_mem, k_param = jax.random.split(key, 3)
    tgt_ids = jax.random.randint(k_tgt, (B, S_TGT), 0, VOCAB, dtype=jnp.int32)
    memory = jax.random.normal(k_mem, (B, S_MEM, D_MODEL), dtype=jnp.float32)
    params = init_params(k_param, VOCAB, D_MODEL, NHEAD, DIM_FF)

    out = transformer_decoder(tgt_ids, memory, params, NHEAD, NUM_LAYERS)
    out = jax.block_until_ready(out)
    assert out.shape == (B, S_TGT, VOCAB), out.shape
    assert bool(jnp.all(jnp.isfinite(out)))
    print("KERNEL_OK")
</pallas_src>

<mosaic_0001>
module attributes {stable_mosaic.version = 11 : i64} {
  func.func @kernel(%arg0: i32, %arg1: i32, %arg2: memref<1x8x32xf32, #tpu.memory_space<vmem>>, %arg3: memref<1x12x32xf32, #tpu.memory_space<vmem>>, %arg4: memref<1x32xf32, #tpu.memory_space<vmem>>, %arg5: memref<1x32xf32, #tpu.memory_space<vmem>>, %arg6: memref<32x96xbf16, #tpu.memory_space<vmem>>, %arg7: memref<1x96xf32, #tpu.memory_space<vmem>>, %arg8: memref<32x32xbf16, #tpu.memory_space<vmem>>, %arg9: memref<1x32xf32, #tpu.memory_space<vmem>>, %arg10: memref<32x32xbf16, #tpu.memory_space<vmem>>, %arg11: memref<1x32xf32, #tpu.memory_space<vmem>>, %arg12: memref<32x64xbf16, #tpu.memory_space<vmem>>, %arg13: memref<1x64xf32, #tpu.memory_space<vmem>>, %arg14: memref<32x32xbf16, #tpu.memory_space<vmem>>, %arg15: memref<1x32xf32, #tpu.memory_space<vmem>>, %arg16: memref<32x64xbf16, #tpu.memory_space<vmem>>, %arg17: memref<1x64xf32, #tpu.memory_space<vmem>>, %arg18: memref<64x32xbf16, #tpu.memory_space<vmem>>, %arg19: memref<1x32xf32, #tpu.memory_space<vmem>>, %arg20: memref<1x8x32xf32, #tpu.memory_space<vmem>>, %arg21: memref<12x32xbf16, #tpu.memory_space<vmem>>, %arg22: memref<12x32xbf16, #tpu.memory_space<vmem>>) attributes {dimension_semantics = [#tpu.dimension_semantics<parallel>, #tpu.dimension_semantics<arbitrary>], iteration_bounds = array<i64: 2, 2>, scalar_prefetch = 0 : i64, scratch_operands = 2 : i64, tpu.core_type = #tpu.core_type<tc>, window_params = [{transform_indices = @transform_0, window_bounds = array<i64: 1, 8, 32>}, {transform_indices = @transform_1, window_bounds = array<i64: 1, 12, 32>}, {pipeline_mode = #tpu.pipeline_mode<synchronous>, transform_indices = @transform_2, window_bounds = array<i64: 1, 32>}, {pipeline_mode = #tpu.pipeline_mode<synchronous>, transform_indices = @transform_3, window_bounds = array<i64: 1, 32>}, {pipeline_mode = #tpu.pipeline_mode<synchronous>, transform_indices = @transform_4, window_bounds = array<i64: 32, 96>}, {pipeline_mode = #tpu.pipeline_mode<synchronous>, transform_indices = @transform_5, window_bounds = array<i64: 1, 96>}, {pipeline_mode = #tpu.pipeline_mode<synchronous>, transform_indices = @transform_6, window_bounds = array<i64: 32, 32>}, {pipeline_mode = #tpu.pipeline_mode<synchronous>, transform_indices = @transform_7, window_bounds = array<i64: 1, 32>}, {pipeline_mode = #tpu.pipeline_mode<synchronous>, transform_indices = @transform_8, window_bounds = array<i64: 32, 32>}, {pipeline_mode = #tpu.pipeline_mode<synchronous>, transform_indices = @transform_9, window_bounds = array<i64: 1, 32>}, {pipeline_mode = #tpu.pipeline_mode<synchronous>, transform_indices = @transform_10, window_bounds = array<i64: 32, 64>}, {pipeline_mode = #tpu.pipeline_mode<synchronous>, transform_indices = @transform_11, window_bounds = array<i64: 1, 64>}, {pipeline_mode = #tpu.pipeline_mode<synchronous>, transform_indices = @transform_12, window_bounds = array<i64: 32, 32>}, {pipeline_mode = #tpu.pipeline_mode<synchronous>, transform_indices = @transform_13, window_bounds = array<i64: 1, 32>}, {pipeline_mode = #tpu.pipeline_mode<synchronous>, transform_indices = @transform_14, window_bounds = array<i64: 32, 64>}, {pipeline_mode = #tpu.pipeline_mode<synchronous>, transform_indices = @transform_15, window_bounds = array<i64: 1, 64>}, {pipeline_mode = #tpu.pipeline_mode<synchronous>, transform_indices = @transform_16, window_bounds = array<i64: 64, 32>}, {pipeline_mode = #tpu.pipeline_mode<synchronous>, transform_indices = @transform_17, window_bounds = array<i64: 1, 32>}, {transform_indices = @transform_18, window_bounds = array<i64: 1, 8, 32>}]} {
    %c0_i32 = arith.constant 0 : i32
    %0 = arith.cmpi eq, %arg1, %c0_i32 : i32
    %1 = arith.extui %0 : i1 to i32
    %c0_i32_0 = arith.constant 0 : i32
    %2 = arith.cmpi ne, %1, %c0_i32_0 : i32
    scf.if %2 {
      %c0_104 = arith.constant 0 : index
      %c0_105 = arith.constant 0 : index
      %c0_106 = arith.constant 0 : index
      %291 = vector.load %arg2[%c0_104, %c0_105, %c0_106] : memref<1x8x32xf32, #tpu.memory_space<vmem>>, vector<1x8x32xf32>
      %292 = vector.shape_cast %291 : vector<1x8x32xf32> to vector<8x32xf32>
      %c0_107 = arith.constant 0 : index
      %c0_108 = arith.constant 0 : index
      %c0_109 = arith.constant 0 : index
      %293 = vector.load %arg20[%c0_107, %c0_108, %c0_109] : memref<1x8x32xf32, #tpu.memory_space<vmem>>, vector<1x8x32xf32>
      %294 = vector.shape_cast %293 : vector<1x8x32xf32> to vector<8x32xf32>
      %295 = vector.shape_cast %292 : vector<8x32xf32> to vector<1x8x32xf32>
      tpu.vector_store %arg20[%c0_107, %c0_108, %c0_109], %295 {strides = array<i32>} : memref<1x8x32xf32, #tpu.memory_space<vmem>>, vector<1x8x32xf32>,
      %c0_110 = arith.constant 0 : index
      %c0_111 = arith.constant 0 : index
      %c0_112 = arith.constant 0 : index
      %296 = vector.load %arg3[%c0_110, %c0_111, %c0_112] : memref<1x12x32xf32, #tpu.memory_space<vmem>>, vector<1x12x32xf32>
      %297 = vector.shape_cast %296 : vector<1x12x32xf32> to vector<12x32xf32>
      %298 = arith.truncf %297 : vector<12x32xf32> to vector<12x32xbf16>
      %c0_113 = arith.constant 0 : index
      %c0_114 = arith.constant 0 : index
      %299 = vector.load %arg12[%c0_113, %c0_114] : memref<32x64xbf16, #tpu.memory_space<vmem>>, vector<32x64xbf16>
      %cst_115 = arith.constant dense<0.000000e+00> : vector<12x64xf32>
      %300 = tpu.matmul %298, %299, %cst_115 {dimension_numbers = #tpu.dot_dimension_numbers<[1], [0], [0], [1], [0, 0, 1, 1], [], []>} : vector<12x32xbf16>, vector<32x64xbf16>, vector<12x64xf32> -> vector<12x64xf32>
      %c0_116 = arith.constant 0 : index
      %c0_117 = arith.constant 0 : index
      %301 = vector.load %arg13[%c0_116, %c0_117] : memref<1x64xf32, #tpu.memory_space<vmem>>, vector<1x64xf32>
      %302 = vector.broadcast %301 : vector<1x64xf32> to vector<12x64xf32>
      %303 = arith.addf %300, %302 : vector<12x64xf32>
      %304 = vector.extract_strided_slice %303 {offsets = [0, 0], sizes = [12, 32], strides = [1, 1]} : vector<12x64xf32> to vector<12x32xf32>
      %305 = arith.truncf %304 : vector<12x32xf32> to vector<12x32xbf16>
      %c0_118 = arith.constant 0 : index
      %c0_119 = arith.constant 0 : index
      %306 = vector.load %arg21[%c0_118, %c0_119] : memref<12x32xbf16, #tpu.memory_space<vmem>>, vector<12x32xbf16>
      tpu.vector_store %arg21[%c0_118, %c0_119], %305 {strides = array<i32>} : memref<12x32xbf16, #tpu.memory_space<vmem>>, vector<12x32xbf16>,
      %307 = vector.extract_strided_slice %303 {offsets = [0, 32], sizes = [12, 32], strides = [1, 1]} : vector<12x64xf32> to vector<12x32xf32>
      %308 = arith.truncf %307 : vector<12x32xf32> to vector<12x32xbf16>
      %c0_120 = arith.constant 0 : index
      %c0_121 = arith.constant 0 : index
      %309 = vector.load %arg22[%c0_120, %c0_121] : memref<12x32xbf16, #tpu.memory_space<vmem>>, vector<12x32xbf16>
      tpu.vector_store %arg22[%c0_120, %c0_121], %308 {strides = array<i32>} : memref<12x32xbf16, #tpu.memory_space<vmem>>, vector<12x32xbf16>,
    } else {
    }
    %c0 = arith.constant 0 : index
    %c0_1 = arith.constant 0 : index
    %3 = vector.load %arg4[%c0, %c0_1] : memref<1x32xf32, #tpu.memory_space<vmem>>, vector<1x32xf32>
    %4 = vector.shape_cast %3 : vector<1x32xf32> to vector<1x32xf32>
    %5 = vector.broadcast %4 : vector<1x32xf32> to vector<8x32xf32>
    %c0_2 = arith.constant 0 : index
    %c0_3 = arith.constant 0 : index
    %6 = vector.load %arg5[%c0_2, %c0_3] : memref<1x32xf32, #tpu.memory_space<vmem>>, vector<1x32xf32>
    %7 = vector.shape_cast %6 : vector<1x32xf32> to vector<1x32xf32>
    %8 = vector.broadcast %7 : vector<1x32xf32> to vector<8x32xf32>
    %c0_4 = arith.constant 0 : index
    %c0_5 = arith.constant 0 : index
    %c0_6 = arith.constant 0 : index
    %9 = vector.load %arg20[%c0_4, %c0_5, %c0_6] : memref<1x8x32xf32, #tpu.memory_space<vmem>>, vector<1x8x32xf32>
    %10 = vector.shape_cast %9 : vector<1x8x32xf32> to vector<8x32xf32>
    %cst = arith.constant dense<0.000000e+00> : vector<8xf32>
    %11 = vector.multi_reduction <add>, %10, %cst [1] : vector<8x32xf32> to vector<8xf32>
    %12 = vector.shape_cast %11 : vector<8xf32> to vector<8x1xf32>
    %cst_7 = arith.constant 3.200000e+01 : f32
    %13 = vector.broadcast %cst_7 : f32 to vector<8x1xf32>
    %14 = arith.divf %12, %13 : vector<8x1xf32>
    %15 = vector.broadcast %14 : vector<8x1xf32> to vector<8x32xf32>
    %16 = arith.subf %10, %15 : vector<8x32xf32>
    %17 = arith.mulf %16, %16 : vector<8x32xf32>
    %cst_8 = arith.constant dense<0.000000e+00> : vector<8xf32>
    %18 = vector.multi_reduction <add>, %17, %cst_8 [1] : vector<8x32xf32> to vector<8xf32>
    %19 = vector.shape_cast %18 : vector<8xf32> to vector<8x1xf32>
    %cst_9 = arith.constant 3.200000e+01 : f32
    %20 = vector.broadcast %cst_9 : f32 to vector<8x1xf32>
    %21 = arith.divf %19, %20 : vector<8x1xf32>
    %22 = vector.broadcast %14 : vector<8x1xf32> to vector<8x32xf32>
    %23 = arith.subf %10, %22 : vector<8x32xf32>
    %cst_10 = arith.constant 9.99999974E-6 : f32
    %24 = vector.broadcast %cst_10 : f32 to vector<8x1xf32>
    %25 = arith.addf %21, %24 : vector<8x1xf32>
    %26 = math.rsqrt %25 : vector<8x1xf32>
    %27 = vector.broadcast %26 : vector<8x1xf32> to vector<8x32xf32>
    %28 = arith.mulf %23, %27 : vector<8x32xf32>
    %29 = arith.mulf %28, %5 : vector<8x32xf32>
    %30 = arith.addf %29, %8 : vector<8x32xf32>
    %31 = arith.truncf %30 : vector<8x32xf32> to vector<8x32xbf16>
    %c0_11 = arith.constant 0 : index
    %c0_12 = arith.constant 0 : index
    %32 = vector.load %arg6[%c0_11, %c0_12] : memref<32x96xbf16, #tpu.memory_space<vmem>>, vector<32x96xbf16>
    %cst_13 = arith.constant dense<0.000000e+00> : vector<8x96xf32>
    %33 = tpu.matmul %31, %32, %cst_13 {dimension_numbers = #tpu.dot_dimension_numbers<[1], [0], [0], [1], [0, 0, 1, 1], [], []>} : vector<8x32xbf16>, vector<32x96xbf16>, vector<8x96xf32> -> vector<8x96xf32>
    %c0_14 = arith.constant 0 : index
    %c0_15 = arith.constant 0 : index
    %34 = vector.load %arg7[%c0_14, %c0_15] : memref<1x96xf32, #tpu.memory_space<vmem>>, vector<1x96xf32>
    %35 = vector.broadcast %34 : vector<1x96xf32> to vector<8x96xf32>
    %36 = arith.addf %33, %35 : vector<8x96xf32>
    %37 = vector.extract_strided_slice %36 {offsets = [0, 0], sizes = [8, 32], strides = [1, 1]} : vector<8x96xf32> to vector<8x32xf32>
    %38 = vector.extract_strided_slice %36 {offsets = [0, 32], sizes = [8, 32], strides = [1, 1]} : vector<8x96xf32> to vector<8x32xf32>
    %39 = vector.extract_strided_slice %36 {offsets = [0, 64], sizes = [8, 32], strides = [1, 1]} : vector<8x96xf32> to vector<8x32xf32>
    %40 = arith.truncf %37 : vector<8x32xf32> to vector<8x32xbf16>
    %41 = arith.truncf %38 : vector<8x32xf32> to vector<8x32xbf16>
    %42 = arith.truncf %39 : vector<8x32xf32> to vector<8x32xbf16>
    %43 = vector.extract_strided_slice %40 {offsets = [0, 0], sizes = [8, 8], strides = [1, 1]} : vector<8x32xbf16> to vector<8x8xbf16>
    %44 = vector.extract_strided_slice %41 {offsets = [0, 0], sizes = [8, 8], strides = [1, 1]} : vector<8x32xbf16> to vector<8x8xbf16>
    %45 = vector.extract_strided_slice %42 {offsets = [0, 0], sizes = [8, 8], strides = [1, 1]} : vector<8x32xbf16> to vector<8x8xbf16>
    "tpu.trace_start"() <{level = 10 : i32, message = "qd,kd->qk"}> : () -> ()
    %cst_16 = arith.constant dense<0.000000e+00> : vector<8x8xf32>
    %46 = tpu.matmul %43, %44, %cst_16 {dimension_numbers = #tpu.dot_dimension_numbers<[1], [1], [0], [0], [0, 0, 1, 0], [], []>} : vector<8x8xbf16>, vector<8x8xbf16>, vector<8x8xf32> -> vector<8x8xf32>
    "tpu.trace_stop"() : () -> ()
    %cst_17 = arith.constant 0.353553385 : f32
    %47 = vector.broadcast %cst_17 : f32 to vector<8x8xf32>
    %48 = arith.mulf %46, %47 : vector<8x8xf32>
    %cst_18 = arith.constant dense<0xFF800000> : vector<8xf32>
    %49 = vector.multi_reduction <maximumf>, %48, %cst_18 [1] : vector<8x8xf32> to vector<8xf32>
    %50 = vector.shape_cast %49 : vector<8xf32> to vector<8x1xf32>
    %51 = vector.broadcast %50 : vector<8x1xf32> to vector<8x8xf32>
    %52 = arith.subf %48, %51 : vector<8x8xf32>
    %53 = math.exp %52 : vector<8x8xf32>
    %cst_19 = arith.constant dense<0.000000e+00> : vector<8xf32>
    %54 = vector.multi_reduction <add>, %53, %cst_19 [1] : vector<8x8xf32> to vector<8xf32>
    %55 = vector.shape_cast %54 : vector<8xf32> to vector<8x1xf32>
    %56 = tpu.reciprocal %55 {approx = true} : vector<8x1xf32> -> vector<8x1xf32>
    %57 = vector.broadcast %56 : vector<8x1xf32> to vector<8x8xf32>
    %58 = arith.mulf %53, %57 : vector<8x8xf32>
    %59 = arith.truncf %58 : vector<8x8xf32> to vector<8x8xbf16>
    %cst_20 = arith.constant dense<0.000000e+00> : vector<8x8xf32>
    %60 = tpu.matmul %59, %45, %cst_20 {dimension_numbers = #tpu.dot_dimension_numbers<[1], [0], [0], [1], [0, 0, 1, 1], [], []>} : vector<8x8xbf16>, vector<8x8xbf16>, vector<8x8xf32> -> vector<8x8xf32>
    %61 = vector.extract_strided_slice %40 {offsets = [0, 8], sizes = [8, 8], strides = [1, 1]} : vector<8x32xbf16> to vector<8x8xbf16>
    %62 = vector.extract_strided_slice %41 {offsets = [0, 8], sizes = [8, 8], strides = [1, 1]} : vector<8x32xbf16> to vector<8x8xbf16>
    %63 = vector.extract_strided_slice %42 {offsets = [0, 8], sizes = [8, 8], strides = [1, 1]} : vector<8x32xbf16> to vector<8x8xbf16>
    "tpu.trace_start"() <{level = 10 : i32, message = "qd,kd->qk"}> : () -> ()
    %cst_21 = arith.constant dense<0.000000e+00> : vector<8x8xf32>
    %64 = tpu.matmul %61, %62, %cst_21 {dimension_numbers = #tpu.dot_dimension_numbers<[1], [1], [0], [0], [0, 0, 1, 0], [], []>} : vector<8x8xbf16>, vector<8x8xbf16>, vector<8x8xf32> -> vector<8x8xf32>
    "tpu.trace_stop"() : () -> ()
    %cst_22 = arith.constant 0.353553385 : f32
    %65 = vector.broadcast %cst_22 : f32 to vector<8x8xf32>
    %66 = arith.mulf %64, %65 : vector<8x8xf32>
    %cst_23 = arith.constant dense<0xFF800000> : vector<8xf32>
    %67 = vector.multi_reduction <maximumf>, %66, %cst_23 [1] : vector<8x8xf32> to vector<8xf32>
    %68 = vector.shape_cast %67 : vector<8xf32> to vector<8x1xf32>
    %69 = vector.broadcast %68 : vector<8x1xf32> to vector<8x8xf32>
    %70 = arith.subf %66, %69 : vector<8x8xf32>
    %71 = math.exp %70 : vector<8x8xf32>
    %cst_24 = arith.constant dense<0.000000e+00> : vector<8xf32>
    %72 = vector.multi_reduction <add>, %71, %cst_24 [1] : vector<8x8xf32> to vector<8xf32>
    %73 = vector.shape_cast %72 : vector<8xf32> to vector<8x1xf32>
    %74 = tpu.reciprocal %73 {approx = true} : vector<8x1xf32> -> vector<8x1xf32>
    %75 = vector.broadcast %74 : vector<8x1xf32> to vector<8x8xf32>
    %76 = arith.mulf %71, %75 : vector<8x8xf32>
    %77 = arith.truncf %76 : vector<8x8xf32> to vector<8x8xbf16>
    %cst_25 = arith.constant dense<0.000000e+00> : vector<8x8xf32>
    %78 = tpu.matmul %77, %63, %cst_25 {dimension_numbers = #tpu.dot_dimension_numbers<[1], [0], [0], [1], [0, 0, 1, 1], [], []>} : vector<8x8xbf16>, vector<8x8xbf16>, vector<8x8xf32> -> vector<8x8xf32>
    %79 = vector.extract_strided_slice %40 {offsets = [0, 16], sizes = [8, 8], strides = [1, 1]} : vector<8x32xbf16> to vector<8x8xbf16>
    %80 = vector.extract_strided_slice %41 {offsets = [0, 16], sizes = [8, 8], strides = [1, 1]} : vector<8x32xbf16> to vector<8x8xbf16>
    %81 = vector.extract_strided_slice %42 {offsets = [0, 16], sizes = [8, 8], strides = [1, 1]} : vector<8x32xbf16> to vector<8x8xbf16>
    "tpu.trace_start"() <{level = 10 : i32, message = "qd,kd->qk"}> : () -> ()
    %cst_26 = arith.constant dense<0.000000e+00> : vector<8x8xf32>
    %82 = tpu.matmul %79, %80, %cst_26 {dimension_numbers = #tpu.dot_dimension_numbers<[1], [1], [0], [0], [0, 0, 1, 0], [], []>} : vector<8x8xbf16>, vector<8x8xbf16>, vector<8x8xf32> -> vector<8x8xf32>
    "tpu.trace_stop"() : () -> ()
    %cst_27 = arith.constant 0.353553385 : f32
    %83 = vector.broadcast %cst_27 : f32 to vector<8x8xf32>
    %84 = arith.mulf %82, %83 : vector<8x8xf32>
    %cst_28 = arith.constant dense<0xFF800000> : vector<8xf32>
    %85 = vector.multi_reduction <maximumf>, %84, %cst_28 [1] : vector<8x8xf32> to vector<8xf32>
    %86 = vector.shape_cast %85 : vector<8xf32> to vector<8x1xf32>
    %87 = vector.broadcast %86 : vector<8x1xf32> to vector<8x8xf32>
    %88 = arith.subf %84, %87 : vector<8x8xf32>
    %89 = math.exp %88 : vector<8x8xf32>
    %cst_29 = arith.constant dense<0.000000e+00> : vector<8xf32>
    %90 = vector.multi_reduction <add>, %89, %cst_29 [1] : vector<8x8xf32> to vector<8xf32>
    %91 = vector.shape_cast %90 : vector<8xf32> to vector<8x1xf32>
    %92 = tpu.reciprocal %91 {approx = true} : vector<8x1xf32> -> vector<8x1xf32>
    %93 = vector.broadcast %92 : vector<8x1xf32> to vector<8x8xf32>
    %94 = arith.mulf %89, %93 : vector<8x8xf32>
    %95 = arith.truncf %94 : vector<8x8xf32> to vector<8x8xbf16>
    %cst_30 = arith.constant dense<0.000000e+00> : vector<8x8xf32>
    %96 = tpu.matmul %95, %81, %cst_30 {dimension_numbers = #tpu.dot_dimension_numbers<[1], [0], [0], [1], [0, 0, 1, 1], [], []>} : vector<8x8xbf16>, vector<8x8xbf16>, vector<8x8xf32> -> vector<8x8xf32>
    %97 = vector.extract_strided_slice %40 {offsets = [0, 24], sizes = [8, 8], strides = [1, 1]} : vector<8x32xbf16> to vector<8x8xbf16>
    %98 = vector.extract_strided_slice %41 {offsets = [0, 24], sizes = [8, 8], strides = [1, 1]} : vector<8x32xbf16> to vector<8x8xbf16>
    %99 = vector.extract_strided_slice %42 {offsets = [0, 24], sizes = [8, 8], strides = [1, 1]} : vector<8x32xbf16> to vector<8x8xbf16>
    "tpu.trace_start"() <{level = 10 : i32, message = "qd,kd->qk"}> : () -> ()
    %cst_31 = arith.constant dense<0.000000e+00> : vector<8x8xf32>
    %100 = tpu.matmul %97, %98, %cst_31 {dimension_numbers = #tpu.dot_dimension_numbers<[1], [1], [0], [0], [0, 0, 1, 0], [], []>} : vector<8x8xbf16>, vector<8x8xbf16>, vector<8x8xf32> -> vector<8x8xf32>
    "tpu.trace_stop"() : () -> ()
    %cst_32 = arith.constant 0.353553385 : f32
    %101 = vector.broadcast %cst_32 : f32 to vector<8x8xf32>
    %102 = arith.mulf %100, %101 : vector<8x8xf32>
    %cst_33 = arith.constant dense<0xFF800000> : vector<8xf32>
    %103 = vector.multi_reduction <maximumf>, %102, %cst_33 [1] : vector<8x8xf32> to vector<8xf32>
    %104 = vector.shape_cast %103 : vector<8xf32> to vector<8x1xf32>
    %105 = vector.broadcast %104 : vector<8x1xf32> to vector<8x8xf32>
    %106 = arith.subf %102, %105 : vector<8x8xf32>
    %107 = math.exp %106 : vector<8x8xf32>
    %cst_34 = arith.constant dense<0.000000e+00> : vector<8xf32>
    %108 = vector.multi_reduction <add>, %107, %cst_34 [1] : vector<8x8xf32> to vector<8xf32>
    %109 = vector.shape_cast %108 : vector<8xf32> to vector<8x1xf32>
    %110 = tpu.reciprocal %109 {approx = true} : vector<8x1xf32> -> vector<8x1xf32>
    %111 = vector.broadcast %110 : vector<8x1xf32> to vector<8x8xf32>
    %112 = arith.mulf %107, %111 : vector<8x8xf32>
    %113 = arith.truncf %112 : vector<8x8xf32> to vector<8x8xbf16>
    %cst_35 = arith.constant dense<0.000000e+00> : vector<8x8xf32>
    %114 = tpu.matmul %113, %99, %cst_35 {dimension_numbers = #tpu.dot_dimension_numbers<[1], [0], [0], [1], [0, 0, 1, 1], [], []>} : vector<8x8xbf16>, vector<8x8xbf16>, vector<8x8xf32> -> vector<8x8xf32>
    %115 = tpu.concatenate %60, %78, %96, %114 in 1 : vector<8x8xf32>, vector<8x8xf32>, vector<8x8xf32>, vector<8x8xf32> -> vector<8x32xf32>
    %116 = arith.truncf %115 : vector<8x32xf32> to vector<8x32xbf16>
    %c0_36 = arith.constant 0 : index
    %c0_37 = arith.constant 0 : index
    %117 = vector.load %arg8[%c0_36, %c0_37] : memref<32x32xbf16, #tpu.memory_space<vmem>>, vector<32x32xbf16>
    %cst_38 = arith.constant dense<0.000000e+00> : vector<8x32xf32>
    %118 = tpu.matmul %116, %117, %cst_38 {dimension_numbers = #tpu.dot_dimension_numbers<[1], [0], [0], [1], [0, 0, 1, 1], [], []>} : vector<8x32xbf16>, vector<32x32xbf16>, vector<8x32xf32> -> vector<8x32xf32>
    %c0_39 = arith.constant 0 : index
    %c0_40 = arith.constant 0 : index
    %119 = vector.load %arg9[%c0_39, %c0_40] : memref<1x32xf32, #tpu.memory_space<vmem>>, vector<1x32xf32>
    %120 = vector.broadcast %119 : vector<1x32xf32> to vector<8x32xf32>
    %121 = arith.addf %118, %120 : vector<8x32xf32>
    %122 = arith.addf %30, %121 : vector<8x32xf32>
    %cst_41 = arith.constant dense<0.000000e+00> : vector<8xf32>
    %123 = vector.multi_reduction <add>, %122, %cst_41 [1] : vector<8x32xf32> to vector<8xf32>
    %124 = vector.shape_cast %123 : vector<8xf32> to vector<8x1xf32>
    %cst_42 = arith.constant 3.200000e+01 : f32
    %125 = vector.broadcast %cst_42 : f32 to vector<8x1xf32>
    %126 = arith.divf %124, %125 : vector<8x1xf32>
    %127 = vector.broadcast %126 : vector<8x1xf32> to vector<8x32xf32>
    %128 = arith.subf %122, %127 : vector<8x32xf32>
    %129 = arith.mulf %128, %128 : vector<8x32xf32>
    %cst_43 = arith.constant dense<0.000000e+00> : vector<8xf32>
    %130 = vector.multi_reduction <add>, %129, %cst_43 [1] : vector<8x32xf32> to vector<8xf32>
    %131 = vector.shape_cast %130 : vector<8xf32> to vector<8x1xf32>
    %cst_44 = arith.constant 3.200000e+01 : f32
    %132 = vector.broadcast %cst_44 : f32 to vector<8x1xf32>
    %133 = arith.divf %131, %132 : vector<8x1xf32>
    %134 = vector.broadcast %126 : vector<8x1xf32> to vector<8x32xf32>
    %135 = arith.subf %122, %134 : vector<8x32xf32>
    %cst_45 = arith.constant 9.99999974E-6 : f32
    %136 = vector.broadcast %cst_45 : f32 to vector<8x1xf32>
    %137 = arith.addf %133, %136 : vector<8x1xf32>
    %138 = math.rsqrt %137 : vector<8x1xf32>
    %139 = vector.broadcast %138 : vector<8x1xf32> to vector<8x32xf32>
    %140 = arith.mulf %135, %139 : vector<8x32xf32>
    %141 = arith.mulf %140, %5 : vector<8x32xf32>
    %142 = arith.addf %141, %8 : vector<8x32xf32>
    %143 = arith.truncf %142 : vector<8x32xf32> to vector<8x32xbf16>
    %c0_46 = arith.constant 0 : index
    %c0_47 = arith.constant 0 : index
    %144 = vector.load %arg10[%c0_46, %c0_47] : memref<32x32xbf16, #tpu.memory_space<vmem>>, vector<32x32xbf16>
    %cst_48 = arith.constant dense<0.000000e+00> : vector<8x32xf32>
    %145 = tpu.matmul %143, %144, %cst_48 {dimension_numbers = #tpu.dot_dimension_numbers<[1], [0], [0], [1], [0, 0, 1, 1], [], []>} : vector<8x32xbf16>, vector<32x32xbf16>, vector<8x32xf32> -> vector<8x32xf32>
    %c0_49 = arith.constant 0 : index
    %c0_50 = arith.constant 0 : index
    %146 = vector.load %arg11[%c0_49, %c0_50] : memref<1x32xf32, #tpu.memory_space<vmem>>, vector<1x32xf32>
    %147 = vector.broadcast %146 : vector<1x32xf32> to vector<8x32xf32>
    %148 = arith.addf %145, %147 : vector<8x32xf32>
    %c0_51 = arith.constant 0 : index
    %c0_52 = arith.constant 0 : index
    %149 = vector.load %arg21[%c0_51, %c0_52] : memref<12x32xbf16, #tpu.memory_space<vmem>>, vector<12x32xbf16>
    %c0_53 = arith.constant 0 : index
    %c0_54 = arith.constant 0 : index
    %150 = vector.load %arg22[%c0_53, %c0_54] : memref<12x32xbf16, #tpu.memory_space<vmem>>, vector<12x32xbf16>
    %151 = arith.truncf %148 : vector<8x32xf32> to vector<8x32xbf16>
    %152 = vector.extract_strided_slice %151 {offsets = [0, 0], sizes = [8, 8], strides = [1, 1]} : vector<8x32xbf16> to vector<8x8xbf16>
    %153 = vector.extract_strided_slice %149 {offsets = [0, 0], sizes = [12, 8], strides = [1, 1]} : vector<12x32xbf16> to vector<12x8xbf16>
    %154 = vector.extract_strided_slice %150 {offsets = [0, 0], sizes = [12, 8], strides = [1, 1]} : vector<12x32xbf16> to vector<12x8xbf16>
    "tpu.trace_start"() <{level = 10 : i32, message = "qd,kd->qk"}> : () -> ()
    %cst_55 = arith.constant dense<0.000000e+00> : vector<8x12xf32>
    %155 = tpu.matmul %152, %153, %cst_55 {dimension_numbers = #tpu.dot_dimension_numbers<[1], [1], [0], [0], [0, 0, 1, 0], [], []>} : vector<8x8xbf16>, vector<12x8xbf16>, vector<8x12xf32> -> vector<8x12xf32>
    "tpu.trace_stop"() : () -> ()
    %cst_56 = arith.constant 0.353553385 : f32
    %156 = vector.broadcast %cst_56 : f32 to vector<8x12xf32>
    %157 = arith.mulf %155, %156 : vector<8x12xf32>
    %cst_57 = arith.constant dense<0xFF800000> : vector<8xf32>
    %158 = vector.multi_reduction <maximumf>, %157, %cst_57 [1] : vector<8x12xf32> to vector<8xf32>
    %159 = vector.shape_cast %158 : vector<8xf32> to vector<8x1xf32>
    %160 = vector.broadcast %159 : vector<8x1xf32> to vector<8x12xf32>
    %161 = arith.subf %157, %160 : vector<8x12xf32>
    %162 = math.exp %161 : vector<8x12xf32>
    %cst_58 = arith.constant dense<0.000000e+00> : vector<8xf32>
    %163 = vector.multi_reduction <add>, %162, %cst_58 [1] : vector<8x12xf32> to vector<8xf32>
    %164 = vector.shape_cast %163 : vector<8xf32> to vector<8x1xf32>
    %165 = tpu.reciprocal %164 {approx = true} : vector<8x1xf32> -> vector<8x1xf32>
    %166 = vector.broadcast %165 : vector<8x1xf32> to vector<8x12xf32>
    %167 = arith.mulf %162, %166 : vector<8x12xf32>
    %168 = arith.truncf %167 : vector<8x12xf32> to vector<8x12xbf16>
    %cst_59 = arith.constant dense<0.000000e+00> : vector<8x8xf32>
    %169 = tpu.matmul %168, %154, %cst_59 {dimension_numbers = #tpu.dot_dimension_numbers<[1], [0], [0], [1], [0, 0, 1, 1], [], []>} : vector<8x12xbf16>, vector<12x8xbf16>, vector<8x8xf32> -> vector<8x8xf32>
    %170 = vector.extract_strided_slice %151 {offsets = [0, 8], sizes = [8, 8], strides = [1, 1]} : vector<8x32xbf16> to vector<8x8xbf16>
    %171 = vector.extract_strided_slice %149 {offsets = [0, 8], sizes = [12, 8], strides = [1, 1]} : vector<12x32xbf16> to vector<12x8xbf16>
    %172 = vector.extract_strided_slice %150 {offsets = [0, 8], sizes = [12, 8], strides = [1, 1]} : vector<12x32xbf16> to vector<12x8xbf16>
    "tpu.trace_start"() <{level = 10 : i32, message = "qd,kd->qk"}> : () -> ()
    %cst_60 = arith.constant dense<0.000000e+00> : vector<8x12xf32>
    %173 = tpu.matmul %170, %171, %cst_60 {dimension_numbers = #tpu.dot_dimension_numbers<[1], [1], [0], [0], [0, 0, 1, 0], [], []>} : vector<8x8xbf16>, vector<12x8xbf16>, vector<8x12xf32> -> vector<8x12xf32>
    "tpu.trace_stop"() : () -> ()
    %cst_61 = arith.constant 0.353553385 : f32
    %174 = vector.broadcast %cst_61 : f32 to vector<8x12xf32>
    %175 = arith.mulf %173, %174 : vector<8x12xf32>
    %cst_62 = arith.constant dense<0xFF800000> : vector<8xf32>
    %176 = vector.multi_reduction <maximumf>, %175, %cst_62 [1] : vector<8x12xf32> to vector<8xf32>
    %177 = vector.shape_cast %176 : vector<8xf32> to vector<8x1xf32>
    %178 = vector.broadcast %177 : vector<8x1xf32> to vector<8x12xf32>
    %179 = arith.subf %175, %178 : vector<8x12xf32>
    %180 = math.exp %179 : vector<8x12xf32>
    %cst_63 = arith.constant dense<0.000000e+00> : vector<8xf32>
    %181 = vector.multi_reduction <add>, %180, %cst_63 [1] : vector<8x12xf32> to vector<8xf32>
    %182 = vector.shape_cast %181 : vector<8xf32> to vector<8x1xf32>
    %183 = tpu.reciprocal %182 {approx = true} : vector<8x1xf32> -> vector<8x1xf32>
    %184 = vector.broadcast %183 : vector<8x1xf32> to vector<8x12xf32>
    %185 = arith.mulf %180, %184 : vector<8x12xf32>
    %186 = arith.truncf %185 : vector<8x12xf32> to vector<8x12xbf16>
    %cst_64 = arith.constant dense<0.000000e+00> : vector<8x8xf32>
    %187 = tpu.matmul %186, %172, %cst_64 {dimension_numbers = #tpu.dot_dimension_numbers<[1], [0], [0], [1], [0, 0, 1, 1], [], []>} : vector<8x12xbf16>, vector<12x8xbf16>, vector<8x8xf32> -> vector<8x8xf32>
    %188 = vector.extract_strided_slice %151 {offsets = [0, 16], sizes = [8, 8], strides = [1, 1]} : vector<8x32xbf16> to vector<8x8xbf16>
    %189 = vector.extract_strided_slice %149 {offsets = [0, 16], sizes = [12, 8], strides = [1, 1]} : vector<12x32xbf16> to vector<12x8xbf16>
    %190 = vector.extract_strided_slice %150 {offsets = [0, 16], sizes = [12, 8], strides = [1, 1]} : vector<12x32xbf16> to vector<12x8xbf16>
    "tpu.trace_start"() <{level = 10 : i32, message = "qd,kd->qk"}> : () -> ()
    %cst_65 = arith.constant dense<0.000000e+00> : vector<8x12xf32>
    %191 = tpu.matmul %188, %189, %cst_65 {dimension_numbers = #tpu.dot_dimension_numbers<[1], [1], [0], [0], [0, 0, 1, 0], [], []>} : vector<8x8xbf16>, vector<12x8xbf16>, vector<8x12xf32> -> vector<8x12xf32>
    "tpu.trace_stop"() : () -> ()
    %cst_66 = arith.constant 0.353553385 : f32
    %192 = vector.broadcast %cst_66 : f32 to vector<8x12xf32>
    %193 = arith.mulf %191, %192 : vector<8x12xf32>
    %cst_67 = arith.constant dense<0xFF800000> : vector<8xf32>
    %194 = vector.multi_reduction <maximumf>, %193, %cst_67 [1] : vector<8x12xf32> to vector<8xf32>
    %195 = vector.shape_cast %194 : vector<8xf32> to vector<8x1xf32>
    %196 = vector.broadcast %195 : vector<8x1xf32> to vector<8x12xf32>
    %197 = arith.subf %193, %196 : vector<8x12xf32>
    %198 = math.exp %197 : vector<8x12xf32>
    %cst_68 = arith.constant dense<0.000000e+00> : vector<8xf32>
    %199 = vector.multi_reduction <add>, %198, %cst_68 [1] : vector<8x12xf32> to vector<8xf32>
    %200 = vector.shape_cast %199 : vector<8xf32> to vector<8x1xf32>
    %201 = tpu.reciprocal %200 {approx = true} : vector<8x1xf32> -> vector<8x1xf32>
    %202 = vector.broadcast %201 : vector<8x1xf32> to vector<8x12xf32>
    %203 = arith.mulf %198, %202 : vector<8x12xf32>
    %204 = arith.truncf %203 : vector<8x12xf32> to vector<8x12xbf16>
    %cst_69 = arith.constant dense<0.000000e+00> : vector<8x8xf32>
    %205 = tpu.matmul %204, %190, %cst_69 {dimension_numbers = #tpu.dot_dimension_numbers<[1], [0], [0], [1], [0, 0, 1, 1], [], []>} : vector<8x12xbf16>, vector<12x8xbf16>, vector<8x8xf32> -> vector<8x8xf32>
    %206 = vector.extract_strided_slice %151 {offsets = [0, 24], sizes = [8, 8], strides = [1, 1]} : vector<8x32xbf16> to vector<8x8xbf16>
    %207 = vector.extract_strided_slice %149 {offsets = [0, 24], sizes = [12, 8], strides = [1, 1]} : vector<12x32xbf16> to vector<12x8xbf16>
    %208 = vector.extract_strided_slice %150 {offsets = [0, 24], sizes = [12, 8], strides = [1, 1]} : vector<12x32xbf16> to vector<12x8xbf16>
    "tpu.trace_start"() <{level = 10 : i32, message = "qd,kd->qk"}> : () -> ()
    %cst_70 = arith.constant dense<0.000000e+00> : vector<8x12xf32>
    %209 = tpu.matmul %206, %207, %cst_70 {dimension_numbers = #tpu.dot_dimension_numbers<[1], [1], [0], [0], [0, 0, 1, 0], [], []>} : vector<8x8xbf16>, vector<12x8xbf16>, vector<8x12xf32> -> vector<8x12xf32>
    "tpu.trace_stop"() : () -> ()
    %cst_71 = arith.constant 0.353553385 : f32
    %210 = vector.broadcast %cst_71 : f32 to vector<8x12xf32>
    %211 = arith.mulf %209, %210 : vector<8x12xf32>
    %cst_72 = arith.constant dense<0xFF800000> : vector<8xf32>
    %212 = vector.multi_reduction <maximumf>, %211, %cst_72 [1] : vector<8x12xf32> to vector<8xf32>
    %213 = vector.shape_cast %212 : vector<8xf32> to vector<8x1xf32>
    %214 = vector.broadcast %213 : vector<8x1xf32> to vector<8x12xf32>
    %215 = arith.subf %211, %214 : vector<8x12xf32>
    %216 = math.exp %215 : vector<8x12xf32>
    %cst_73 = arith.constant dense<0.000000e+00> : vector<8xf32>
    %217 = vector.multi_reduction <add>, %216, %cst_73 [1] : vector<8x12xf32> to vector<8xf32>
    %218 = vector.shape_cast %217 : vector<8xf32> to vector<8x1xf32>
    %219 = tpu.reciprocal %218 {approx = true} : vector<8x1xf32> -> vector<8x1xf32>
    %220 = vector.broadcast %219 : vector<8x1xf32> to vector<8x12xf32>
    %221 = arith.mulf %216, %220 : vector<8x12xf32>
    %222 = arith.truncf %221 : vector<8x12xf32> to vector<8x12xbf16>
    %cst_74 = arith.constant dense<0.000000e+00> : vector<8x8xf32>
    %223 = tpu.matmul %222, %208, %cst_74 {dimension_numbers = #tpu.dot_dimension_numbers<[1], [0], [0], [1], [0, 0, 1, 1], [], []>} : vector<8x12xbf16>, vector<12x8xbf16>, vector<8x8xf32> -> vector<8x8xf32>
    %224 = tpu.concatenate %169, %187, %205, %223 in 1 : vector<8x8xf32>, vector<8x8xf32>, vector<8x8xf32>, vector<8x8xf32> -> vector<8x32xf32>
    %225 = arith.truncf %224 : vector<8x32xf32> to vector<8x32xbf16>
    %c0_75 = arith.constant 0 : index
    %c0_76 = arith.constant 0 : index
    %226 = vector.load %arg14[%c0_75, %c0_76] : memref<32x32xbf16, #tpu.memory_space<vmem>>, vector<32x32xbf16>
    %cst_77 = arith.constant dense<0.000000e+00> : vector<8x32xf32>
    %227 = tpu.matmul %225, %226, %cst_77 {dimension_numbers = #tpu.dot_dimension_numbers<[1], [0], [0], [1], [0, 0, 1, 1], [], []>} : vector<8x32xbf16>, vector<32x32xbf16>, vector<8x32xf32> -> vector<8x32xf32>
    %c0_78 = arith.constant 0 : index
    %c0_79 = arith.constant 0 : index
    %228 = vector.load %arg15[%c0_78, %c0_79] : memref<1x32xf32, #tpu.memory_space<vmem>>, vector<1x32xf32>
    %229 = vector.broadcast %228 : vector<1x32xf32> to vector<8x32xf32>
    %230 = arith.addf %227, %229 : vector<8x32xf32>
    %231 = arith.addf %142, %230 : vector<8x32xf32>
    %cst_80 = arith.constant dense<0.000000e+00> : vector<8xf32>
    %232 = vector.multi_reduction <add>, %231, %cst_80 [1] : vector<8x32xf32> to vector<8xf32>
    %233 = vector.shape_cast %232 : vector<8xf32> to vector<8x1xf32>
    %cst_81 = arith.constant 3.200000e+01 : f32
    %234 = vector.broadcast %cst_81 : f32 to vector<8x1xf32>
    %235 = arith.divf %233, %234 : vector<8x1xf32>
    %236 = vector.broadcast %235 : vector<8x1xf32> to vector<8x32xf32>
    %237 = arith.subf %231, %236 : vector<8x32xf32>
    %238 = arith.mulf %237, %237 : vector<8x32xf32>
    %cst_82 = arith.constant dense<0.000000e+00> : vector<8xf32>
    %239 = vector.multi_reduction <add>, %238, %cst_82 [1] : vector<8x32xf32> to vector<8xf32>
    %240 = vector.shape_cast %239 : vector<8xf32> to vector<8x1xf32>
    %cst_83 = arith.constant 3.200000e+01 : f32
    %241 = vector.broadcast %cst_83 : f32 to vector<8x1xf32>
    %242 = arith.divf %240, %241 : vector<8x1xf32>
    %243 = vector.broadcast %235 : vector<8x1xf32> to vector<8x32xf32>
    %244 = arith.subf %231, %243 : vector<8x32xf32>
    %cst_84 = arith.constant 9.99999974E-6 : f32
    %245 = vector.broadcast %cst_84 : f32 to vector<8x1xf32>
    %246 = arith.addf %242, %245 : vector<8x1xf32>
    %247 = math.rsqrt %246 : vector<8x1xf32>
    %248 = vector.broadcast %247 : vector<8x1xf32> to vector<8x32xf32>
    %249 = arith.mulf %244, %248 : vector<8x32xf32>
    %250 = arith.mulf %249, %5 : vector<8x32xf32>
    %251 = arith.addf %250, %8 : vector<8x32xf32>
    %252 = arith.truncf %251 : vector<8x32xf32> to vector<8x32xbf16>
    %c0_85 = arith.constant 0 : index
    %c0_86 = arith.constant 0 : index
    %253 = vector.load %arg16[%c0_85, %c0_86] : memref<32x64xbf16, #tpu.memory_space<vmem>>, vector<32x64xbf16>
    %cst_87 = arith.constant dense<0.000000e+00> : vector<8x64xf32>
    %254 = tpu.matmul %252, %253, %cst_87 {dimension_numbers = #tpu.dot_dimension_numbers<[1], [0], [0], [1], [0, 0, 1, 1], [], []>} : vector<8x32xbf16>, vector<32x64xbf16>, vector<8x64xf32> -> vector<8x64xf32>
    %c0_88 = arith.constant 0 : index
    %c0_89 = arith.constant 0 : index
    %255 = vector.load %arg17[%c0_88, %c0_89] : memref<1x64xf32, #tpu.memory_space<vmem>>, vector<1x64xf32>
    %256 = vector.broadcast %255 : vector<1x64xf32> to vector<8x64xf32>
    %257 = arith.addf %254, %256 : vector<8x64xf32>
    %cst_90 = arith.constant 0.000000e+00 : f32
    %258 = vector.broadcast %cst_90 : f32 to vector<8x64xf32>
    %259 = arith.maximumf %257, %258 : vector<8x64xf32>
    %260 = arith.mulf %259, %259 : vector<8x64xf32>
    %261 = arith.truncf %260 : vector<8x64xf32> to vector<8x64xbf16>
    %c0_91 = arith.constant 0 : index
    %c0_92 = arith.constant 0 : index
    %262 = vector.load %arg18[%c0_91, %c0_92] : memref<64x32xbf16, #tpu.memory_space<vmem>>, vector<64x32xbf16>
    %cst_93 = arith.constant dense<0.000000e+00> : vector<8x32xf32>
    %263 = tpu.matmul %261, %262, %cst_93 {dimension_numbers = #tpu.dot_dimension_numbers<[1], [0], [0], [1], [0, 0, 1, 1], [], []>} : vector<8x64xbf16>, vector<64x32xbf16>, vector<8x32xf32> -> vector<8x32xf32>
    %c0_94 = arith.constant 0 : index
    %c0_95 = arith.constant 0 : index
    %264 = vector.load %arg19[%c0_94, %c0_95] : memref<1x32xf32, #tpu.memory_space<vmem>>, vector<1x32xf32>
    %265 = vector.broadcast %264 : vector<1x32xf32> to vector<8x32xf32>
    %266 = arith.addf %263, %265 : vector<8x32xf32>
    %267 = arith.addf %251, %266 : vector<8x32xf32>
    %cst_96 = arith.constant dense<0.000000e+00> : vector<8xf32>
    %268 = vector.multi_reduction <add>, %267, %cst_96 [1] : vector<8x32xf32> to vector<8xf32>
    %269 = vector.shape_cast %268 : vector<8xf32> to vector<8x1xf32>
    %cst_97 = arith.constant 3.200000e+01 : f32
    %270 = vector.broadcast %cst_97 : f32 to vector<8x1xf32>
    %271 = arith.divf %269, %270 : vector<8x1xf32>
    %272 = vector.broadcast %271 : vector<8x1xf32> to vector<8x32xf32>
    %273 = arith.subf %267, %272 : vector<8x32xf32>
    %274 = arith.mulf %273, %273 : vector<8x32xf32>
    %cst_98 = arith.constant dense<0.000000e+00> : vector<8xf32>
    %275 = vector.multi_reduction <add>, %274, %cst_98 [1] : vector<8x32xf32> to vector<8xf32>
    %276 = vector.shape_cast %275 : vector<8xf32> to vector<8x1xf32>
    %cst_99 = arith.constant 3.200000e+01 : f32
    %277 = vector.broadcast %cst_99 : f32 to vector<8x1xf32>
    %278 = arith.divf %276, %277 : vector<8x1xf32>
    %279 = vector.broadcast %271 : vector<8x1xf32> to vector<8x32xf32>
    %280 = arith.subf %267, %279 : vector<8x32xf32>
    %cst_100 = arith.constant 9.99999974E-6 : f32
    %281 = vector.broadcast %cst_100 : f32 to vector<8x1xf32>
    %282 = arith.addf %278, %281 : vector<8x1xf32>
    %283 = math.rsqrt %282 : vector<8x1xf32>
    %284 = vector.broadcast %283 : vector<8x1xf32> to vector<8x32xf32>
    %285 = arith.mulf %280, %284 : vector<8x32xf32>
    %286 = arith.mulf %285, %5 : vector<8x32xf32>
    %287 = arith.addf %286, %8 : vector<8x32xf32>
    %c0_101 = arith.constant 0 : index
    %c0_102 = arith.constant 0 : index
    %c0_103 = arith.constant 0 : index
    %288 = vector.load %arg20[%c0_101, %c0_102, %c0_103] : memref<1x8x32xf32, #tpu.memory_space<vmem>>, vector<1x8x32xf32>
    %289 = vector.shape_cast %288 : vector<1x8x32xf32> to vector<8x32xf32>
    %290 = vector.shape_cast %287 : vector<8x32xf32> to vector<1x8x32xf32>
    tpu.vector_store %arg20[%c0_101, %c0_102, %c0_103], %290 {strides = array<i32>} : memref<1x8x32xf32, #tpu.memory_space<vmem>>, vector<1x8x32xf32>,
    return
  }
  func.func @transform_0(%arg0: i32, %arg1: i32) -> (i32, i32, i32) {
    %c0_i32 = arith.constant 0 : i32
    %c0_i32_0 = arith.constant 0 : i32
    %c0_i32_1 = arith.constant 0 : i32
    return %arg0, %c0_i32, %c0_i32_0 : i32, i32, i32
  }
  func.func @transform_1(%arg0: i32, %arg1: i32) -> (i32, i32, i32) {
    %c0_i32 = arith.constant 0 : i32
    %c0_i32_0 = arith.constant 0 : i32
    %c0_i32_1 = arith.constant 0 : i32
    return %arg0, %c0_i32, %c0_i32_0 : i32, i32, i32
  }
  func.func @transform_2(%arg0: i32, %arg1: i32) -> (i32, i32) {
    %c0_i32 = arith.constant 0 : i32
    %c0_i32_0 = arith.constant 0 : i32
    %c0_i32_1 = arith.constant 0 : i32
    return %c0_i32, %c0_i32_0 : i32, i32
  }
  func.func @transform_3(%arg0: i32, %arg1: i32) -> (i32, i32) {
    %c0_i32 = arith.constant 0 : i32
    %c0_i32_0 = arith.constant 0 : i32
    %c0_i32_1 = arith.constant 0 : i32
    return %c0_i32, %c0_i32_0 : i32, i32
  }
  func.func @transform_4(%arg0: i32, %arg1: i32) -> (i32, i32) {
    %c0_i32 = arith.constant 0 : i32
    %c0_i32_0 = arith.constant 0 : i32
    %c0_i32_1 = arith.constant 0 : i32
    return %c0_i32, %c0_i32_0 : i32, i32
  }
  func.func @transform_5(%arg0: i32, %arg1: i32) -> (i32, i32) {
    %c0_i32 = arith.constant 0 : i32
    %c0_i32_0 = arith.constant 0 : i32
    %c0_i32_1 = arith.constant 0 : i32
    return %c0_i32, %c0_i32_0 : i32, i32
  }
  func.func @transform_6(%arg0: i32, %arg1: i32) -> (i32, i32) {
    %c0_i32 = arith.constant 0 : i32
    %c0_i32_0 = arith.constant 0 : i32
    %c0_i32_1 = arith.constant 0 : i32
    return %c0_i32, %c0_i32_0 : i32, i32
  }
  func.func @transform_7(%arg0: i32, %arg1: i32) -> (i32, i32) {
    %c0_i32 = arith.constant 0 : i32
    %c0_i32_0 = arith.constant 0 : i32
    %c0_i32_1 = arith.constant 0 : i32
    return %c0_i32, %c0_i32_0 : i32, i32
  }
  func.func @transform_8(%arg0: i32, %arg1: i32) -> (i32, i32) {
    %c0_i32 = arith.constant 0 : i32
    %c0_i32_0 = arith.constant 0 : i32
    %c0_i32_1 = arith.constant 0 : i32
    return %c0_i32, %c0_i32_0 : i32, i32
  }
  func.func @transform_9(%arg0: i32, %arg1: i32) -> (i32, i32) {
    %c0_i32 = arith.constant 0 : i32
    %c0_i32_0 = arith.constant 0 : i32
    %c0_i32_1 = arith.constant 0 : i32
    return %c0_i32, %c0_i32_0 : i32, i32
  }
  func.func @transform_10(%arg0: i32, %arg1: i32) -> (i32, i32) {
    %c0_i32 = arith.constant 0 : i32
    %c0_i32_0 = arith.constant 0 : i32
    %c0_i32_1 = arith.constant 0 : i32
    return %c0_i32, %c0_i32_0 : i32, i32
  }
  func.func @transform_11(%arg0: i32, %arg1: i32) -> (i32, i32) {
    %c0_i32 = arith.constant 0 : i32
    %c0_i32_0 = arith.constant 0 : i32
    %c0_i32_1 = arith.constant 0 : i32
    return %c0_i32, %c0_i32_0 : i32, i32
  }
  func.func @transform_12(%arg0: i32, %arg1: i32) -> (i32, i32) {
    %c0_i32 = arith.constant 0 : i32
    %c0_i32_0 = arith.constant 0 : i32
    %c0_i32_1 = arith.constant 0 : i32
    return %c0_i32, %c0_i32_0 : i32, i32
  }
  func.func @transform_13(%arg0: i32, %arg1: i32) -> (i32, i32) {
    %c0_i32 = arith.constant 0 : i32
    %c0_i32_0 = arith.constant 0 : i32
    %c0_i32_1 = arith.constant 0 : i32
    return %c0_i32, %c0_i32_0 : i32, i32
  }
  func.func @transform_14(%arg0: i32, %arg1: i32) -> (i32, i32) {
    %c0_i32 = arith.constant 0 : i32
    %c0_i32_0 = arith.constant 0 : i32
    %c0_i32_1 = arith.constant 0 : i32
    return %c0_i32, %c0_i32_0 : i32, i32
  }
  func.func @transform_15(%arg0: i32, %arg1: i32) -> (i32, i32) {
    %c0_i32 = arith.constant 0 : i32
    %c0_i32_0 = arith.constant 0 : i32
    %c0_i32_1 = arith.constant 0 : i32
    return %c0_i32, %c0_i32_0 : i32, i32
  }
  func.func @transform_16(%arg0: i32, %arg1: i32) -> (i32, i32) {
    %c0_i32 = arith.constant 0 : i32
    %c0_i32_0 = arith.constant 0 : i32
    %c0_i32_1 = arith.constant 0 : i32
    return %c0_i32, %c0_i32_0 : i32, i32
  }
  func.func @transform_17(%arg0: i32, %arg1: i32) -> (i32, i32) {
    %c0_i32 = arith.constant 0 : i32
    %c0_i32_0 = arith.constant 0 : i32
    %c0_i32_1 = arith.constant 0 : i32
    return %c0_i32, %c0_i32_0 : i32, i32
  }
  func.func @transform_18(%arg0: i32, %arg1: i32) -> (i32, i32, i32) {
    %c0_i32 = arith.constant 0 : i32
    %c0_i32_0 = arith.constant 0 : i32
    %c0_i32_1 = arith.constant 0 : i32
    return %arg0, %c0_i32, %c0_i32_0 : i32, i32, i32
  }
}

module attributes {stable_mosaic.version = 11 : i64} {
  func.func @kernel(%arg0: i32, %arg1: i32, %arg2: memref<1x8x32xf32, #tpu.memory_space<vmem>>, %arg3: memref<1x12x32xf32, #tpu.memory_space<vmem>>, %arg4: memref<1x32xf32, #tpu.memory_space<vmem>>, %arg5: memref<1x32xf32, #tpu.memory_space<vmem>>, %arg6: memref<32x96xbf16, #tpu.memory_space<vmem>>, %arg7: memref<1x96xf32, #tpu.memory_space<vmem>>, %arg8: memref<32x32xbf16, #tpu.memory_space<vmem>>, %arg9: memref<1x32xf32, #tpu.memory_space<vmem>>, %arg10: memref<32x32xbf16, #tpu.memory_space<vmem>>, %arg11: memref<1x32xf32, #tpu.memory_space<vmem>>, %arg12: memref<32x64xbf16, #tpu.memory_space<vmem>>, %arg13: memref<1x64xf32, #tpu.memory_space<vmem>>, %arg14: memref<32x32xbf16, #tpu.memory_space<vmem>>, %arg15: memref<1x32xf32, #tpu.memory_space<vmem>>, %arg16: memref<32x64xbf16, #tpu.memory_space<vmem>>, %arg17: memref<1x64xf32, #tpu.memory_space<vmem>>, %arg18: memref<64x32xbf16, #tpu.memory_space<vmem>>, %arg19: memref<1x32xf32, #tpu.memory_space<vmem>>, %arg20: memref<1x8x32xf32, #tpu.memory_space<vmem>>, %arg21: memref<12x32xbf16, #tpu.memory_space<vmem>>, %arg22: memref<12x32xbf16, #tpu.memory_space<vmem>>) attributes {dimension_semantics = [#tpu.dimension_semantics<parallel>, #tpu.dimension_semantics<arbitrary>], iteration_bounds = array<i64: 2, 2>, scalar_prefetch = 0 : i64, scratch_operands = 2 : i64, tpu.core_type = #tpu.core_type<tc>, window_params = [{transform_indices = @transform_0, window_bounds = array<i64: 1, 8, 32>}, {transform_indices = @transform_1, window_bounds = array<i64: 1, 12, 32>}, {pipeline_mode = #tpu.pipeline_mode<synchronous>, transform_indices = @transform_2, window_bounds = array<i64: 1, 32>}, {pipeline_mode = #tpu.pipeline_mode<synchronous>, transform_indices = @transform_3, window_bounds = array<i64: 1, 32>}, {pipeline_mode = #tpu.pipeline_mode<synchronous>, transform_indices = @transform_4, window_bounds = array<i64: 32, 96>}, {pipeline_mode = #tpu.pipeline_mode<synchronous>, transform_indices = @transform_5, window_bounds = array<i64: 1, 96>}, {pipeline_mode = #tpu.pipeline_mode<synchronous>, transform_indices = @transform_6, window_bounds = array<i64: 32, 32>}, {pipeline_mode = #tpu.pipeline_mode<synchronous>, transform_indices = @transform_7, window_bounds = array<i64: 1, 32>}, {pipeline_mode = #tpu.pipeline_mode<synchronous>, transform_indices = @transform_8, window_bounds = array<i64: 32, 32>}, {pipeline_mode = #tpu.pipeline_mode<synchronous>, transform_indices = @transform_9, window_bounds = array<i64: 1, 32>}, {pipeline_mode = #tpu.pipeline_mode<synchronous>, transform_indices = @transform_10, window_bounds = array<i64: 32, 64>}, {pipeline_mode = #tpu.pipeline_mode<synchronous>, transform_indices = @transform_11, window_bounds = array<i64: 1, 64>}, {pipeline_mode = #tpu.pipeline_mode<synchronous>, transform_indices = @transform_12, window_bounds = array<i64: 32, 32>}, {pipeline_mode = #tpu.pipeline_mode<synchronous>, transform_indices = @transform_13, window_bounds = array<i64: 1, 32>}, {pipeline_mode = #tpu.pipeline_mode<synchronous>, transform_indices = @transform_14, window_bounds = array<i64: 32, 64>}, {pipeline_mode = #tpu.pipeline_mode<synchronous>, transform_indices = @transform_15, window_bounds = array<i64: 1, 64>}, {pipeline_mode = #tpu.pipeline_mode<synchronous>, transform_indices = @transform_16, window_bounds = array<i64: 64, 32>}, {pipeline_mode = #tpu.pipeline_mode<synchronous>, transform_indices = @transform_17, window_bounds = array<i64: 1, 32>}, {transform_indices = @transform_18, window_bounds = array<i64: 1, 8, 32>}]} {
    %c0_i32 = arith.constant 0 : i32
    %0 = arith.cmpi eq, %arg1, %c0_i32 : i32
    %1 = arith.extui %0 : i1 to i32
    %c0_i32_0 = arith.constant 0 : i32
    %2 = arith.cmpi ne, %1, %c0_i32_0 : i32
    scf.if %2 {
      %c0_104 = arith.constant 0 : index
      %c0_105 = arith.constant 0 : index
      %c0_106 = arith.constant 0 : index
      %291 = vector.load %arg2[%c0_104, %c0_105, %c0_106] : memref<1x8x32xf32, #tpu.memory_space<vmem>>, vector<1x8x32xf32>
      %292 = vector.shape_cast %291 : vector<1x8x32xf32> to vector<8x32xf32>
      %c0_107 = arith.constant 0 : index
      %c0_108 = arith.constant 0 : index
      %c0_109 = arith.constant 0 : index
      %293 = vector.load %arg20[%c0_107, %c0_108, %c0_109] : memref<1x8x32xf32, #tpu.memory_space<vmem>>, vector<1x8x32xf32>
      %294 = vector.shape_cast %293 : vector<1x8x32xf32> to vector<8x32xf32>
      %295 = vector.shape_cast %292 : vector<8x32xf32> to vector<1x8x32xf32>
      tpu.vector_store %arg20[%c0_107, %c0_108, %c0_109], %295 {strides = array<i32>} : memref<1x8x32xf32, #tpu.memory_space<vmem>>, vector<1x8x32xf32>,
      %c0_110 = arith.constant 0 : index
      %c0_111 = arith.constant 0 : index
      %c0_112 = arith.constant 0 : index
      %296 = vector.load %arg3[%c0_110, %c0_111, %c0_112] : memref<1x12x32xf32, #tpu.memory_space<vmem>>, vector<1x12x32xf32>
      %297 = vector.shape_cast %296 : vector<1x12x32xf32> to vector<12x32xf32>
      %298 = arith.truncf %297 : vector<12x32xf32> to vector<12x32xbf16>
      %c0_113 = arith.constant 0 : index
      %c0_114 = arith.constant 0 : index
      %299 = vector.load %arg12[%c0_113, %c0_114] : memref<32x64xbf16, #tpu.memory_space<vmem>>, vector<32x64xbf16>
      %cst_115 = arith.constant dense<0.000000e+00> : vector<12x64xf32>
      %300 = tpu.matmul %298, %299, %cst_115 {dimension_numbers = #tpu.dot_dimension_numbers<[1], [0], [0], [1], [0, 0, 1, 1], [], []>} : vector<12x32xbf16>, vector<32x64xbf16>, vector<12x64xf32> -> vector<12x64xf32>
      %c0_116 = arith.constant 0 : index
      %c0_117 = arith.constant 0 : index
      %301 = vector.load %arg13[%c0_116, %c0_117] : memref<1x64xf32, #tpu.memory_space<vmem>>, vector<1x64xf32>
      %302 = vector.broadcast %301 : vector<1x64xf32> to vector<12x64xf32>
      %303 = arith.addf %300, %302 : vector<12x64xf32>
      %304 = vector.extract_strided_slice %303 {offsets = [0, 0], sizes = [12, 32], strides = [1, 1]} : vector<12x64xf32> to vector<12x32xf32>
      %305 = arith.truncf %304 : vector<12x32xf32> to vector<12x32xbf16>
      %c0_118 = arith.constant 0 : index
      %c0_119 = arith.constant 0 : index
      %306 = vector.load %arg21[%c0_118, %c0_119] : memref<12x32xbf16, #tpu.memory_space<vmem>>, vector<12x32xbf16>
      tpu.vector_store %arg21[%c0_118, %c0_119], %305 {strides = array<i32>} : memref<12x32xbf16, #tpu.memory_space<vmem>>, vector<12x32xbf16>,
      %307 = vector.extract_strided_slice %303 {offsets = [0, 32], sizes = [12, 32], strides = [1, 1]} : vector<12x64xf32> to vector<12x32xf32>
      %308 = arith.truncf %307 : vector<12x32xf32> to vector<12x32xbf16>
      %c0_120 = arith.constant 0 : index
      %c0_121 = arith.constant 0 : index
      %309 = vector.load %arg22[%c0_120, %c0_121] : memref<12x32xbf16, #tpu.memory_space<vmem>>, vector<12x32xbf16>
      tpu.vector_store %arg22[%c0_120, %c0_121], %308 {strides = array<i32>} : memref<12x32xbf16, #tpu.memory_space<vmem>>, vector<12x32xbf16>,
    } else {
    }
    %c0 = arith.constant 0 : index
    %c0_1 = arith.constant 0 : index
    %3 = vector.load %arg4[%c0, %c0_1] : memref<1x32xf32, #tpu.memory_space<vmem>>, vector<1x32xf32>
    %4 = vector.shape_cast %3 : vector<1x32xf32> to vector<1x32xf32>
    %5 = vector.broadcast %4 : vector<1x32xf32> to vector<8x32xf32>
    %c0_2 = arith.constant 0 : index
    %c0_3 = arith.constant 0 : index
    %6 = vector.load %arg5[%c0_2, %c0_3] : memref<1x32xf32, #tpu.memory_space<vmem>>, vector<1x32xf32>
    %7 = vector.shape_cast %6 : vector<1x32xf32> to vector<1x32xf32>
    %8 = vector.broadcast %7 : vector<1x32xf32> to vector<8x32xf32>
    %c0_4 = arith.constant 0 : index
    %c0_5 = arith.constant 0 : index
    %c0_6 = arith.constant 0 : index
    %9 = vector.load %arg20[%c0_4, %c0_5, %c0_6] : memref<1x8x32xf32, #tpu.memory_space<vmem>>, vector<1x8x32xf32>
    %10 = vector.shape_cast %9 : vector<1x8x32xf32> to vector<8x32xf32>
    %cst = arith.constant dense<0.000000e+00> : vector<8xf32>
    %11 = vector.multi_reduction <add>, %10, %cst [1] : vector<8x32xf32> to vector<8xf32>
    %12 = vector.shape_cast %11 : vector<8xf32> to vector<8x1xf32>
    %cst_7 = arith.constant 3.200000e+01 : f32
    %13 = vector.broadcast %cst_7 : f32 to vector<8x1xf32>
    %14 = arith.divf %12, %13 : vector<8x1xf32>
    %15 = vector.broadcast %14 : vector<8x1xf32> to vector<8x32xf32>
    %16 = arith.subf %10, %15 : vector<8x32xf32>
    %17 = arith.mulf %16, %16 : vector<8x32xf32>
    %cst_8 = arith.constant dense<0.000000e+00> : vector<8xf32>
    %18 = vector.multi_reduction <add>, %17, %cst_8 [1] : vector<8x32xf32> to vector<8xf32>
    %19 = vector.shape_cast %18 : vector<8xf32> to vector<8x1xf32>
    %cst_9 = arith.constant 3.200000e+01 : f32
    %20 = vector.broadcast %cst_9 : f32 to vector<8x1xf32>
    %21 = arith.divf %19, %20 : vector<8x1xf32>
    %22 = vector.broadcast %14 : vector<8x1xf32> to vector<8x32xf32>
    %23 = arith.subf %10, %22 : vector<8x32xf32>
    %cst_10 = arith.constant 9.99999974E-6 : f32
    %24 = vector.broadcast %cst_10 : f32 to vector<8x1xf32>
    %25 = arith.addf %21, %24 : vector<8x1xf32>
    %26 = math.rsqrt %25 : vector<8x1xf32>
    %27 = vector.broadcast %26 : vector<8x1xf32> to vector<8x32xf32>
    %28 = arith.mulf %23, %27 : vector<8x32xf32>
    %29 = arith.mulf %28, %5 : vector<8x32xf32>
    %30 = arith.addf %29, %8 : vector<8x32xf32>
    %31 = arith.truncf %30 : vector<8x32xf32> to vector<8x32xbf16>
    %c0_11 = arith.constant 0 : index
    %c0_12 = arith.constant 0 : index
    %32 = vector.load %arg6[%c0_11, %c0_12] : memref<32x96xbf16, #tpu.memory_space<vmem>>, vector<32x96xbf16>
    %cst_13 = arith.constant dense<0.000000e+00> : vector<8x96xf32>
    %33 = tpu.matmul %31, %32, %cst_13 {dimension_numbers = #tpu.dot_dimension_numbers<[1], [0], [0], [1], [0, 0, 1, 1], [], []>} : vector<8x32xbf16>, vector<32x96xbf16>, vector<8x96xf32> -> vector<8x96xf32>
    %c0_14 = arith.constant 0 : index
    %c0_15 = arith.constant 0 : index
    %34 = vector.load %arg7[%c0_14, %c0_15] : memref<1x96xf32, #tpu.memory_space<vmem>>, vector<1x96xf32>
    %35 = vector.broadcast %34 : vector<1x96xf32> to vector<8x96xf32>
    %36 = arith.addf %33, %35 : vector<8x96xf32>
    %37 = vector.extract_strided_slice %36 {offsets = [0, 0], sizes = [8, 32], strides = [1, 1]} : vector<8x96xf32> to vector<8x32xf32>
    %38 = vector.extract_strided_slice %36 {offsets = [0, 32], sizes = [8, 32], strides = [1, 1]} : vector<8x96xf32> to vector<8x32xf32>
    %39 = vector.extract_strided_slice %36 {offsets = [0, 64], sizes = [8, 32], strides = [1, 1]} : vector<8x96xf32> to vector<8x32xf32>
    %40 = arith.truncf %37 : vector<8x32xf32> to vector<8x32xbf16>
    %41 = arith.truncf %38 : vector<8x32xf32> to vector<8x32xbf16>
    %42 = arith.truncf %39 : vector<8x32xf32> to vector<8x32xbf16>
    %43 = vector.extract_strided_slice %40 {offsets = [0, 0], sizes = [8, 8], strides = [1, 1]} : vector<8x32xbf16> to vector<8x8xbf16>
    %44 = vector.extract_strided_slice %41 {offsets = [0, 0], sizes = [8, 8], strides = [1, 1]} : vector<8x32xbf16> to vector<8x8xbf16>
    %45 = vector.extract_strided_slice %42 {offsets = [0, 0], sizes = [8, 8], strides = [1, 1]} : vector<8x32xbf16> to vector<8x8xbf16>
    "tpu.trace_start"() <{level = 10 : i32, message = "qd,kd->qk"}> : () -> ()
    %cst_16 = arith.constant dense<0.000000e+00> : vector<8x8xf32>
    %46 = tpu.matmul %43, %44, %cst_16 {dimension_numbers = #tpu.dot_dimension_numbers<[1], [1], [0], [0], [0, 0, 1, 0], [], []>} : vector<8x8xbf16>, vector<8x8xbf16>, vector<8x8xf32> -> vector<8x8xf32>
    "tpu.trace_stop"() : () -> ()
    %cst_17 = arith.constant 0.353553385 : f32
    %47 = vector.broadcast %cst_17 : f32 to vector<8x8xf32>
    %48 = arith.mulf %46, %47 : vector<8x8xf32>
    %cst_18 = arith.constant dense<0xFF800000> : vector<8xf32>
    %49 = vector.multi_reduction <maximumf>, %48, %cst_18 [1] : vector<8x8xf32> to vector<8xf32>
    %50 = vector.shape_cast %49 : vector<8xf32> to vector<8x1xf32>
    %51 = vector.broadcast %50 : vector<8x1xf32> to vector<8x8xf32>
    %52 = arith.subf %48, %51 : vector<8x8xf32>
    %53 = math.exp %52 : vector<8x8xf32>
    %cst_19 = arith.constant dense<0.000000e+00> : vector<8xf32>
    %54 = vector.multi_reduction <add>, %53, %cst_19 [1] : vector<8x8xf32> to vector<8xf32>
    %55 = vector.shape_cast %54 : vector<8xf32> to vector<8x1xf32>
    %56 = tpu.reciprocal %55 {approx = true} : vector<8x1xf32> -> vector<8x1xf32>
    %57 = vector.broadcast %56 : vector<8x1xf32> to vector<8x8xf32>
    %58 = arith.mulf %53, %57 : vector<8x8xf32>
    %59 = arith.truncf %58 : vector<8x8xf32> to vector<8x8xbf16>
    %cst_20 = arith.constant dense<0.000000e+00> : vector<8x8xf32>
    %60 = tpu.matmul %59, %45, %cst_20 {dimension_numbers = #tpu.dot_dimension_numbers<[1], [0], [0], [1], [0, 0, 1, 1], [], []>} : vector<8x8xbf16>, vector<8x8xbf16>, vector<8x8xf32> -> vector<8x8xf32>
    %61 = vector.extract_strided_slice %40 {offsets = [0, 8], sizes = [8, 8], strides = [1, 1]} : vector<8x32xbf16> to vector<8x8xbf16>
    %62 = vector.extract_strided_slice %41 {offsets = [0, 8], sizes = [8, 8], strides = [1, 1]} : vector<8x32xbf16> to vector<8x8xbf16>
    %63 = vector.extract_strided_slice %42 {offsets = [0, 8], sizes = [8, 8], strides = [1, 1]} : vector<8x32xbf16> to vector<8x8xbf16>
    "tpu.trace_start"() <{level = 10 : i32, message = "qd,kd->qk"}> : () -> ()
    %cst_21 = arith.constant dense<0.000000e+00> : vector<8x8xf32>
    %64 = tpu.matmul %61, %62, %cst_21 {dimension_numbers = #tpu.dot_dimension_numbers<[1], [1], [0], [0], [0, 0, 1, 0], [], []>} : vector<8x8xbf16>, vector<8x8xbf16>, vector<8x8xf32> -> vector<8x8xf32>
    "tpu.trace_stop"() : () -> ()
    %cst_22 = arith.constant 0.353553385 : f32
    %65 = vector.broadcast %cst_22 : f32 to vector<8x8xf32>
    %66 = arith.mulf %64, %65 : vector<8x8xf32>
    %cst_23 = arith.constant dense<0xFF800000> : vector<8xf32>
    %67 = vector.multi_reduction <maximumf>, %66, %cst_23 [1] : vector<8x8xf32> to vector<8xf32>
    %68 = vector.shape_cast %67 : vector<8xf32> to vector<8x1xf32>
    %69 = vector.broadcast %68 : vector<8x1xf32> to vector<8x8xf32>
    %70 = arith.subf %66, %69 : vector<8x8xf32>
    %71 = math.exp %70 : vector<8x8xf32>
    %cst_24 = arith.constant dense<0.000000e+00> : vector<8xf32>
    %72 = vector.multi_reduction <add>, %71, %cst_24 [1] : vector<8x8xf32> to vector<8xf32>
    %73 = vector.shape_cast %72 : vector<8xf32> to vector<8x1xf32>
    %74 = tpu.reciprocal %73 {approx = true} : vector<8x1xf32> -> vector<8x1xf32>
    %75 = vector.broadcast %74 : vector<8x1xf32> to vector<8x8xf32>
    %76 = arith.mulf %71, %75 : vector<8x8xf32>
    %77 = arith.truncf %76 : vector<8x8xf32> to vector<8x8xbf16>
    %cst_25 = arith.constant dense<0.000000e+00> : vector<8x8xf32>
    %78 = tpu.matmul %77, %63, %cst_25 {dimension_numbers = #tpu.dot_dimension_numbers<[1], [0], [0], [1], [0, 0, 1, 1], [], []>} : vector<8x8xbf16>, vector<8x8xbf16>, vector<8x8xf32> -> vector<8x8xf32>
    %79 = vector.extract_strided_slice %40 {offsets = [0, 16], sizes = [8, 8], strides = [1, 1]} : vector<8x32xbf16> to vector<8x8xbf16>
    %80 = vector.extract_strided_slice %41 {offsets = [0, 16], sizes = [8, 8], strides = [1, 1]} : vector<8x32xbf16> to vector<8x8xbf16>
    %81 = vector.extract_strided_slice %42 {offsets = [0, 16], sizes = [8, 8], strides = [1, 1]} : vector<8x32xbf16> to vector<8x8xbf16>
    "tpu.trace_start"() <{level = 10 : i32, message = "qd,kd->qk"}> : () -> ()
    %cst_26 = arith.constant dense<0.000000e+00> : vector<8x8xf32>
    %82 = tpu.matmul %79, %80, %cst_26 {dimension_numbers = #tpu.dot_dimension_numbers<[1], [1], [0], [0], [0, 0, 1, 0], [], []>} : vector<8x8xbf16>, vector<8x8xbf16>, vector<8x8xf32> -> vector<8x8xf32>
    "tpu.trace_stop"() : () -> ()
    %cst_27 = arith.constant 0.353553385 : f32
    %83 = vector.broadcast %cst_27 : f32 to vector<8x8xf32>
    %84 = arith.mulf %82, %83 : vector<8x8xf32>
    %cst_28 = arith.constant dense<0xFF800000> : vector<8xf32>
    %85 = vector.multi_reduction <maximumf>, %84, %cst_28 [1] : vector<8x8xf32> to vector<8xf32>
    %86 = vector.shape_cast %85 : vector<8xf32> to vector<8x1xf32>
    %87 = vector.broadcast %86 : vector<8x1xf32> to vector<8x8xf32>
    %88 = arith.subf %84, %87 : vector<8x8xf32>
    %89 = math.exp %88 : vector<8x8xf32>
    %cst_29 = arith.constant dense<0.000000e+00> : vector<8xf32>
    %90 = vector.multi_reduction <add>, %89, %cst_29 [1] : vector<8x8xf32> to vector<8xf32>
    %91 = vector.shape_cast %90 : vector<8xf32> to vector<8x1xf32>
    %92 = tpu.reciprocal %91 {approx = true} : vector<8x1xf32> -> vector<8x1xf32>
    %93 = vector.broadcast %92 : vector<8x1xf32> to vector<8x8xf32>
    %94 = arith.mulf %89, %93 : vector<8x8xf32>
    %95 = arith.truncf %94 : vector<8x8xf32> to vector<8x8xbf16>
    %cst_30 = arith.constant dense<0.000000e+00> : vector<8x8xf32>
    %96 = tpu.matmul %95, %81, %cst_30 {dimension_numbers = #tpu.dot_dimension_numbers<[1], [0], [0], [1], [0, 0, 1, 1], [], []>} : vector<8x8xbf16>, vector<8x8xbf16>, vector<8x8xf32> -> vector<8x8xf32>
    %97 = vector.extract_strided_slice %40 {offsets = [0, 24], sizes = [8, 8], strides = [1, 1]} : vector<8x32xbf16> to vector<8x8xbf16>
    %98 = vector.extract_strided_slice %41 {offsets = [0, 24], sizes = [8, 8], strides = [1, 1]} : vector<8x32xbf16> to vector<8x8xbf16>
    %99 = vector.extract_strided_slice %42 {offsets = [0, 24], sizes = [8, 8], strides = [1, 1]} : vector<8x32xbf16> to vector<8x8xbf16>
    "tpu.trace_start"() <{level = 10 : i32, message = "qd,kd->qk"}> : () -> ()
    %cst_31 = arith.constant dense<0.000000e+00> : vector<8x8xf32>
    %100 = tpu.matmul %97, %98, %cst_31 {dimension_numbers = #tpu.dot_dimension_numbers<[1], [1], [0], [0], [0, 0, 1, 0], [], []>} : vector<8x8xbf16>, vector<8x8xbf16>, vector<8x8xf32> -> vector<8x8xf32>
    "tpu.trace_stop"() : () -> ()
    %cst_32 = arith.constant 0.353553385 : f32
    %101 = vector.broadcast %cst_32 : f32 to vector<8x8xf32>
    %102 = arith.mulf %100, %101 : vector<8x8xf32>
    %cst_33 = arith.constant dense<0xFF800000> : vector<8xf32>
    %103 = vector.multi_reduction <maximumf>, %102, %cst_33 [1] : vector<8x8xf32> to vector<8xf32>
    %104 = vector.shape_cast %103 : vector<8xf32> to vector<8x1xf32>
    %105 = vector.broadcast %104 : vector<8x1xf32> to vector<8x8xf32>
    %106 = arith.subf %102, %105 : vector<8x8xf32>
    %107 = math.exp %106 : vector<8x8xf32>
    %cst_34 = arith.constant dense<0.000000e+00> : vector<8xf32>
    %108 = vector.multi_reduction <add>, %107, %cst_34 [1] : vector<8x8xf32> to vector<8xf32>
    %109 = vector.shape_cast %108 : vector<8xf32> to vector<8x1xf32>
    %110 = tpu.reciprocal %109 {approx = true} : vector<8x1xf32> -> vector<8x1xf32>
    %111 = vector.broadcast %110 : vector<8x1xf32> to vector<8x8xf32>
    %112 = arith.mulf %107, %111 : vector<8x8xf32>
    %113 = arith.truncf %112 : vector<8x8xf32> to vector<8x8xbf16>
    %cst_35 = arith.constant dense<0.000000e+00> : vector<8x8xf32>
    %114 = tpu.matmul %113, %99, %cst_35 {dimension_numbers = #tpu.dot_dimension_numbers<[1], [0], [0], [1], [0, 0, 1, 1], [], []>} : vector<8x8xbf16>, vector<8x8xbf16>, vector<8x8xf32> -> vector<8x8xf32>
    %115 = tpu.concatenate %60, %78, %96, %114 in 1 : vector<8x8xf32>, vector<8x8xf32>, vector<8x8xf32>, vector<8x8xf32> -> vector<8x32xf32>
    %116 = arith.truncf %115 : vector<8x32xf32> to vector<8x32xbf16>
    %c0_36 = arith.constant 0 : index
    %c0_37 = arith.constant 0 : index
    %117 = vector.load %arg8[%c0_36, %c0_37] : memref<32x32xbf16, #tpu.memory_space<vmem>>, vector<32x32xbf16>
    %cst_38 = arith.constant dense<0.000000e+00> : vector<8x32xf32>
    %118 = tpu.matmul %116, %117, %cst_38 {dimension_numbers = #tpu.dot_dimension_numbers<[1], [0], [0], [1], [0, 0, 1, 1], [], []>} : vector<8x32xbf16>, vector<32x32xbf16>, vector<8x32xf32> -> vector<8x32xf32>
    %c0_39 = arith.constant 0 : index
    %c0_40 = arith.constant 0 : index
    %119 = vector.load %arg9[%c0_39, %c0_40] : memref<1x32xf32, #tpu.memory_space<vmem>>, vector<1x32xf32>
    %120 = vector.broadcast %119 : vector<1x32xf32> to vector<8x32xf32>
    %121 = arith.addf %118, %120 : vector<8x32xf32>
    %122 = arith.addf %30, %121 : vector<8x32xf32>
    %cst_41 = arith.constant dense<0.000000e+00> : vector<8xf32>
    %123 = vector.multi_reduction <add>, %122, %cst_41 [1] : vector<8x32xf32> to vector<8xf32>
    %124 = vector.shape_cast %123 : vector<8xf32> to vector<8x1xf32>
    %cst_42 = arith.constant 3.200000e+01 : f32
    %125 = vector.broadcast %cst_42 : f32 to vector<8x1xf32>
    %126 = arith.divf %124, %125 : vector<8x1xf32>
    %127 = vector.broadcast %126 : vector<8x1xf32> to vector<8x32xf32>
    %128 = arith.subf %122, %127 : vector<8x32xf32>
    %129 = arith.mulf %128, %128 : vector<8x32xf32>
    %cst_43 = arith.constant dense<0.000000e+00> : vector<8xf32>
    %130 = vector.multi_reduction <add>, %129, %cst_43 [1] : vector<8x32xf32> to vector<8xf32>
    %131 = vector.shape_cast %130 : vector<8xf32> to vector<8x1xf32>
    %cst_44 = arith.constant 3.200000e+01 : f32
    %132 = vector.broadcast %cst_44 : f32 to vector<8x1xf32>
    %133 = arith.divf %131, %132 : vector<8x1xf32>
    %134 = vector.broadcast %126 : vector<8x1xf32> to vector<8x32xf32>
    %135 = arith.subf %122, %134 : vector<8x32xf32>
    %cst_45 = arith.constant 9.99999974E-6 : f32
    %136 = vector.broadcast %cst_45 : f32 to vector<8x1xf32>
    %137 = arith.addf %133, %136 : vector<8x1xf32>
    %138 = math.rsqrt %137 : vector<8x1xf32>
    %139 = vector.broadcast %138 : vector<8x1xf32> to vector<8x32xf32>
    %140 = arith.mulf %135, %139 : vector<8x32xf32>
    %141 = arith.mulf %140, %5 : vector<8x32xf32>
    %142 = arith.addf %141, %8 : vector<8x32xf32>
    %143 = arith.truncf %142 : vector<8x32xf32> to vector<8x32xbf16>
    %c0_46 = arith.constant 0 : index
    %c0_47 = arith.constant 0 : index
    %144 = vector.load %arg10[%c0_46, %c0_47] : memref<32x32xbf16, #tpu.memory_space<vmem>>, vector<32x32xbf16>
    %cst_48 = arith.constant dense<0.000000e+00> : vector<8x32xf32>
    %145 = tpu.matmul %143, %144, %cst_48 {dimension_numbers = #tpu.dot_dimension_numbers<[1], [0], [0], [1], [0, 0, 1, 1], [], []>} : vector<8x32xbf16>, vector<32x32xbf16>, vector<8x32xf32> -> vector<8x32xf32>
    %c0_49 = arith.constant 0 : index
    %c0_50 = arith.constant 0 : index
    %146 = vector.load %arg11[%c0_49, %c0_50] : memref<1x32xf32, #tpu.memory_space<vmem>>, vector<1x32xf32>
    %147 = vector.broadcast %146 : vector<1x32xf32> to vector<8x32xf32>
    %148 = arith.addf %145, %147 : vector<8x32xf32>
    %c0_51 = arith.constant 0 : index
    %c0_52 = arith.constant 0 : index
    %149 = vector.load %arg21[%c0_51, %c0_52] : memref<12x32xbf16, #tpu.memory_space<vmem>>, vector<12x32xbf16>
    %c0_53 = arith.constant 0 : index
    %c0_54 = arith.constant 0 : index
    %150 = vector.load %arg22[%c0_53, %c0_54] : memref<12x32xbf16, #tpu.memory_space<vmem>>, vector<12x32xbf16>
    %151 = arith.truncf %148 : vector<8x32xf32> to vector<8x32xbf16>
    %152 = vector.extract_strided_slice %151 {offsets = [0, 0], sizes = [8, 8], strides = [1, 1]} : vector<8x32xbf16> to vector<8x8xbf16>
    %153 = vector.extract_strided_slice %149 {offsets = [0, 0], sizes = [12, 8], strides = [1, 1]} : vector<12x32xbf16> to vector<12x8xbf16>
    %154 = vector.extract_strided_slice %150 {offsets = [0, 0], sizes = [12, 8], strides = [1, 1]} : vector<12x32xbf16> to vector<12x8xbf16>
    "tpu.trace_start"() <{level = 10 : i32, message = "qd,kd->qk"}> : () -> ()
    %cst_55 = arith.constant dense<0.000000e+00> : vector<8x12xf32>
    %155 = tpu.matmul %152, %153, %cst_55 {dimension_numbers = #tpu.dot_dimension_numbers<[1], [1], [0], [0], [0, 0, 1, 0], [], []>} : vector<8x8xbf16>, vector<12x8xbf16>, vector<8x12xf32> -> vector<8x12xf32>
    "tpu.trace_stop"() : () -> ()
    %cst_56 = arith.constant 0.353553385 : f32
    %156 = vector.broadcast %cst_56 : f32 to vector<8x12xf32>
    %157 = arith.mulf %155, %156 : vector<8x12xf32>
    %cst_57 = arith.constant dense<0xFF800000> : vector<8xf32>
    %158 = vector.multi_reduction <maximumf>, %157, %cst_57 [1] : vector<8x12xf32> to vector<8xf32>
    %159 = vector.shape_cast %158 : vector<8xf32> to vector<8x1xf32>
    %160 = vector.broadcast %159 : vector<8x1xf32> to vector<8x12xf32>
    %161 = arith.subf %157, %160 : vector<8x12xf32>
    %162 = math.exp %161 : vector<8x12xf32>
    %cst_58 = arith.constant dense<0.000000e+00> : vector<8xf32>
    %163 = vector.multi_reduction <add>, %162, %cst_58 [1] : vector<8x12xf32> to vector<8xf32>
    %164 = vector.shape_cast %163 : vector<8xf32> to vector<8x1xf32>
    %165 = tpu.reciprocal %164 {approx = true} : vector<8x1xf32> -> vector<8x1xf32>
    %166 = vector.broadcast %165 : vector<8x1xf32> to vector<8x12xf32>
    %167 = arith.mulf %162, %166 : vector<8x12xf32>
    %168 = arith.truncf %167 : vector<8x12xf32> to vector<8x12xbf16>
    %cst_59 = arith.constant dense<0.000000e+00> : vector<8x8xf32>
    %169 = tpu.matmul %168, %154, %cst_59 {dimension_numbers = #tpu.dot_dimension_numbers<[1], [0], [0], [1], [0, 0, 1, 1], [], []>} : vector<8x12xbf16>, vector<12x8xbf16>, vector<8x8xf32> -> vector<8x8xf32>
    %170 = vector.extract_strided_slice %151 {offsets = [0, 8], sizes = [8, 8], strides = [1, 1]} : vector<8x32xbf16> to vector<8x8xbf16>
    %171 = vector.extract_strided_slice %149 {offsets = [0, 8], sizes = [12, 8], strides = [1, 1]} : vector<12x32xbf16> to vector<12x8xbf16>
    %172 = vector.extract_strided_slice %150 {offsets = [0, 8], sizes = [12, 8], strides = [1, 1]} : vector<12x32xbf16> to vector<12x8xbf16>
    "tpu.trace_start"() <{level = 10 : i32, message = "qd,kd->qk"}> : () -> ()
    %cst_60 = arith.constant dense<0.000000e+00> : vector<8x12xf32>
    %173 = tpu.matmul %170, %171, %cst_60 {dimension_numbers = #tpu.dot_dimension_numbers<[1], [1], [0], [0], [0, 0, 1, 0], [], []>} : vector<8x8xbf16>, vector<12x8xbf16>, vector<8x12xf32> -> vector<8x12xf32>
    "tpu.trace_stop"() : () -> ()
    %cst_61 = arith.constant 0.353553385 : f32
    %174 = vector.broadcast %cst_61 : f32 to vector<8x12xf32>
    %175 = arith.mulf %173, %174 : vector<8x12xf32>
    %cst_62 = arith.constant dense<0xFF800000> : vector<8xf32>
    %176 = vector.multi_reduction <maximumf>, %175, %cst_62 [1] : vector<8x12xf32> to vector<8xf32>
    %177 = vector.shape_cast %176 : vector<8xf32> to vector<8x1xf32>
    %178 = vector.broadcast %177 : vector<8x1xf32> to vector<8x12xf32>
    %179 = arith.subf %175, %178 : vector<8x12xf32>
    %180 = math.exp %179 : vector<8x12xf32>
    %cst_63 = arith.constant dense<0.000000e+00> : vector<8xf32>
    %181 = vector.multi_reduction <add>, %180, %cst_63 [1] : vector<8x12xf32> to vector<8xf32>
    %182 = vector.shape_cast %181 : vector<8xf32> to vector<8x1xf32>
    %183 = tpu.reciprocal %182 {approx = true} : vector<8x1xf32> -> vector<8x1xf32>
    %184 = vector.broadcast %183 : vector<8x1xf32> to vector<8x12xf32>
    %185 = arith.mulf %180, %184 : vector<8x12xf32>
    %186 = arith.truncf %185 : vector<8x12xf32> to vector<8x12xbf16>
    %cst_64 = arith.constant dense<0.000000e+00> : vector<8x8xf32>
    %187 = tpu.matmul %186, %172, %cst_64 {dimension_numbers = #tpu.dot_dimension_numbers<[1], [0], [0], [1], [0, 0, 1, 1], [], []>} : vector<8x12xbf16>, vector<12x8xbf16>, vector<8x8xf32> -> vector<8x8xf32>
    %188 = vector.extract_strided_slice %151 {offsets = [0, 16], sizes = [8, 8], strides = [1, 1]} : vector<8x32xbf16> to vector<8x8xbf16>
    %189 = vector.extract_strided_slice %149 {offsets = [0, 16], sizes = [12, 8], strides = [1, 1]} : vector<12x32xbf16> to vector<12x8xbf16>
    %190 = vector.extract_strided_slice %150 {offsets = [0, 16], sizes = [12, 8], strides = [1, 1]} : vector<12x32xbf16> to vector<12x8xbf16>
    "tpu.trace_start"() <{level = 10 : i32, message = "qd,kd->qk"}> : () -> ()
    %cst_65 = arith.constant dense<0.000000e+00> : vector<8x12xf32>
    %191 = tpu.matmul %188, %189, %cst_65 {dimension_numbers = #tpu.dot_dimension_numbers<[1], [1], [0], [0], [0, 0, 1, 0], [], []>} : vector<8x8xbf16>, vector<12x8xbf16>, vector<8x12xf32> -> vector<8x12xf32>
    "tpu.trace_stop"() : () -> ()
    %cst_66 = arith.constant 0.353553385 : f32
    %192 = vector.broadcast %cst_66 : f32 to vector<8x12xf32>
    %193 = arith.mulf %191, %192 : vector<8x12xf32>
    %cst_67 = arith.constant dense<0xFF800000> : vector<8xf32>
    %194 = vector.multi_reduction <maximumf>, %193, %cst_67 [1] : vector<8x12xf32> to vector<8xf32>
    %195 = vector.shape_cast %194 : vector<8xf32> to vector<8x1xf32>
    %196 = vector.broadcast %195 : vector<8x1xf32> to vector<8x12xf32>
    %197 = arith.subf %193, %196 : vector<8x12xf32>
    %198 = math.exp %197 : vector<8x12xf32>
    %cst_68 = arith.constant dense<0.000000e+00> : vector<8xf32>
    %199 = vector.multi_reduction <add>, %198, %cst_68 [1] : vector<8x12xf32> to vector<8xf32>
    %200 = vector.shape_cast %199 : vector<8xf32> to vector<8x1xf32>
    %201 = tpu.reciprocal %200 {approx = true} : vector<8x1xf32> -> vector<8x1xf32>
    %202 = vector.broadcast %201 : vector<8x1xf32> to vector<8x12xf32>
    %203 = arith.mulf %198, %202 : vector<8x12xf32>
    %204 = arith.truncf %203 : vector<8x12xf32> to vector<8x12xbf16>
    %cst_69 = arith.constant dense<0.000000e+00> : vector<8x8xf32>
    %205 = tpu.matmul %204, %190, %cst_69 {dimension_numbers = #tpu.dot_dimension_numbers<[1], [0], [0], [1], [0, 0, 1, 1], [], []>} : vector<8x12xbf16>, vector<12x8xbf16>, vector<8x8xf32> -> vector<8x8xf32>
    %206 = vector.extract_strided_slice %151 {offsets = [0, 24], sizes = [8, 8], strides = [1, 1]} : vector<8x32xbf16> to vector<8x8xbf16>
    %207 = vector.extract_strided_slice %149 {offsets = [0, 24], sizes = [12, 8], strides = [1, 1]} : vector<12x32xbf16> to vector<12x8xbf16>
    %208 = vector.extract_strided_slice %150 {offsets = [0, 24], sizes = [12, 8], strides = [1, 1]} : vector<12x32xbf16> to vector<12x8xbf16>
    "tpu.trace_start"() <{level = 10 : i32, message = "qd,kd->qk"}> : () -> ()
    %cst_70 = arith.constant dense<0.000000e+00> : vector<8x12xf32>
    %209 = tpu.matmul %206, %207, %cst_70 {dimension_numbers = #tpu.dot_dimension_numbers<[1], [1], [0], [0], [0, 0, 1, 0], [], []>} : vector<8x8xbf16>, vector<12x8xbf16>, vector<8x12xf32> -> vector<8x12xf32>
    "tpu.trace_stop"() : () -> ()
    %cst_71 = arith.constant 0.353553385 : f32
    %210 = vector.broadcast %cst_71 : f32 to vector<8x12xf32>
    %211 = arith.mulf %209, %210 : vector<8x12xf32>
    %cst_72 = arith.constant dense<0xFF800000> : vector<8xf32>
    %212 = vector.multi_reduction <maximumf>, %211, %cst_72 [1] : vector<8x12xf32> to vector<8xf32>
    %213 = vector.shape_cast %212 : vector<8xf32> to vector<8x1xf32>
    %214 = vector.broadcast %213 : vector<8x1xf32> to vector<8x12xf32>
    %215 = arith.subf %211, %214 : vector<8x12xf32>
    %216 = math.exp %215 : vector<8x12xf32>
    %cst_73 = arith.constant dense<0.000000e+00> : vector<8xf32>
    %217 = vector.multi_reduction <add>, %216, %cst_73 [1] : vector<8x12xf32> to vector<8xf32>
    %218 = vector.shape_cast %217 : vector<8xf32> to vector<8x1xf32>
    %219 = tpu.reciprocal %218 {approx = true} : vector<8x1xf32> -> vector<8x1xf32>
    %220 = vector.broadcast %219 : vector<8x1xf32> to vector<8x12xf32>
    %221 = arith.mulf %216, %220 : vector<8x12xf32>
    %222 = arith.truncf %221 : vector<8x12xf32> to vector<8x12xbf16>
    %cst_74 = arith.constant dense<0.000000e+00> : vector<8x8xf32>
    %223 = tpu.matmul %222, %208, %cst_74 {dimension_numbers = #tpu.dot_dimension_numbers<[1], [0], [0], [1], [0, 0, 1, 1], [], []>} : vector<8x12xbf16>, vector<12x8xbf16>, vector<8x8xf32> -> vector<8x8xf32>
    %224 = tpu.concatenate %169, %187, %205, %223 in 1 : vector<8x8xf32>, vector<8x8xf32>, vector<8x8xf32>, vector<8x8xf32> -> vector<8x32xf32>
    %225 = arith.truncf %224 : vector<8x32xf32> to vector<8x32xbf16>
    %c0_75 = arith.constant 0 : index
    %c0_76 = arith.constant 0 : index
    %226 = vector.load %arg14[%c0_75, %c0_76] : memref<32x32xbf16, #tpu.memory_space<vmem>>, vector<32x32xbf16>
    %cst_77 = arith.constant dense<0.000000e+00> : vector<8x32xf32>
    %227 = tpu.matmul %225, %226, %cst_77 {dimension_numbers = #tpu.dot_dimension_numbers<[1], [0], [0], [1], [0, 0, 1, 1], [], []>} : vector<8x32xbf16>, vector<32x32xbf16>, vector<8x32xf32> -> vector<8x32xf32>
    %c0_78 = arith.constant 0 : index
    %c0_79 = arith.constant 0 : index
    %228 = vector.load %arg15[%c0_78, %c0_79] : memref<1x32xf32, #tpu.memory_space<vmem>>, vector<1x32xf32>
    %229 = vector.broadcast %228 : vector<1x32xf32> to vector<8x32xf32>
    %230 = arith.addf %227, %229 : vector<8x32xf32>
    %231 = arith.addf %142, %230 : vector<8x32xf32>
    %cst_80 = arith.constant dense<0.000000e+00> : vector<8xf32>
    %232 = vector.multi_reduction <add>, %231, %cst_80 [1] : vector<8x32xf32> to vector<8xf32>
    %233 = vector.shape_cast %232 : vector<8xf32> to vector<8x1xf32>
    %cst_81 = arith.constant 3.200000e+01 : f32
    %234 = vector.broadcast %cst_81 : f32 to vector<8x1xf32>
    %235 = arith.divf %233, %234 : vector<8x1xf32>
    %236 = vector.broadcast %235 : vector<8x1xf32> to vector<8x32xf32>
    %237 = arith.subf %231, %236 : vector<8x32xf32>
    %238 = arith.mulf %237, %237 : vector<8x32xf32>
    %cst_82 = arith.constant dense<0.000000e+00> : vector<8xf32>
    %239 = vector.multi_reduction <add>, %238, %cst_82 [1] : vector<8x32xf32> to vector<8xf32>
    %240 = vector.shape_cast %239 : vector<8xf32> to vector<8x1xf32>
    %cst_83 = arith.constant 3.200000e+01 : f32
    %241 = vector.broadcast %cst_83 : f32 to vector<8x1xf32>
    %242 = arith.divf %240, %241 : vector<8x1xf32>
    %243 = vector.broadcast %235 : vector<8x1xf32> to vector<8x32xf32>
    %244 = arith.subf %231, %243 : vector<8x32xf32>
    %cst_84 = arith.constant 9.99999974E-6 : f32
    %245 = vector.broadcast %cst_84 : f32 to vector<8x1xf32>
    %246 = arith.addf %242, %245 : vector<8x1xf32>
    %247 = math.rsqrt %246 : vector<8x1xf32>
    %248 = vector.broadcast %247 : vector<8x1xf32> to vector<8x32xf32>
    %249 = arith.mulf %244, %248 : vector<8x32xf32>
    %250 = arith.mulf %249, %5 : vector<8x32xf32>
    %251 = arith.addf %250, %8 : vector<8x32xf32>
    %252 = arith.truncf %251 : vector<8x32xf32> to vector<8x32xbf16>
    %c0_85 = arith.constant 0 : index
    %c0_86 = arith.constant 0 : index
    %253 = vector.load %arg16[%c0_85, %c0_86] : memref<32x64xbf16, #tpu.memory_space<vmem>>, vector<32x64xbf16>
    %cst_87 = arith.constant dense<0.000000e+00> : vector<8x64xf32>
    %254 = tpu.matmul %252, %253, %cst_87 {dimension_numbers = #tpu.dot_dimension_numbers<[1], [0], [0], [1], [0, 0, 1, 1], [], []>} : vector<8x32xbf16>, vector<32x64xbf16>, vector<8x64xf32> -> vector<8x64xf32>
    %c0_88 = arith.constant 0 : index
    %c0_89 = arith.constant 0 : index
    %255 = vector.load %arg17[%c0_88, %c0_89] : memref<1x64xf32, #tpu.memory_space<vmem>>, vector<1x64xf32>
    %256 = vector.broadcast %255 : vector<1x64xf32> to vector<8x64xf32>
    %257 = arith.addf %254, %256 : vector<8x64xf32>
    %cst_90 = arith.constant 0.000000e+00 : f32
    %258 = vector.broadcast %cst_90 : f32 to vector<8x64xf32>
    %259 = arith.maximumf %257, %258 : vector<8x64xf32>
    %260 = arith.mulf %259, %259 : vector<8x64xf32>
    %261 = arith.truncf %260 : vector<8x64xf32> to vector<8x64xbf16>
    %c0_91 = arith.constant 0 : index
    %c0_92 = arith.constant 0 : index
    %262 = vector.load %arg18[%c0_91, %c0_92] : memref<64x32xbf16, #tpu.memory_space<vmem>>, vector<64x32xbf16>
    %cst_93 = arith.constant dense<0.000000e+00> : vector<8x32xf32>
    %263 = tpu.matmul %261, %262, %cst_93 {dimension_numbers = #tpu.dot_dimension_numbers<[1], [0], [0], [1], [0, 0, 1, 1], [], []>} : vector<8x64xbf16>, vector<64x32xbf16>, vector<8x32xf32> -> vector<8x32xf32>
    %c0_94 = arith.constant 0 : index
    %c0_95 = arith.constant 0 : index
    %264 = vector.load %arg19[%c0_94, %c0_95] : memref<1x32xf32, #tpu.memory_space<vmem>>, vector<1x32xf32>
    %265 = vector.broadcast %264 : vector<1x32xf32> to vector<8x32xf32>
    %266 = arith.addf %263, %265 : vector<8x32xf32>
    %267 = arith.addf %251, %266 : vector<8x32xf32>
    %cst_96 = arith.constant dense<0.000000e+00> : vector<8xf32>
    %268 = vector.multi_reduction <add>, %267, %cst_96 [1] : vector<8x32xf32> to vector<8xf32>
    %269 = vector.shape_cast %268 : vector<8xf32> to vector<8x1xf32>
    %cst_97 = arith.constant 3.200000e+01 : f32
    %270 = vector.broadcast %cst_97 : f32 to vector<8x1xf32>
    %271 = arith.divf %269, %270 : vector<8x1xf32>
    %272 = vector.broadcast %271 : vector<8x1xf32> to vector<8x32xf32>
    %273 = arith.subf %267, %272 : vector<8x32xf32>
    %274 = arith.mulf %273, %273 : vector<8x32xf32>
    %cst_98 = arith.constant dense<0.000000e+00> : vector<8xf32>
    %275 = vector.multi_reduction <add>, %274, %cst_98 [1] : vector<8x32xf32> to vector<8xf32>
    %276 = vector.shape_cast %275 : vector<8xf32> to vector<8x1xf32>
    %cst_99 = arith.constant 3.200000e+01 : f32
    %277 = vector.broadcast %cst_99 : f32 to vector<8x1xf32>
    %278 = arith.divf %276, %277 : vector<8x1xf32>
    %279 = vector.broadcast %271 : vector<8x1xf32> to vector<8x32xf32>
    %280 = arith.subf %267, %279 : vector<8x32xf32>
    %cst_100 = arith.constant 9.99999974E-6 : f32
    %281 = vector.broadcast %cst_100 : f32 to vector<8x1xf32>
    %282 = arith.addf %278, %281 : vector<8x1xf32>
    %283 = math.rsqrt %282 : vector<8x1xf32>
    %284 = vector.broadcast %283 : vector<8x1xf32> to vector<8x32xf32>
    %285 = arith.mulf %280, %284 : vector<8x32xf32>
    %286 = arith.mulf %285, %5 : vector<8x32xf32>
    %287 = arith.addf %286, %8 : vector<8x32xf32>
    %c0_101 = arith.constant 0 : index
    %c0_102 = arith.constant 0 : index
    %c0_103 = arith.constant 0 : index
    %288 = vector.load %arg20[%c0_101, %c0_102, %c0_103] : memref<1x8x32xf32, #tpu.memory_space<vmem>>, vector<1x8x32xf32>
    %289 = vector.shape_cast %288 : vector<1x8x32xf32> to vector<8x32xf32>
    %290 = vector.shape_cast %287 : vector<8x32xf32> to vector<1x8x32xf32>
    tpu.vector_store %arg20[%c0_101, %c0_102, %c0_103], %290 {strides = array<i32>} : memref<1x8x32xf32, #tpu.memory_space<vmem>>, vector<1x8x32xf32>,
    return
  }
  func.func @transform_0(%arg0: i32, %arg1: i32) -> (i32, i32, i32) {
    %c0_i32 = arith.constant 0 : i32
    %c0_i32_0 = arith.constant 0 : i32
    %c0_i32_1 = arith.constant 0 : i32
    return %arg0, %c0_i32, %c0_i32_0 : i32, i32, i32
  }
  func.func @transform_1(%arg0: i32, %arg1: i32) -> (i32, i32, i32) {
    %c0_i32 = arith.constant 0 : i32
    %c0_i32_0 = arith.constant 0 : i32
    %c0_i32_1 = arith.constant 0 : i32
    return %arg0, %c0_i32, %c0_i32_0 : i32, i32, i32
  }
  func.func @transform_2(%arg0: i32, %arg1: i32) -> (i32, i32) {
    %c0_i32 = arith.constant 0 : i32
    %c0_i32_0 = arith.constant 0 : i32
    %c0_i32_1 = arith.constant 0 : i32
    return %c0_i32, %c0_i32_0 : i32, i32
  }
  func.func @transform_3(%arg0: i32, %arg1: i32) -> (i32, i32) {
    %c0_i32 = arith.constant 0 : i32
    %c0_i32_0 = arith.constant 0 : i32
    %c0_i32_1 = arith.constant 0 : i32
    return %c0_i32, %c0_i32_0 : i32, i32
  }
  func.func @transform_4(%arg0: i32, %arg1: i32) -> (i32, i32) {
    %c0_i32 = arith.constant 0 : i32
    %c0_i32_0 = arith.constant 0 : i32
    %c0_i32_1 = arith.constant 0 : i32
    return %c0_i32, %c0_i32_0 : i32, i32
  }
  func.func @transform_5(%arg0: i32, %arg1: i32) -> (i32, i32) {
    %c0_i32 = arith.constant 0 : i32
    %c0_i32_0 = arith.constant 0 : i32
    %c0_i32_1 = arith.constant 0 : i32
    return %c0_i32, %c0_i32_0 : i32, i32
  }
  func.func @transform_6(%arg0: i32, %arg1: i32) -> (i32, i32) {
    %c0_i32 = arith.constant 0 : i32
    %c0_i32_0 = arith.constant 0 : i32
    %c0_i32_1 = arith.constant 0 : i32
    return %c0_i32, %c0_i32_0 : i32, i32
  }
  func.func @transform_7(%arg0: i32, %arg1: i32) -> (i32, i32) {
    %c0_i32 = arith.constant 0 : i32
    %c0_i32_0 = arith.constant 0 : i32
    %c0_i32_1 = arith.constant 0 : i32
    return %c0_i32, %c0_i32_0 : i32, i32
  }
  func.func @transform_8(%arg0: i32, %arg1: i32) -> (i32, i32) {
    %c0_i32 = arith.constant 0 : i32
    %c0_i32_0 = arith.constant 0 : i32
    %c0_i32_1 = arith.constant 0 : i32
    return %c0_i32, %c0_i32_0 : i32, i32
  }
  func.func @transform_9(%arg0: i32, %arg1: i32) -> (i32, i32) {
    %c0_i32 = arith.constant 0 : i32
    %c0_i32_0 = arith.constant 0 : i32
    %c0_i32_1 = arith.constant 0 : i32
    return %c0_i32, %c0_i32_0 : i32, i32
  }
  func.func @transform_10(%arg0: i32, %arg1: i32) -> (i32, i32) {
    %c0_i32 = arith.constant 0 : i32
    %c0_i32_0 = arith.constant 0 : i32
    %c0_i32_1 = arith.constant 0 : i32
    return %c0_i32, %c0_i32_0 : i32, i32
  }
  func.func @transform_11(%arg0: i32, %arg1: i32) -> (i32, i32) {
    %c0_i32 = arith.constant 0 : i32
    %c0_i32_0 = arith.constant 0 : i32
    %c0_i32_1 = arith.constant 0 : i32
    return %c0_i32, %c0_i32_0 : i32, i32
  }
  func.func @transform_12(%arg0: i32, %arg1: i32) -> (i32, i32) {
    %c0_i32 = arith.constant 0 : i32
    %c0_i32_0 = arith.constant 0 : i32
    %c0_i32_1 = arith.constant 0 : i32
    return %c0_i32, %c0_i32_0 : i32, i32
  }
  func.func @transform_13(%arg0: i32, %arg1: i32) -> (i32, i32) {
    %c0_i32 = arith.constant 0 : i32
    %c0_i32_0 = arith.constant 0 : i32
    %c0_i32_1 = arith.constant 0 : i32
    return %c0_i32, %c0_i32_0 : i32, i32
  }
  func.func @transform_14(%arg0: i32, %arg1: i32) -> (i32, i32) {
    %c0_i32 = arith.constant 0 : i32
    %c0_i32_0 = arith.constant 0 : i32
    %c0_i32_1 = arith.constant 0 : i32
    return %c0_i32, %c0_i32_0 : i32, i32
  }
  func.func @transform_15(%arg0: i32, %arg1: i32) -> (i32, i32) {
    %c0_i32 = arith.constant 0 : i32
    %c0_i32_0 = arith.constant 0 : i32
    %c0_i32_1 = arith.constant 0 : i32
    return %c0_i32, %c0_i32_0 : i32, i32
  }
  func.func @transform_16(%arg0: i32, %arg1: i32) -> (i32, i32) {
    %c0_i32 = arith.constant 0 : i32
    %c0_i32_0 = arith.constant 0 : i32
    %c0_i32_1 = arith.constant 0 : i32
    return %c0_i32, %c0_i32_0 : i32, i32
  }
  func.func @transform_17(%arg0: i32, %arg1: i32) -> (i32, i32) {
    %c0_i32 = arith.constant 0 : i32
    %c0_i32_0 = arith.constant 0 : i32
    %c0_i32_1 = arith.constant 0 : i32
    return %c0_i32, %c0_i32_0 : i32, i32
  }
  func.func @transform_18(%arg0: i32, %arg1: i32) -> (i32, i32, i32) {
    %c0_i32 = arith.constant 0 : i32
    %c0_i32_0 = arith.constant 0 : i32
    %c0_i32_1 = arith.constant 0 : i32
    return %arg0, %c0_i32, %c0_i32_0 : i32, i32, i32
  }
}

</mosaic_0001>

<llo_original>
// kernel: tpu_custom_call.1
$region0: #{tpu_custom_call.1}
  #allocation0 [shape = 'u32[]', space=smem, size = 0x4, offset = 0x4, fixed_abs, tag = 'smem constant byte address 0x4 - core index']
  #allocation1 [shape = 'u32[144,128]{1,0:T(1,128)}', space=vmem, size = 0x12000, scoped, tag = 'internal scratch']
  #allocation2 [shape = 'bf16[12,32]{1,0:T(8,128)(2,1)}', space=vmem, size = 0x1000, scoped, tag = 'scratch operand']
  #allocation3 [shape = 'bf16[12,32]{1,0:T(8,128)(2,1)}', space=vmem, size = 0x1000, scoped, tag = 'scratch operand']
  %s0 = inlined_call_operand.vmem [shape: f32[2,8,32], index: 0, kind: input, shape index: {}]
  %s1 = inlined_call_operand.vmem [shape: f32[2,12,32], index: 1, kind: input, shape index: {}]
  %s2 = inlined_call_operand.vmem [shape: f32[1,32], index: 2, kind: input, shape index: {}]
  %s3 = inlined_call_operand.vmem [shape: f32[1,32], index: 3, kind: input, shape index: {}]
  %s4 = inlined_call_operand.vmem [shape: bf16[32,96], index: 4, kind: input, shape index: {}]
  %s5 = inlined_call_operand.hbm [shape: f32[1,96], index: 5, kind: input, shape index: {}]
  %s6 = inlined_call_operand.vmem [shape: bf16[32,32], index: 6, kind: input, shape index: {}]
  %s7 = inlined_call_operand.hbm [shape: f32[1,32], index: 7, kind: input, shape index: {}]
  %s8 = inlined_call_operand.vmem [shape: bf16[32,32], index: 8, kind: input, shape index: {}]
  %s9 = inlined_call_operand.vmem [shape: f32[1,32], index: 9, kind: input, shape index: {}]
  %s10 = inlined_call_operand.vmem [shape: bf16[32,64], index: 10, kind: input, shape index: {}]
  %s11 = inlined_call_operand.vmem [shape: f32[1,64], index: 11, kind: input, shape index: {}]
  %s12 = inlined_call_operand.vmem [shape: bf16[32,32], index: 12, kind: input, shape index: {}]
  %s13 = inlined_call_operand.vmem [shape: f32[1,32], index: 13, kind: input, shape index: {}]
  %s14 = inlined_call_operand.vmem [shape: bf16[32,64], index: 14, kind: input, shape index: {}]
  %s15 = inlined_call_operand.vmem [shape: f32[1,64], index: 15, kind: input, shape index: {}]
  %s16 = inlined_call_operand.vmem [shape: bf16[64,32], index: 16, kind: input, shape index: {}]
  %s17 = inlined_call_operand.vmem [shape: f32[1,32], index: 17, kind: input, shape index: {}]
  %s18 = inlined_call_operand.hbm [shape: f32[2,8,32], index: 18, kind: output, shape index: {}]
  %s19 = sld [smem:[#allocation0]]
  $region117: #{tpu_custom_call.1} parent=0
    _
  %s21 = ssub.s32 1, %s19
  %s22 = scalar_select 0, %s21, %s19
  $region1: #{tpu_custom_call.1} parent=0
    #allocation4 [shape = 'u8[512]{0}', space=vmem, size = 0x400, scoped, tag = 'input window, operand 5, single buffered']
    #allocation5 [shape = 's32[2]{0}', space=sflag, size = 0x8, scoped, tag = 'scoped memory for tpu_custom_call.1']
    #allocation6 [shape = 's32[2]{0}', space=sflag, size = 0x8, scoped, tag = 'scoped memory for tpu_custom_call.1']
    #allocation7 [shape = 'u8[512]{0}', space=vmem, size = 0x400, scoped, tag = 'input window, operand 7, single buffered']
    #allocation8 [shape = 's32[1]{0}', space=sflag, size = 0x4, scoped, tag = 'scoped memory for tpu_custom_call.1']
    #allocation9 [shape = 'u8[8192]{0}', space=vmem, size = 0x2000, scoped, tag = 'output window, operand 0']
    %23 = vsyncpa [#allocation5], 0
    %24 = vsyncpa [#allocation8], 0
    %25 = vsyncpa [#allocation6], 0
    %s26 = scalar_lea.sflag [#allocation6], 1
    %27 = vsyncpa %s26, 0
    loop: start=0, step=1, limit=6
    $region2: #{tpu_custom_call.1} parent=1 // loop_pre_header
      _
    $region3: #{tpu_custom_call.1} parent=1 // loop_header
      %s29 = sphi 0, %s33
      %p30 = scmp.ge.s32.totalorder %s29, 6
      %s36 = sphi 0, %s48
      %s37 = sphi 0, %s44
      %s38 = sphi 0, %s36
      %s39 = sphi 0, %s37
      %s40 = sphi 0, %s38
      %s41 = sphi 0, %s39
      %s51 = sphi 0, %s53
      %s54 = sphi 0, %s51
      %s55 = sphi 0, %s54
      %s71 = sphi 0, %s55
      %s77 = sphi 0, %s79
      %s80 = sphi 0, %s77
      %s81 = sphi 0, %s80
      %s97 = sphi 0, %s81
      %s101 = sphi 0, %s101
      %s103 = sphi 0, %s101
      %s104 = sphi 0, %s103
      %s118 = sphi 0, %s104
      %s122 = sphi 0, %s122
      %s124 = sphi 0, %s122
      %s125 = sphi 0, %s124
      %s139 = sphi 0, %s125
      %s143 = sphi 0, %s143
      %s145 = sphi 0, %s143
      %s146 = sphi 0, %s145
      %s160 = sphi 0, %s146
      %s164 = sphi 0, %s164
      %s166 = sphi 0, %s164
      %s167 = sphi 0, %s166
      %s181 = sphi 0, %s167
      %s185 = sphi 0, %s185
      %s187 = sphi 0, %s185
      %s188 = sphi 0, %s187
      %s202 = sphi 0, %s188
      %s206 = sphi 0, %s206
      %s208 = sphi 0, %s206
      %s209 = sphi 0, %s208
      %s223 = sphi 0, %s209
      %s227 = sphi 0, %s227
      %s229 = sphi 0, %s227
      %s230 = sphi 0, %s229
      %s244 = sphi 0, %s230
      %s248 = sphi 0, %s248
      %s250 = sphi 0, %s248
      %s251 = sphi 0, %s250
      %s265 = sphi 0, %s251
      %s269 = sphi 0, %s269
      %s271 = sphi 0, %s269
      %s272 = sphi 0, %s271
      %s286 = sphi 0, %s272
      %s290 = sphi 0, %s290
      %s292 = sphi 0, %s290
      %s293 = sphi 0, %s292
      %s307 = sphi 0, %s293
      %s311 = sphi 0, %s311
      %s313 = sphi 0, %s311
      %s314 = sphi 0, %s313
      %s328 = sphi 0, %s314
      %s332 = sphi 0, %s332
      %s334 = sphi 0, %s332
      %s335 = sphi 0, %s334
      %s349 = sphi 0, %s335
      %s353 = sphi 0, %s353
      %s355 = sphi 0, %s353
      %s356 = sphi 0, %s355
      %s370 = sphi 0, %s356
      %s374 = sphi 0, %s374
      %s376 = sphi 0, %s374
      %s377 = sphi 0, %s376
      %s391 = sphi 0, %s377
      %s395 = sphi 0, %s395
      %s397 = sphi 0, %s395
      %s398 = sphi 0, %s397
      %s412 = sphi 0, %s398
      %s416 = sphi 0, %s416
      %s418 = sphi 0, %s416
      %s419 = sphi 0, %s418
      %s433 = sphi 0, %s419
      %s439 = sphi 0, %s441
      %s442 = sphi 0, %s439
      %s443 = sphi 0, %s442
      %s459 = sphi 0, %s443
    $region4: #{tpu_custom_call.1} parent=1 // loop_header_branch
      %32 = sbr.rel (%p30) target = $region8
    $region5: #{tpu_custom_call.1} parent=1 // loop_body
      %s34 = ssub.s32 %s29, 1
      %s35 = ssub.s32 %s29, 2
      %s42 = sadd.s32 1, %s37
      %p43 = scmp.ge.s32.totalorder %s42, 2
      %s44 = scalar_select %p43, 0, %s42
      %s45 = sadd.s32 1, %s36
      %s46 = scalar_select %p43, %s45, %s36
      %p47 = scmp.ge.s32.totalorder %s46, 2
      %s48 = scalar_select %p47, 0, %s46
      %s49 = ssub.s32 %s36, %s48
      %p50 = scmp.eq.s32.totalorder %s49, 0
      %s52 = sadd.s32 %s51, 1
      %s53 = scalar_select %p50, %s51, %s52
      %p56 = pneg %p50
      %p57 = scmp.eq.s32.totalorder %s29, 3
      %p58 = por %p56, %p57
      %p59 = scmp.ne.s32.totalorder %s51, %s54
      %p60 = scmp.eq.s32.totalorder %s29, 0
      %p61 = por %p59, %p60
      %p62 = scmp.ne.s32.totalorder %s51, %s54
      %p63 = scmp.eq.s32.totalorder %s34, 3
      %p64 = por %p62, %p63
      %p65 = scmp.ne.s32.totalorder %s54, %s55
      %p66 = scmp.eq.s32.totalorder %s34, 0
      %p67 = por %p65, %p66
      %p68 = scmp.ne.s32.totalorder %s54, %s55
      %p69 = scmp.eq.s32.totalorder %s35, 3
      %p70 = por %p68, %p69
      %p72 = scmp.ne.s32.totalorder %s55, %s71
      %p73 = scmp.eq.s32.totalorder %s35, 0
      %p74 = por %p72, %p73
      %s75 = ssub.s32 %s36, %s48
      %p76 = scmp.eq.s32.totalorder %s75, 0
      %s78 = sadd.s32 %s77, 1
      %s79 = scalar_select %p76, %s77, %s78
      %p82 = pneg %p76
      %p83 = scmp.eq.s32.totalorder %s29, 3
      %p84 = por %p82, %p83
      %p85 = scmp.ne.s32.totalorder %s77, %s80
      %p86 = scmp.eq.s32.totalorder %s29, 0
      %p87 = por %p85, %p86
      %p88 = scmp.ne.s32.totalorder %s77, %s80
      %p89 = scmp.eq.s32.totalorder %s34, 3
      %p90 = por %p88, %p89
      %p91 = scmp.ne.s32.totalorder %s80, %s81
      %p92 = scmp.eq.s32.totalorder %s34, 0
      %p93 = por %p91, %p92
      %p94 = scmp.ne.s32.totalorder %s80, %s81
      %p95 = scmp.eq.s32.totalorder %s35, 3
      %p96 = por %p94, %p95
      %p98 = scmp.ne.s32.totalorder %s81, %s97
      %p99 = scmp.eq.s32.totalorder %s35, 0
      %p100 = por %p98, %p99
      %s102 = sadd.s32 %s101, 1
      %p105 = scmp.eq.s32.totalorder %s29, 3
      %p106 = scmp.ne.s32.totalorder %s101, %s103
      %p107 = scmp.eq.s32.totalorder %s29, 0
      %p108 = por %p106, %p107
      %p109 = scmp.ne.s32.totalorder %s101, %s103
      %p110 = scmp.eq.s32.totalorder %s34, 3
      %p111 = por %p109, %p110
      %p112 = scmp.ne.s32.totalorder %s103, %s104
      %p113 = scmp.eq.s32.totalorder %s34, 0
      %p114 = por %p112, %p113
      %p115 = scmp.ne.s32.totalorder %s103, %s104
      %p116 = scmp.eq.s32.totalorder %s35, 3
      %p117 = por %p115, %p116
      %p119 = scmp.ne.s32.totalorder %s104, %s118
      %p120 = scmp.eq.s32.totalorder %s35, 0
      %p121 = por %p119, %p120
      %s123 = sadd.s32 %s122, 1
      %p126 = scmp.eq.s32.totalorder %s29, 3
      %p127 = scmp.ne.s32.totalorder %s122, %s124
      %p128 = scmp.eq.s32.totalorder %s29, 0
      %p129 = por %p127, %p128
      %p130 = scmp.ne.s32.totalorder %s122, %s124
      %p131 = scmp.eq.s32.totalorder %s34, 3
      %p132 = por %p130, %p131
      %p133 = scmp.ne.s32.totalorder %s124, %s125
      %p134 = scmp.eq.s32.totalorder %s34, 0
      %p135 = por %p133, %p134
      %p136 = scmp.ne.s32.totalorder %s124, %s125
      %p137 = scmp.eq.s32.totalorder %s35, 3
      %p138 = por %p136, %p137
      %p140 = scmp.ne.s32.totalorder %s125, %s139
      %p141 = scmp.eq.s32.totalorder %s35, 0
      %p142 = por %p140, %p141
      %s144 = sadd.s32 %s143, 1
      %p147 = scmp.eq.s32.totalorder %s29, 3
      %p148 = scmp.ne.s32.totalorder %s143, %s145
      %p149 = scmp.eq.s32.totalorder %s29, 0
      %p150 = por %p148, %p149
      %p151 = scmp.ne.s32.totalorder %s143, %s145
      %p152 = scmp.eq.s32.totalorder %s34, 3
      %p153 = por %p151, %p152
      %p154 = scmp.ne.s32.totalorder %s145, %s146
      %p155 = scmp.eq.s32.totalorder %s34, 0
      %p156 = por %p154, %p155
      %p157 = scmp.ne.s32.totalorder %s145, %s146
      %p158 = scmp.eq.s32.totalorder %s35, 3
      %p159 = por %p157, %p158
      %p161 = scmp.ne.s32.totalorder %s146, %s160
      %p162 = scmp.eq.s32.totalorder %s35, 0
      %p163 = por %p161, %p162
      %s165 = sadd.s32 %s164, 1
      %p168 = scmp.eq.s32.totalorder %s29, 3
      %p169 = scmp.ne.s32.totalorder %s164, %s166
      %p170 = scmp.eq.s32.totalorder %s29, 0
      %p171 = por %p169, %p170
      %p172 = scmp.ne.s32.totalorder %s164, %s166
      %p173 = scmp.eq.s32.totalorder %s34, 3
      %p174 = por %p172, %p173
      %p175 = scmp.ne.s32.totalorder %s166, %s167
      %p176 = scmp.eq.s32.totalorder %s34, 0
      %p177 = por %p175, %p176
      %p178 = scmp.ne.s32.totalorder %s166, %s167
      %p179 = scmp.eq.s32.totalorder %s35, 3
      %p180 = por %p178, %p179
      %p182 = scmp.ne.s32.totalorder %s167, %s181
      %p183 = scmp.eq.s32.totalorder %s35, 0
      %p184 = por %p182, %p183
      %s186 = sadd.s32 %s185, 1
      %p189 = scmp.eq.s32.totalorder %s29, 3
      %p190 = scmp.ne.s32.totalorder %s185, %s187
      %p191 = scmp.eq.s32.totalorder %s29, 0
      %p192 = por %p190, %p191
      %p193 = scmp.ne.s32.totalorder %s185, %s187
      %p194 = scmp.eq.s32.totalorder %s34, 3
      %p195 = por %p193, %p194
      %p196 = scmp.ne.s32.totalorder %s187, %s188
      %p197 = scmp.eq.s32.totalorder %s34, 0
      %p198 = por %p196, %p197
      %p199 = scmp.ne.s32.totalorder %s187, %s188
      %p200 = scmp.eq.s32.totalorder %s35, 3
      %p201 = por %p199, %p200
      %p203 = scmp.ne.s32.totalorder %s188, %s202
      %p204 = scmp.eq.s32.totalorder %s35, 0
      %p205 = por %p203, %p204
      %s207 = sadd.s32 %s206, 1
      %p210 = scmp.eq.s32.totalorder %s29, 3
      %p211 = scmp.ne.s32.totalorder %s206, %s208
      %p212 = scmp.eq.s32.totalorder %s29, 0
      %p213 = por %p211, %p212
      %p214 = scmp.ne.s32.totalorder %s206, %s208
      %p215 = scmp.eq.s32.totalorder %s34, 3
      %p216 = por %p214, %p215
      %p217 = scmp.ne.s32.totalorder %s208, %s209
      %p218 = scmp.eq.s32.totalorder %s34, 0
      %p219 = por %p217, %p218
      %p220 = scmp.ne.s32.totalorder %s208, %s209
      %p221 = scmp.eq.s32.totalorder %s35, 3
      %p222 = por %p220, %p221
      %p224 = scmp.ne.s32.totalorder %s209, %s223
      %p225 = scmp.eq.s32.totalorder %s35, 0
      %p226 = por %p224, %p225
      %s228 = sadd.s32 %s227, 1
      %p231 = scmp.eq.s32.totalorder %s29, 3
      %p232 = scmp.ne.s32.totalorder %s227, %s229
      %p233 = scmp.eq.s32.totalorder %s29, 0
      %p234 = por %p232, %p233
      %p235 = scmp.ne.s32.totalorder %s227, %s229
      %p236 = scmp.eq.s32.totalorder %s34, 3
      %p237 = por %p235, %p236
      %p238 = scmp.ne.s32.totalorder %s229, %s230
      %p239 = scmp.eq.s32.totalorder %s34, 0
      %p240 = por %p238, %p239
      %p241 = scmp.ne.s32.totalorder %s229, %s230
      %p242 = scmp.eq.s32.totalorder %s35, 3
      %p243 = por %p241, %p242
      %p245 = scmp.ne.s32.totalorder %s230, %s244
      %p246 = scmp.eq.s32.totalorder %s35, 0
      %p247 = por %p245, %p246
      %s249 = sadd.s32 %s248, 1
      %p252 = scmp.eq.s32.totalorder %s29, 3
      %p253 = scmp.ne.s32.totalorder %s248, %s250
      %p254 = scmp.eq.s32.totalorder %s29, 0
      %p255 = por %p253, %p254
      %p256 = scmp.ne.s32.totalorder %s248, %s250
      %p257 = scmp.eq.s32.totalorder %s34, 3
      %p258 = por %p256, %p257
      %p259 = scmp.ne.s32.totalorder %s250, %s251
      %p260 = scmp.eq.s32.totalorder %s34, 0
      %p261 = por %p259, %p260
      %p262 = scmp.ne.s32.totalorder %s250, %s251
      %p263 = scmp.eq.s32.totalorder %s35, 3
      %p264 = por %p262, %p263
      %p266 = scmp.ne.s32.totalorder %s251, %s265
      %p267 = scmp.eq.s32.totalorder %s35, 0
      %p268 = por %p266, %p267
      %s270 = sadd.s32 %s269, 1
      %p273 = scmp.eq.s32.totalorder %s29, 3
      %p274 = scmp.ne.s32.totalorder %s269, %s271
      %p275 = scmp.eq.s32.totalorder %s29, 0
      %p276 = por %p274, %p275
      %p277 = scmp.ne.s32.totalorder %s269, %s271
      %p278 = scmp.eq.s32.totalorder %s34, 3
      %p279 = por %p277, %p278
      %p280 = scmp.ne.s32.totalorder %s271, %s272
      %p281 = scmp.eq.s32.totalorder %s34, 0
      %p282 = por %p280, %p281
      %p283 = scmp.ne.s32.totalorder %s271, %s272
      %p284 = scmp.eq.s32.totalorder %s35, 3
      %p285 = por %p283, %p284
      %p287 = scmp.ne.s32.totalorder %s272, %s286
      %p288 = scmp.eq.s32.totalorder %s35, 0
      %p289 = por %p287, %p288
      %s291 = sadd.s32 %s290, 1
      %p294 = scmp.eq.s32.totalorder %s29, 3
      %p295 = scmp.ne.s32.totalorder %s290, %s292
      %p296 = scmp.eq.s32.totalorder %s29, 0
      %p297 = por %p295, %p296
      %p298 = scmp.ne.s32.totalorder %s290, %s292
      %p299 = scmp.eq.s32.totalorder %s34, 3
      %p300 = por %p298, %p299
      %p301 = scmp.ne.s32.totalorder %s292, %s293
      %p302 = scmp.eq.s32.totalorder %s34, 0
      %p303 = por %p301, %p302
      %p304 = scmp.ne.s32.totalorder %s292, %s293
      %p305 = scmp.eq.s32.totalorder %s35, 3
      %p306 = por %p304, %p305
      %p308 = scmp.ne.s32.totalorder %s293, %s307
      %p309 = scmp.eq.s32.totalorder %s35, 0
      %p310 = por %p308, %p309
      %s312 = sadd.s32 %s311, 1
      %p315 = scmp.eq.s32.totalorder %s29, 3
      %p316 = scmp.ne.s32.totalorder %s311, %s313
      %p317 = scmp.eq.s32.totalorder %s29, 0
      %p318 = por %p316, %p317
      %p319 = scmp.ne.s32.totalorder %s311, %s313
      %p320 = scmp.eq.s32.totalorder %s34, 3
      %p321 = por %p319, %p320
      %p322 = scmp.ne.s32.totalorder %s313, %s314
      %p323 = scmp.eq.s32.totalorder %s34, 0
      %p324 = por %p322, %p323
      %p325 = scmp.ne.s32.totalorder %s313, %s314
      %p326 = scmp.eq.s32.totalorder %s35, 3
      %p327 = por %p325, %p326
      %p329 = scmp.ne.s32.totalorder %s314, %s328
      %p330 = scmp.eq.s32.totalorder %s35, 0
      %p331 = por %p329, %p330
      %s333 = sadd.s32 %s332, 1
      %p336 = scmp.eq.s32.totalorder %s29, 3
      %p337 = scmp.ne.s32.totalorder %s332, %s334
      %p338 = scmp.eq.s32.totalorder %s29, 0
      %p339 = por %p337, %p338
      %p340 = scmp.ne.s32.totalorder %s332, %s334
      %p341 = scmp.eq.s32.totalorder %s34, 3
      %p342 = por %p340, %p341
      %p343 = scmp.ne.s32.totalorder %s334, %s335
      %p344 = scmp.eq.s32.totalorder %s34, 0
      %p345 = por %p343, %p344
      %p346 = scmp.ne.s32.totalorder %s334, %s335
      %p347 = scmp.eq.s32.totalorder %s35, 3
      %p348 = por %p346, %p347
      %p350 = scmp.ne.s32.totalorder %s335, %s349
      %p351 = scmp.eq.s32.totalorder %s35, 0
      %p352 = por %p350, %p351
      %s354 = sadd.s32 %s353, 1
      %p357 = scmp.eq.s32.totalorder %s29, 3
      %p358 = scmp.ne.s32.totalorder %s353, %s355
      %p359 = scmp.eq.s32.totalorder %s29, 0
      %p360 = por %p358, %p359
      %p361 = scmp.ne.s32.totalorder %s353, %s355
      %p362 = scmp.eq.s32.totalorder %s34, 3
      %p363 = por %p361, %p362
      %p364 = scmp.ne.s32.totalorder %s355, %s356
      %p365 = scmp.eq.s32.totalorder %s34, 0
      %p366 = por %p364, %p365
      %p367 = scmp.ne.s32.totalorder %s355, %s356
      %p368 = scmp.eq.s32.totalorder %s35, 3
      %p369 = por %p367, %p368
      %p371 = scmp.ne.s32.totalorder %s356, %s370
      %p372 = scmp.eq.s32.totalorder %s35, 0
      %p373 = por %p371, %p372
      %s375 = sadd.s32 %s374, 1
      %p378 = scmp.eq.s32.totalorder %s29, 3
      %p379 = scmp.ne.s32.totalorder %s374, %s376
      %p380 = scmp.eq.s32.totalorder %s29, 0
      %p381 = por %p379, %p380
      %p382 = scmp.ne.s32.totalorder %s374, %s376
      %p383 = scmp.eq.s32.totalorder %s34, 3
      %p384 = por %p382, %p383
      %p385 = scmp.ne.s32.totalorder %s376, %s377
      %p386 = scmp.eq.s32.totalorder %s34, 0
      %p387 = por %p385, %p386
      %p388 = scmp.ne.s32.totalorder %s376, %s377
      %p389 = scmp.eq.s32.totalorder %s35, 3
      %p390 = por %p388, %p389
      %p392 = scmp.ne.s32.totalorder %s377, %s391
      %p393 = scmp.eq.s32.totalorder %s35, 0
      %p394 = por %p392, %p393
      %s396 = sadd.s32 %s395, 1
      %p399 = scmp.eq.s32.totalorder %s29, 3
      %p400 = scmp.ne.s32.totalorder %s395, %s397
      %p401 = scmp.eq.s32.totalorder %s29, 0
      %p402 = por %p400, %p401
      %p403 = scmp.ne.s32.totalorder %s395, %s397
      %p404 = scmp.eq.s32.totalorder %s34, 3
      %p405 = por %p403, %p404
      %p406 = scmp.ne.s32.totalorder %s397, %s398
      %p407 = scmp.eq.s32.totalorder %s34, 0
      %p408 = por %p406, %p407
      %p409 = scmp.ne.s32.totalorder %s397, %s398
      %p410 = scmp.eq.s32.totalorder %s35, 3
      %p411 = por %p409, %p410
      %p413 = scmp.ne.s32.totalorder %s398, %s412
      %p414 = scmp.eq.s32.totalorder %s35, 0
      %p415 = por %p413, %p414
      %s417 = sadd.s32 %s416, 1
      %p420 = scmp.eq.s32.totalorder %s29, 3
      %p421 = scmp.ne.s32.totalorder %s416, %s418
      %p422 = scmp.eq.s32.totalorder %s29, 0
      %p423 = por %p421, %p422
      %p424 = scmp.ne.s32.totalorder %s416, %s418
      %p425 = scmp.eq.s32.totalorder %s34, 3
      %p426 = por %p424, %p425
      %p427 = scmp.ne.s32.totalorder %s418, %s419
      %p428 = scmp.eq.s32.totalorder %s34, 0
      %p429 = por %p427, %p428
      %p430 = scmp.ne.s32.totalorder %s418, %s419
      %p431 = scmp.eq.s32.totalorder %s35, 3
      %p432 = por %p430, %p431
      %p434 = scmp.ne.s32.totalorder %s419, %s433
      %p435 = scmp.eq.s32.totalorder %s35, 0
      %p436 = por %p434, %p435
      %s437 = ssub.s32 %s36, %s48
      %p438 = scmp.eq.s32.totalorder %s437, 0
      %s440 = sadd.s32 %s439, 1
      %s441 = scalar_select %p438, %s439, %s440
      %p444 = pneg %p438
      %p445 = scmp.eq.s32.totalorder %s29, 3
      %p446 = por %p444, %p445
      %p447 = scmp.ne.s32.totalorder %s439, %s442
      %p448 = scmp.eq.s32.totalorder %s29, 0
      %p449 = por %p447, %p448
      %p450 = scmp.ne.s32.totalorder %s439, %s442
      %p451 = scmp.eq.s32.totalorder %s34, 3
      %p452 = por %p450, %p451
      %p453 = scmp.ne.s32.totalorder %s442, %s443
      %p454 = scmp.eq.s32.totalorder %s34, 0
      %p455 = por %p453, %p454
      %p456 = scmp.ne.s32.totalorder %s442, %s443
      %p457 = scmp.eq.s32.totalorder %s35, 3
      %p458 = por %p456, %p457
      %p460 = scmp.ne.s32.totalorder %s443, %s459
      %p461 = scmp.eq.s32.totalorder %s35, 0
      %p462 = por %p460, %p461
      %p463 = scmp.le.s32.totalorder 1, %s29
      %p464 = scmp.lt.s32.totalorder %s29, 5
      %p465 = pnand %p463, %p464
      %p466 = pneg %p465
      // Predicated region
      $region9: #{tpu_custom_call.1} parent=5 // pred_check
        _
      $region10: #{tpu_custom_call.1} parent=5 // pred_check_branch
        %468 = sbr.rel (%p465) target = $region12
      $region11: #{tpu_custom_call.1} parent=5 // pred_region
        %s469 = ssub.s32 %s29, 1
        // Predicated region
        $region13: #{tpu_custom_call.1} parent=11 // pred_check
          %p470 = pneg %p114
        $region14: #{tpu_custom_call.1} parent=11 // pred_check_branch
          %472 = sbr.rel (%p470) target = $region16
        $region15: #{tpu_custom_call.1} parent=11 // pred_region
          _
        $region16: #{tpu_custom_call.1} parent=11 // pred_fallthru
          _
        // Predicated region
        $region17: #{tpu_custom_call.1} parent=11 // pred_check
          %p473 = pneg %p135
        $region18: #{tpu_custom_call.1} parent=11 // pred_check_branch
          %475 = sbr.rel (%p473) target = $region20
        $region19: #{tpu_custom_call.1} parent=11 // pred_region
          _
        $region20: #{tpu_custom_call.1} parent=11 // pred_fallthru
          _
        // Predicated region
        $region21: #{tpu_custom_call.1} parent=11 // pred_check
          %p476 = pneg %p156
        $region22: #{tpu_custom_call.1} parent=11 // pred_check_branch
          %478 = sbr.rel (%p476) target = $region24
        $region23: #{tpu_custom_call.1} parent=11 // pred_region
          _
        $region24: #{tpu_custom_call.1} parent=11 // pred_fallthru
          _
        // Predicated region
        $region25: #{tpu_custom_call.1} parent=11 // pred_check
          %p479 = pneg %p177
        $region26: #{tpu_custom_call.1} parent=11 // pred_check_branch
          %481 = sbr.rel (%p479) target = $region28
        $region27: #{tpu_custom_call.1} parent=11 // pred_region
          %s483 = ssub.s32 16, 16
          %484 = vsyncadd [#allocation5], %s483
          %s486 = sshll.u32 [#allocation4], 4
          %s487 = int_to_ptr.vmem [resolvable:$true] %s486
          %489 = dma.hbm_to_vmem [thread:$0]  %s5, 16, %s487, [#allocation5]
        $region28: #{tpu_custom_call.1} parent=11 // pred_fallthru
          _
        // Predicated region
        $region29: #{tpu_custom_call.1} parent=11 // pred_check
          %p490 = pneg %p198
        $region30: #{tpu_custom_call.1} parent=11 // pred_check_branch
          %492 = sbr.rel (%p490) target = $region32
        $region31: #{tpu_custom_call.1} parent=11 // pred_region
          _
        $region32: #{tpu_custom_call.1} parent=11 // pred_fallthru
          _
        // Predicated region
        $region33: #{tpu_custom_call.1} parent=11 // pred_check
          %p493 = pneg %p219
        $region34: #{tpu_custom_call.1} parent=11 // pred_check_branch
          %495 = sbr.rel (%p493) target = $region36
        $region35: #{tpu_custom_call.1} parent=11 // pred_region
          %s497 = ssub.s32 16, 16
          %498 = vsyncadd [#allocation8], %s497
          %s500 = sshll.u32 [#allocation7], 4
          %s501 = int_to_ptr.vmem [resolvable:$true] %s500
          %503 = dma.hbm_to_vmem [thread:$0]  %s7, 16, %s501, [#allocation8]
        $region36: #{tpu_custom_call.1} parent=11 // pred_fallthru
          _
        // Predicated region
        $region37: #{tpu_custom_call.1} parent=11 // pred_check
          %p504 = pneg %p240
        $region38: #{tpu_custom_call.1} parent=11 // pred_check_branch
          %506 = sbr.rel (%p504) target = $region40
        $region39: #{tpu_custom_call.1} parent=11 // pred_region
          _
        $region40: #{tpu_custom_call.1} parent=11 // pred_fallthru
          _
        // Predicated region
        $region41: #{tpu_custom_call.1} parent=11 // pred_check
          %p507 = pneg %p261
        $region42: #{tpu_custom_call.1} parent=11 // pred_check_branch
          %509 = sbr.rel (%p507) target = $region44
        $region43: #{tpu_custom_call.1} parent=11 // pred_region
          _
        $region44: #{tpu_custom_call.1} parent=11 // pred_fallthru
          _
        // Predicated region
        $region45: #{tpu_custom_call.1} parent=11 // pred_check
          %p510 = pneg %p282
        $region46: #{tpu_custom_call.1} parent=11 // pred_check_branch
          %512 = sbr.rel (%p510) target = $region48
        $region47: #{tpu_custom_call.1} parent=11 // pred_region
          _
        $region48: #{tpu_custom_call.1} parent=11 // pred_fallthru
          _
        // Predicated region
        $region49: #{tpu_custom_call.1} parent=11 // pred_check
          %p513 = pneg %p303
        $region50: #{tpu_custom_call.1} parent=11 // pred_check_branch
          %515 = sbr.rel (%p513) target = $region52
        $region51: #{tpu_custom_call.1} parent=11 // pred_region
          _
        $region52: #{tpu_custom_call.1} parent=11 // pred_fallthru
          _
        // Predicated region
        $region53: #{tpu_custom_call.1} parent=11 // pred_check
          %p516 = pneg %p324
        $region54: #{tpu_custom_call.1} parent=11 // pred_check_branch
          %518 = sbr.rel (%p516) target = $region56
        $region55: #{tpu_custom_call.1} parent=11 // pred_region
          _
        $region56: #{tpu_custom_call.1} parent=11 // pred_fallthru
          _
        // Predicated region
        $region57: #{tpu_custom_call.1} parent=11 // pred_check
          %p519 = pneg %p345
        $region58: #{tpu_custom_call.1} parent=11 // pred_check_branch
          %521 = sbr.rel (%p519) target = $region60
        $region59: #{tpu_custom_call.1} parent=11 // pred_region
          _
        $region60: #{tpu_custom_call.1} parent=11 // pred_fallthru
          _
        // Predicated region
        $region61: #{tpu_custom_call.1} parent=11 // pred_check
          %p522 = pneg %p366
        $region62: #{tpu_custom_call.1} parent=11 // pred_check_branch
          %524 = sbr.rel (%p522) target = $region64
        $region63: #{tpu_custom_call.1} parent=11 // pred_region
          _
        $region64: #{tpu_custom_call.1} parent=11 // pred_fallthru
          _
        // Predicated region
        $region65: #{tpu_custom_call.1} parent=11 // pred_check
          %p525 = pneg %p387
        $region66: #{tpu_custom_call.1} parent=11 // pred_check_branch
          %527 = sbr.rel (%p525) target = $region68
        $region67: #{tpu_custom_call.1} parent=11 // pred_region
          _
        $region68: #{tpu_custom_call.1} parent=11 // pred_fallthru
          _
        // Predicated region
        $region69: #{tpu_custom_call.1} parent=11 // pred_check
          %p528 = pneg %p408
        $region70: #{tpu_custom_call.1} parent=11 // pred_check_branch
          %530 = sbr.rel (%p528) target = $region72
        $region71: #{tpu_custom_call.1} parent=11 // pred_region
          _
        $region72: #{tpu_custom_call.1} parent=11 // pred_fallthru
          _
        // Predicated region
        $region73: #{tpu_custom_call.1} parent=11 // pred_check
          %p531 = pneg %p429
        $region74: #{tpu_custom_call.1} parent=11 // pred_check_branch
          %533 = sbr.rel (%p531) target = $region76
        $region75: #{tpu_custom_call.1} parent=11 // pred_region
          _
        $region76: #{tpu_custom_call.1} parent=11 // pred_fallthru
          _
      $region12: #{tpu_custom_call.1} parent=5 // pred_fallthru
        _
      %p534 = scmp.lt.s32.totalorder %s29, 4
      // Predicated region
      $region77: #{tpu_custom_call.1} parent=5 // pred_check
        %p535 = pneg %p534
      $region78: #{tpu_custom_call.1} parent=5 // pred_check_branch
        %537 = sbr.rel (%p535) target = $region80
      $region79: #{tpu_custom_call.1} parent=5 // pred_region
        // Predicated region
        $region81: #{tpu_custom_call.1} parent=79 // pred_check
          %p538 = pneg %p61
        $region82: #{tpu_custom_call.1} parent=79 // pred_check_branch
          %540 = sbr.rel (%p538) target = $region84
        $region83: #{tpu_custom_call.1} parent=79 // pred_region
          %p541 = scmp.lt.s32.totalorder %s36, 1
          %s542 = scalar_select %p541, %s36, 1
          %s543 = smul.addr %s542, 8
          %s544 = scalar_lea.vmem %s0, %s543
        $region84: #{tpu_custom_call.1} parent=79 // pred_fallthru
          _
        // Predicated region
        $region85: #{tpu_custom_call.1} parent=79 // pred_check
          %p545 = pneg %p87
        $region86: #{tpu_custom_call.1} parent=79 // pred_check_branch
          %547 = sbr.rel (%p545) target = $region88
        $region87: #{tpu_custom_call.1} parent=79 // pred_region
          %p548 = scmp.lt.s32.totalorder %s36, 1
          %s549 = scalar_select %p548, %s36, 1
          %s550 = smul.addr %s549, 2
          %s551 = smul.addr %s550, 8
          %s552 = scalar_lea.vmem %s1, %s551
        $region88: #{tpu_custom_call.1} parent=79 // pred_fallthru
          _
      $region80: #{tpu_custom_call.1} parent=5 // pred_fallthru
        _
      %p553 = scmp.le.s32.totalorder 1, %s29
      %p554 = scmp.lt.s32.totalorder %s29, 5
      %p555 = pnand %p553, %p554
      %p556 = pneg %p555
      // Predicated region
      $region89: #{tpu_custom_call.1} parent=5 // pred_check
        _
      $region90: #{tpu_custom_call.1} parent=5 // pred_check_branch
        %558 = sbr.rel (%p555) target = $region92
      $region91: #{tpu_custom_call.1} parent=5 // pred_region
        %s559 = ssub.s32 %s29, 1
        // Predicated region
        $region93: #{tpu_custom_call.1} parent=91 // pred_check
          %p560 = pneg %p177
        $region94: #{tpu_custom_call.1} parent=91 // pred_check_branch
          %562 = sbr.rel (%p560) target = $region96
        $region95: #{tpu_custom_call.1} parent=91 // pred_region
          %563 = dma.done [#allocation5], 16
        $region96: #{tpu_custom_call.1} parent=91 // pred_fallthru
          _
        // Predicated region
        $region97: #{tpu_custom_call.1} parent=91 // pred_check
          %p564 = pneg %p219
        $region98: #{tpu_custom_call.1} parent=91 // pred_check_branch
          %566 = sbr.rel (%p564) target = $region100
        $region99: #{tpu_custom_call.1} parent=91 // pred_region
          %567 = dma.done [#allocation8], 16
        $region100: #{tpu_custom_call.1} parent=91 // pred_fallthru
          _
        %p568 = scmp.lt.s32.totalorder %s38, 1
        %s569 = scalar_select %p568, %s38, 1
        %s570 = smul.addr %s569, 8
        %s571 = scalar_lea.vmem %s0, %s570
        %p572 = pneg %p67
        %p573 = pneg %p64
        %p574 = scmp.lt.s32.totalorder %s38, 1
        %s575 = scalar_select %p574, %s38, 1
        %s576 = smul.addr %s575, 2
        %s577 = smul.addr %s576, 8
        %s578 = scalar_lea.vmem %s1, %s577
        %p579 = pneg %p93
        %p580 = pneg %p90
        %p581 = pneg %p114
        %p582 = pneg %p111
        %p583 = pneg %p135
        %p584 = pneg %p132
        %p585 = pneg %p156
        %p586 = pneg %p153
        %p587 = pneg %p177
        %p588 = pneg %p174
        %p589 = pneg %p198
        %p590 = pneg %p195
        %p591 = pneg %p219
        %p592 = pneg %p216
        %p593 = pneg %p240
        %p594 = pneg %p237
        %p595 = pneg %p261
        %p596 = pneg %p258
        %p597 = pneg %p282
        %p598 = pneg %p279
        %p599 = pneg %p303
        %p600 = pneg %p300
        %p601 = pneg %p324
        %p602 = pneg %p321
        %p603 = pneg %p345
        %p604 = pneg %p342
        %p605 = pneg %p366
        %p606 = pneg %p363
        %p607 = pneg %p387
        %p608 = pneg %p384
        %p609 = pneg %p408
        %p610 = pneg %p405
        %p611 = pneg %p429
        %p612 = pneg %p426
        %p613 = pneg %p455
        %p614 = pneg %p452
        %s615 = sand.u32 %s442, 1
        %s616 = scalar_lea.sflag [#allocation6], %s615
        %s617 = sand.u32 %s442, 1
        %s618 = smul.addr %s617, 8
        %s619 = scalar_lea.vmem [#allocation9], %s618
        %p620 = scmp.lt.s32.totalorder %s38, 1
        %s621 = scalar_select %p620, %s38, 1
        %s622 = smul.addr %s621, 8
        %s623 = scalar_lea.vmem %s0, %s622
        %p624 = scmp.lt.s32.totalorder %s38, 1
        %s625 = scalar_select %p624, %s38, 1
        %s626 = smul.addr %s625, 2
        %s627 = smul.addr %s626, 8
        %s628 = scalar_lea.vmem %s1, %s627
        %p630 = scmp.eq.s32.totalorder %s39, 0
        // Predicated region
        $region101: #{tpu_custom_call.1} parent=91 // pred_check
          %p631 = pneg %p630
        $region102: #{tpu_custom_call.1} parent=91 // pred_check_branch
          %633 = sbr.rel (%p631) target = $region104
        $region103: #{tpu_custom_call.1} parent=91 // pred_region
          %v634 = vld [vmem:[%s623] sm:$0xff]
          %vm635 = vcmask 261120
          %636 = vst.msk [vmem:[%s619] sm:$0xff] %vm635, %v634
          %v637 = vld [vmem:[%s628] sm:$0xff]
          %v638 = vld [vmem:[%s628 + $0x8] sm:$0xf]
          %v639 = vpack.c.bf16 %v638, %v637
          %v640 = vld [vmem:[%s10] sm:$0xf]
          %v641 = vld [vmem:[%s10 + $0x4] sm:$0xf]
          %v642 = vld [vmem:[%s10 + $0x8] sm:$0xf]
          %v643 = vld [vmem:[%s10 + $0xc] sm:$0xf]
          %v644 = vld [vmem:[%s11] sm:$0x1]
          %v646 = vlaneseq
          %v647 = vshrl.u32 %v646, 7
          %v648 = vsub.s32 0, %v647
          %v649 = vrot.slane %v644, %v648
          %v655 = vunpack.c.l.b16 %v640
          %v656 = vunpack.c.l.b16 %v641
          %v657 = vunpack.c.l.b16 %v642
          %v658 = vunpack.c.l.b16 %v643
          %v659 = vpack.c.b16 %v656, %v655
          %v660 = vpack.c.b16 %v658, %v657
          %v664 = vsel %vm635, %v639, 0
          %666 = vmatprep.subr.bf16.mxu0 0
          %667 = vmatpush1.bf16.msra.mxu0 %v659
          %668 = vmatprep.subr.bf16.mxu0 0
          %669 = vmatpush1.bf16.msra.mxu0 %v660
          %670 = vmatprep.subr.bf16.mxu0 0
          %671 = vmatpush1.bf16.msra.mxu0 0
          %672 = vmatprep.subr.bf16.mxu0 0
          %673 = vmatpush1.bf16.msra.mxu0 0
          %674 = vmatprep.subr.bf16.mxu0 0
          %675 = vmatpush1.bf16.msra.mxu0 0
          %676 = vmatprep.subr.bf16.mxu0 0
          %677 = vmatpush1.bf16.msra.mxu0 0
          %678 = vmatprep.subr.bf16.mxu0 0
          %679 = vmatpush1.bf16.msra.mxu0 0
          %680 = vmatprep.subr.bf16.mxu0 0
          %681 = vmatpush1.bf16.msra.mxu0 0
          %682 = vmatprep.subr.bf16.mxu0 0
          %683 = vmatpush1.bf16.msra.mxu0 0
          %684 = vmatprep.subr.bf16.mxu0 0
          %685 = vmatpush1.bf16.msra.mxu0 0
          %686 = vmatprep.subr.bf16.mxu0 0
          %687 = vmatpush1.bf16.msra.mxu0 0
          %688 = vmatprep.subr.bf16.mxu0 0
          %689 = vmatpush1.bf16.msra.mxu0 0
          %690 = vmatprep.subr.bf16.mxu0 0
          %691 = vmatpush1.bf16.msra.mxu0 0
          %692 = vmatprep.subr.bf16.mxu0 0
          %693 = vmatpush1.bf16.msra.mxu0 0
          %694 = vmatprep.subr.bf16.mxu0 0
          %695 = vmatpush1.bf16.msra.mxu0 0
          %696 = vmatprep.subr.bf16.mxu0 0
          %697 = vmatpush1.bf16.msra.mxu0 0
          %698 = vmatprep.mubr.bf16.mxu0 0
          %699 = vmatmul.mubr.bf16.gmra.mrb[0].mxu0 %v664
          %v700 = vpop.f32.mrb[0].mxu0
          %v701 = vadd.f32 %v649, %v700
          %v702 = vpop.f32.mrb[0].mxu0
          %v703 = vpop.f32.mrb[0].mxu0
          %v704 = vadd.f32 %v649, %v703
          %v705 = vpop.f32.mrb[0].mxu0
          %706 = vdwg.mxu0
          %v707 = vpack.c.bf16 %v704, %v701
          %v709 = vunpack.c.l.b16 %v707
          %v710 = vunpack.c.h.b16 %v707
          %v711 = vpack.c.b16 %v709, %v709
          %v712 = vpack.c.b16 %v710, %v710
          %vm715 = vcmask 257024
          %716 = vst.msk [vmem:[#allocation2] sm:$0xf] %vm715, %v711
          %vm717 = vcmask 254976
          %718 = vst.msk [vmem:[#allocation2 + $0x4] sm:$0x3] %vm717, %v712
          %719 = vrot.lane.b32.xlu0 %v711, 96
          %v720 = vpop.permute.xlu0 %719
          %721 = vrot.lane.b32.xlu0 %v712, 96
          %v722 = vpop.permute.xlu0 %721
          %725 = vst.msk [vmem:[#allocation3] sm:$0xf] %vm715, %v720
          %726 = vst.msk [vmem:[#allocation3 + $0x4] sm:$0x3] %vm717, %v722
        $region104: #{tpu_custom_call.1} parent=91 // pred_fallthru
          _
        %v727 = vld [vmem:[%s2] sm:$0x1]
        %v729 = vlaneseq
        %v730 = vshrl.u32 %v729, 7
        %v731 = vsub.s32 0, %v730
        %v732 = vrot.slane %v727, %v731
        %v734 = vld [vmem:[%s3] sm:$0x1]
        %v736 = vlaneseq
        %v737 = vshrl.u32 %v736, 7
        %v738 = vsub.s32 0, %v737
        %v739 = vrot.slane %v734, %v738
        %v741 = vld [vmem:[%s619] sm:$0xff]
        %vm742 = vcmask 261120
        %v743 = vsel %vm742, %v741, 0.0
        %744 = vadd.xlane.f32.xlu0 %v743
        %v745 = vpop.xlane.xlu0 %744
        %v746 = vrcp.pop 32.0
        %v747 = vmul.f32 %v745, %v746
        %v748 = vsub.f32 %v741, %v747
        %v749 = vmul.f32 %v748, %v748
        %v750 = vsel %vm742, %v749, 0.0
        %751 = vadd.xlane.f32.xlu0 %v750
        %v752 = vpop.xlane.xlu0 %751
        %v753 = vmul.f32 %v752, %v746
        %v754 = vadd.f32 %v753, 1e-05
        %v755 = vrsqrt.pop %v754
        %v756 = vmul.f32 %v748, %v755
        %v757 = vmul.f32 %v756, %v732
        %v758 = vadd.f32 %v757, %v739
        %v759 = vpack.c.bf16 %v758, %v758
        %v760 = vld [vmem:[%s4] sm:$0xf]
        %v761 = vld [vmem:[%s4 + $0x4] sm:$0xf]
        %v762 = vld [vmem:[%s4 + $0x8] sm:$0xf]
        %v763 = vld [vmem:[%s4 + $0xc] sm:$0xf]
        %v764 = vld [vmem:[#allocation4] sm:$0x1]
        %v766 = vlaneseq
        %v767 = vshrl.u32 %v766, 7
        %v768 = vsub.s32 0, %v767
        %v769 = vrot.slane %v764, %v768
        %v775 = vunpack.c.l.b16 %v760
        %v776 = vunpack.c.l.b16 %v761
        %v777 = vunpack.c.l.b16 %v762
        %v778 = vunpack.c.l.b16 %v763
        %v779 = vpack.c.b16 %v776, %v775
        %v780 = vpack.c.b16 %v778, %v777
        %v784 = vsel %vm742, %v759, 0
        %786 = vmatprep.subr.bf16.mxu0 0
        %787 = vmatpush1.bf16.msra.mxu0 %v779
        %788 = vmatprep.subr.bf16.mxu0 0
        %789 = vmatpush1.bf16.msra.mxu0 %v780
        %790 = vmatprep.subr.bf16.mxu0 0
        %791 = vmatpush1.bf16.msra.mxu0 0
        %792 = vmatprep.subr.bf16.mxu0 0
        %793 = vmatpush1.bf16.msra.mxu0 0
        %794 = vmatprep.subr.bf16.mxu0 0
        %795 = vmatpush1.bf16.msra.mxu0 0
        %796 = vmatprep.subr.bf16.mxu0 0
        %797 = vmatpush1.bf16.msra.mxu0 0
        %798 = vmatprep.subr.bf16.mxu0 0
        %799 = vmatpush1.bf16.msra.mxu0 0
        %800 = vmatprep.subr.bf16.mxu0 0
        %801 = vmatpush1.bf16.msra.mxu0 0
        %802 = vmatprep.subr.bf16.mxu0 0
        %803 = vmatpush1.bf16.msra.mxu0 0
        %804 = vmatprep.subr.bf16.mxu0 0
        %805 = vmatpush1.bf16.msra.mxu0 0
        %806 = vmatprep.subr.bf16.mxu0 0
        %807 = vmatpush1.bf16.msra.mxu0 0
        %808 = vmatprep.subr.bf16.mxu0 0
        %809 = vmatpush1.bf16.msra.mxu0 0
        %810 = vmatprep.subr.bf16.mxu0 0
        %811 = vmatpush1.bf16.msra.mxu0 0
        %812 = vmatprep.subr.bf16.mxu0 0
        %813 = vmatpush1.bf16.msra.mxu0 0
        %814 = vmatprep.subr.bf16.mxu0 0
        %815 = vmatpush1.bf16.msra.mxu0 0
        %816 = vmatprep.subr.bf16.mxu0 0
        %817 = vmatpush1.bf16.msra.mxu0 0
        %818 = vmatprep.mubr.bf16.mxu0 0
        %819 = vmatmul.mubr.bf16.gmra.mrb[0].mxu0 %v784
        %v820 = vpop.f32.mrb[0].mxu0
        %v821 = vadd.f32 %v769, %v820
        %v822 = vpop.f32.mrb[0].mxu0
        %v823 = vpop.f32.mrb[0].mxu0
        %v824 = vpop.f32.mrb[0].mxu0
        %825 = vdwg.mxu0
        %v826 = vpack.c.bf16 %v821, %v821
        %828 = vrot.lane.b32.xlu0 %v826, 96
        %v829 = vpop.permute.xlu0 %828
        %vm830 = vcmask 64512
        %v832 = vsel %vm830, %v826, 0
        %v835 = vsel %vm830, %v829, 0
        %837 = vmatprep.subr.bf16.mxu0 0
        %838 = vmatpush1.bf16.xpose.msra.mxu0 %v835
        %839 = vmatprep.subr.bf16.mxu0 0
        %840 = vmatpush1.bf16.xpose.msra.mxu0 0
        %841 = vmatprep.subr.bf16.mxu0 0
        %842 = vmatpush1.bf16.xpose.msra.mxu0 0
        %843 = vmatprep.subr.bf16.mxu0 0
        %844 = vmatpush1.bf16.xpose.msra.mxu0 0
        %845 = vmatprep.subr.bf16.mxu0 0
        %846 = vmatpush1.bf16.xpose.msra.mxu0 0
        %847 = vmatprep.subr.bf16.mxu0 0
        %848 = vmatpush1.bf16.xpose.msra.mxu0 0
        %849 = vmatprep.subr.bf16.mxu0 0
        %850 = vmatpush1.bf16.xpose.msra.mxu0 0
        %851 = vmatprep.subr.bf16.mxu0 0
        %852 = vmatpush1.bf16.xpose.msra.mxu0 0
        %853 = vmatprep.subr.bf16.mxu0 0
        %854 = vmatpush1.bf16.xpose.msra.mxu0 0
        %855 = vmatprep.subr.bf16.mxu0 0
        %856 = vmatpush1.bf16.xpose.msra.mxu0 0
        %857 = vmatprep.subr.bf16.mxu0 0
        %858 = vmatpush1.bf16.xpose.msra.mxu0 0
        %859 = vmatprep.subr.bf16.mxu0 0
        %860 = vmatpush1.bf16.xpose.msra.mxu0 0
        %861 = vmatprep.subr.bf16.mxu0 0
        %862 = vmatpush1.bf16.xpose.msra.mxu0 0
        %863 = vmatprep.subr.bf16.mxu0 0
        %864 = vmatpush1.bf16.xpose.msra.mxu0 0
        %865 = vmatprep.subr.bf16.mxu0 0
        %866 = vmatpush1.bf16.xpose.msra.mxu0 0
        %867 = vmatprep.subr.bf16.mxu0 0
        %868 = vmatpush1.bf16.xpose.msra.mxu0 0
        %869 = vmatprep.mubr.bf16.mxu0 0
        %870 = vmatmul.mubr.bf16.gmra.mrb[0].mxu0 %v832
        %v871 = vpop.f32.mrb[0].mxu0
        %v872 = vadd.f32 0.0, %v871
        %v873 = vpop.f32.mrb[0].mxu0
        %v874 = vpop.f32.mrb[0].mxu0
        %v875 = vpop.f32.mrb[0].mxu0
        %876 = vdwg.mxu0
        %v877 = vmul.f32 %v872, 0.35355338
        %v878 = vsel %vm830, %v877, -inf
        %879 = vmax.xlane.f32.xlu0 %v878
        %v880 = vpop.xlane.xlu0 %879
        %v881 = vsub.f32 %v877, %v880
        %v882 = vmul.f32 %v881, 1.442695
        %v883 = vpow.pop %v882
        %v884 = vsel %vm830, %v883, 0.0
        %885 = vadd.xlane.f32.xlu0 %v884
        %v886 = vpop.xlane.xlu0 %885
        %v887 = vrcp.pop %v886
        %v888 = vmul.f32 %v883, %v887
        %v889 = vpack.c.bf16 %v888, %v888
        %890 = vrot.lane.b32.xlu0 %v826, 64
        %v891 = vpop.permute.xlu0 %890
        %v893 = vsel %vm830, %v889, 0
        %vm895 = vcmask 1043456
        %v897 = vsel %vm895, %v891, 0
        %899 = vmatprep.subr.bf16.mxu0 0
        %900 = vmatpush1.bf16.msra.mxu0 %v897
        %901 = vmatprep.subr.bf16.mxu0 0
        %902 = vmatpush1.bf16.msra.mxu0 0
        %903 = vmatprep.subr.bf16.mxu0 0
        %904 = vmatpush1.bf16.msra.mxu0 0
        %905 = vmatprep.subr.bf16.mxu0 0
        %906 = vmatpush1.bf16.msra.mxu0 0
        %907 = vmatprep.subr.bf16.mxu0 0
        %908 = vmatpush1.bf16.msra.mxu0 0
        %909 = vmatprep.subr.bf16.mxu0 0
        %910 = vmatpush1.bf16.msra.mxu0 0
        %911 = vmatprep.subr.bf16.mxu0 0
        %912 = vmatpush1.bf16.msra.mxu0 0
        %913 = vmatprep.subr.bf16.mxu0 0
        %914 = vmatpush1.bf16.msra.mxu0 0
        %915 = vmatprep.subr.bf16.mxu0 0
        %916 = vmatpush1.bf16.msra.mxu0 0
        %917 = vmatprep.subr.bf16.mxu0 0
        %918 = vmatpush1.bf16.msra.mxu0 0
        %919 = vmatprep.subr.bf16.mxu0 0
        %920 = vmatpush1.bf16.msra.mxu0 0
        %921 = vmatprep.subr.bf16.mxu0 0
        %922 = vmatpush1.bf16.msra.mxu0 0
        %923 = vmatprep.subr.bf16.mxu0 0
        %924 = vmatpush1.bf16.msra.mxu0 0
        %925 = vmatprep.subr.bf16.mxu0 0
        %926 = vmatpush1.bf16.msra.mxu0 0
        %927 = vmatprep.subr.bf16.mxu0 0
        %928 = vmatpush1.bf16.msra.mxu0 0
        %929 = vmatprep.subr.bf16.mxu0 0
        %930 = vmatpush1.bf16.msra.mxu0 0
        %931 = vmatprep.mubr.bf16.mxu0 0
        %932 = vmatmul.mubr.bf16.gmra.mrb[0].mxu0 %v893
        %v933 = vpop.f32.mrb[0].mxu0
        %v934 = vadd.f32 0.0, %v933
        %v935 = vpop.f32.mrb[0].mxu0
        %v936 = vpop.f32.mrb[0].mxu0
        %v937 = vpop.f32.mrb[0].mxu0
        %938 = vdwg.mxu0
        %939 = vrot.lane.b32.xlu0 %v826, 120
        %v940 = vpop.permute.xlu0 %939
        %941 = vrot.lane.b32.xlu0 %v826, 88
        %v942 = vpop.permute.xlu0 %941
        %v944 = vsel %vm830, %v940, 0
        %v947 = vsel %vm830, %v942, 0
        %949 = vmatprep.subr.bf16.mxu0 0
        %950 = vmatpush1.bf16.xpose.msra.mxu0 %v947
        %951 = vmatprep.subr.bf16.mxu0 0
        %952 = vmatpush1.bf16.xpose.msra.mxu0 0
        %953 = vmatprep.subr.bf16.mxu0 0
        %954 = vmatpush1.bf16.xpose.msra.mxu0 0
        %955 = vmatprep.subr.bf16.mxu0 0
        %956 = vmatpush1.bf16.xpose.msra.mxu0 0
        %957 = vmatprep.subr.bf16.mxu0 0
        %958 = vmatpush1.bf16.xpose.msra.mxu0 0
        %959 = vmatprep.subr.bf16.mxu0 0
        %960 = vmatpush1.bf16.xpose.msra.mxu0 0
        %961 = vmatprep.subr.bf16.mxu0 0
        %962 = vmatpush1.bf16.xpose.msra.mxu0 0
        %963 = vmatprep.subr.bf16.mxu0 0
        %964 = vmatpush1.bf16.xpose.msra.mxu0 0
        %965 = vmatprep.subr.bf16.mxu0 0
        %966 = vmatpush1.bf16.xpose.msra.mxu0 0
        %967 = vmatprep.subr.bf16.mxu0 0
        %968 = vmatpush1.bf16.xpose.msra.mxu0 0
        %969 = vmatprep.subr.bf16.mxu0 0
        %970 = vmatpush1.bf16.xpose.msra.mxu0 0
        %971 = vmatprep.subr.bf16.mxu0 0
        %972 = vmatpush1.bf16.xpose.msra.mxu0 0
        %973 = vmatprep.subr.bf16.mxu0 0
        %974 = vmatpush1.bf16.xpose.msra.mxu0 0
        %975 = vmatprep.subr.bf16.mxu0 0
        %976 = vmatpush1.bf16.xpose.msra.mxu0 0
        %977 = vmatprep.subr.bf16.mxu0 0
        %978 = vmatpush1.bf16.xpose.msra.mxu0 0
        %979 = vmatprep.subr.bf16.mxu0 0
        %980 = vmatpush1.bf16.xpose.msra.mxu0 0
        %981 = vmatprep.mubr.bf16.mxu0 0
        %982 = vmatmul.mubr.bf16.gmra.mrb[0].mxu0 %v944
        %v983 = vpop.f32.mrb[0].mxu0
        %v984 = vadd.f32 0.0, %v983
        %v985 = vpop.f32.mrb[0].mxu0
        %v986 = vpop.f32.mrb[0].mxu0
        %v987 = vpop.f32.mrb[0].mxu0
        %988 = vdwg.mxu0
        %v989 = vmul.f32 %v984, 0.35355338
        %v990 = vsel %vm830, %v989, -inf
        %991 = vmax.xlane.f32.xlu0 %v990
        %v992 = vpop.xlane.xlu0 %991
        %v993 = vsub.f32 %v989, %v992
        %v994 = vmul.f32 %v993, 1.442695
        %v995 = vpow.pop %v994
        %v996 = vsel %vm830, %v995, 0.0
        %997 = vadd.xlane.f32.xlu0 %v996
        %v998 = vpop.xlane.xlu0 %997
        %v999 = vrcp.pop %v998
        %v1000 = vmul.f32 %v995, %v999
        %v1001 = vpack.c.bf16 %v1000, %v1000
        %1002 = vrot.lane.b32.xlu0 %v826, 56
        %v1003 = vpop.permute.xlu0 %1002
        %v1005 = vsel %vm830, %v1001, 0
        %v1008 = vsel %vm895, %v1003, 0
        %1010 = vmatprep.subr.bf16.mxu0 0
        %1011 = vmatpush1.bf16.msra.mxu0 %v1008
        %1012 = vmatprep.subr.bf16.mxu0 0
        %1013 = vmatpush1.bf16.msra.mxu0 0
        %1014 = vmatprep.subr.bf16.mxu0 0
        %1015 = vmatpush1.bf16.msra.mxu0 0
        %1016 = vmatprep.subr.bf16.mxu0 0
        %1017 = vmatpush1.bf16.msra.mxu0 0
        %1018 = vmatprep.subr.bf16.mxu0 0
        %1019 = vmatpush1.bf16.msra.mxu0 0
        %1020 = vmatprep.subr.bf16.mxu0 0
        %1021 = vmatpush1.bf16.msra.mxu0 0
        %1022 = vmatprep.subr.bf16.mxu0 0
        %1023 = vmatpush1.bf16.msra.mxu0 0
        %1024 = vmatprep.subr.bf16.mxu0 0
        %1025 = vmatpush1.bf16.msra.mxu0 0
        %1026 = vmatprep.subr.bf16.mxu0 0
        %1027 = vmatpush1.bf16.msra.mxu0 0
        %1028 = vmatprep.subr.bf16.mxu0 0
        %1029 = vmatpush1.bf16.msra.mxu0 0
        %1030 = vmatprep.subr.bf16.mxu0 0
        %1031 = vmatpush1.bf16.msra.mxu0 0
        %1032 = vmatprep.subr.bf16.mxu0 0
        %1033 = vmatpush1.bf16.msra.mxu0 0
        %1034 = vmatprep.subr.bf16.mxu0 0
        %1035 = vmatpush1.bf16.msra.mxu0 0
        %1036 = vmatprep.subr.bf16.mxu0 0
        %1037 = vmatpush1.bf16.msra.mxu0 0
        %1038 = vmatprep.subr.bf16.mxu0 0
        %1039 = vmatpush1.bf16.msra.mxu0 0
        %1040 = vmatprep.subr.bf16.mxu0 0
        %1041 = vmatpush1.bf16.msra.mxu0 0
        %1042 = vmatprep.mubr.bf16.mxu0 0
        %1043 = vmatmul.mubr.bf16.gmra.mrb[0].mxu0 %v1005
        %v1044 = vpop.f32.mrb[0].mxu0
        %v1045 = vadd.f32 0.0, %v1044
        %v1046 = vpop.f32.mrb[0].mxu0
        %v1047 = vpop.f32.mrb[0].mxu0
        %v1048 = vpop.f32.mrb[0].mxu0
        %1049 = vdwg.mxu0
        %1050 = vrot.lane.b32.xlu0 %v826, 112
        %v1051 = vpop.permute.xlu0 %1050
        %1052 = vrot.lane.b32.xlu0 %v826, 80
        %v1053 = vpop.permute.xlu0 %1052
        %v1055 = vsel %vm830, %v1051, 0
        %v1058 = vsel %vm830, %v1053, 0
        %1060 = vmatprep.subr.bf16.mxu0 0
        %1061 = vmatpush1.bf16.xpose.msra.mxu0 %v1058
        %1062 = vmatprep.subr.bf16.mxu0 0
        %1063 = vmatpush1.bf16.xpose.msra.mxu0 0
        %1064 = vmatprep.subr.bf16.mxu0 0
        %1065 = vmatpush1.bf16.xpose.msra.mxu0 0
        %1066 = vmatprep.subr.bf16.mxu0 0
        %1067 = vmatpush1.bf16.xpose.msra.mxu0 0
        %1068 = vmatprep.subr.bf16.mxu0 0
        %1069 = vmatpush1.bf16.xpose.msra.mxu0 0
        %1070 = vmatprep.subr.bf16.mxu0 0
        %1071 = vmatpush1.bf16.xpose.msra.mxu0 0
        %1072 = vmatprep.subr.bf16.mxu0 0
        %1073 = vmatpush1.bf16.xpose.msra.mxu0 0
        %1074 = vmatprep.subr.bf16.mxu0 0
        %1075 = vmatpush1.bf16.xpose.msra.mxu0 0
        %1076 = vmatprep.subr.bf16.mxu0 0
        %1077 = vmatpush1.bf16.xpose.msra.mxu0 0
        %1078 = vmatprep.subr.bf16.mxu0 0
        %1079 = vmatpush1.bf16.xpose.msra.mxu0 0
        %1080 = vmatprep.subr.bf16.mxu0 0
        %1081 = vmatpush1.bf16.xpose.msra.mxu0 0
        %1082 = vmatprep.subr.bf16.mxu0 0
        %1083 = vmatpush1.bf16.xpose.msra.mxu0 0
        %1084 = vmatprep.subr.bf16.mxu0 0
        %1085 = vmatpush1.bf16.xpose.msra.mxu0 0
        %1086 = vmatprep.subr.bf16.mxu0 0
        %1087 = vmatpush1.bf16.xpose.msra.mxu0 0
        %1088 = vmatprep.subr.bf16.mxu0 0
        %1089 = vmatpush1.bf16.xpose.msra.mxu0 0
        %1090 = vmatprep.subr.bf16.mxu0 0
        %1091 = vmatpush1.bf16.xpose.msra.mxu0 0
        %1092 = vmatprep.mubr.bf16.mxu0 0
        %1093 = vmatmul.mubr.bf16.gmra.mrb[0].mxu0 %v1055
        %v1094 = vpop.f32.mrb[0].mxu0
        %v1095 = vadd.f32 0.0, %v1094
        %v1096 = vpop.f32.mrb[0].mxu0
        %v1097 = vpop.f32.mrb[0].mxu0
        %v1098 = vpop.f32.mrb[0].mxu0
        %1099 = vdwg.mxu0
        %v1100 = vmul.f32 %v1095, 0.35355338
        %v1101 = vsel %vm830, %v1100, -inf
        %1102 = vmax.xlane.f32.xlu0 %v1101
        %v1103 = vpop.xlane.xlu0 %1102
        %v1104 = vsub.f32 %v1100, %v1103
        %v1105 = vmul.f32 %v1104, 1.442695
        %v1106 = vpow.pop %v1105
        %v1107 = vsel %vm830, %v1106, 0.0
        %1108 = vadd.xlane.f32.xlu0 %v1107
        %v1109 = vpop.xlane.xlu0 %1108
        %v1110 = vrcp.pop %v1109
        %v1111 = vmul.f32 %v1106, %v1110
        %v1112 = vpack.c.bf16 %v1111, %v1111
        %1113 = vrot.lane.b32.xlu0 %v826, 48
        %v1114 = vpop.permute.xlu0 %1113
        %v1116 = vsel %vm830, %v1112, 0
        %v1119 = vsel %vm895, %v1114, 0
        %1121 = vmatprep.subr.bf16.mxu0 0
        %1122 = vmatpush1.bf16.msra.mxu0 %v1119
        %1123 = vmatprep.subr.bf16.mxu0 0
        %1124 = vmatpush1.bf16.msra.mxu0 0
        %1125 = vmatprep.subr.bf16.mxu0 0
        %1126 = vmatpush1.bf16.msra.mxu0 0
        %1127 = vmatprep.subr.bf16.mxu0 0
        %1128 = vmatpush1.bf16.msra.mxu0 0
        %1129 = vmatprep.subr.bf16.mxu0 0
        %1130 = vmatpush1.bf16.msra.mxu0 0
        %1131 = vmatprep.subr.bf16.mxu0 0
        %1132 = vmatpush1.bf16.msra.mxu0 0
        %1133 = vmatprep.subr.bf16.mxu0 0
        %1134 = vmatpush1.bf16.msra.mxu0 0
        %1135 = vmatprep.subr.bf16.mxu0 0
        %1136 = vmatpush1.bf16.msra.mxu0 0
        %1137 = vmatprep.subr.bf16.mxu0 0
        %1138 = vmatpush1.bf16.msra.mxu0 0
        %1139 = vmatprep.subr.bf16.mxu0 0
        %1140 = vmatpush1.bf16.msra.mxu0 0
        %1141 = vmatprep.subr.bf16.mxu0 0
        %1142 = vmatpush1.bf16.msra.mxu0 0
        %1143 = vmatprep.subr.bf16.mxu0 0
        %1144 = vmatpush1.bf16.msra.mxu0 0
        %1145 = vmatprep.subr.bf16.mxu0 0
        %1146 = vmatpush1.bf16.msra.mxu0 0
        %1147 = vmatprep.subr.bf16.mxu0 0
        %1148 = vmatpush1.bf16.msra.mxu0 0
        %1149 = vmatprep.subr.bf16.mxu0 0
        %1150 = vmatpush1.bf16.msra.mxu0 0
        %1151 = vmatprep.subr.bf16.mxu0 0
        %1152 = vmatpush1.bf16.msra.mxu0 0
        %1153 = vmatprep.mubr.bf16.mxu0 0
        %1154 = vmatmul.mubr.bf16.gmra.mrb[0].mxu0 %v1116
        %v1155 = vpop.f32.mrb[0].mxu0
        %v1156 = vadd.f32 0.0, %v1155
        %v1157 = vpop.f32.mrb[0].mxu0
        %v1158 = vpop.f32.mrb[0].mxu0
        %v1159 = vpop.f32.mrb[0].mxu0
        %1160 = vdwg.mxu0
        %1161 = vrot.lane.b32.xlu0 %v826, 104
        %v1162 = vpop.permute.xlu0 %1161
        %1163 = vrot.lane.b32.xlu0 %v826, 72
        %v1164 = vpop.permute.xlu0 %1163
        %v1166 = vsel %vm830, %v1162, 0
        %v1169 = vsel %vm830, %v1164, 0
        %1171 = vmatprep.subr.bf16.mxu0 0
        %1172 = vmatpush1.bf16.xpose.msra.mxu0 %v1169
        %1173 = vmatprep.subr.bf16.mxu0 0
        %1174 = vmatpush1.bf16.xpose.msra.mxu0 0
        %1175 = vmatprep.subr.bf16.mxu0 0
        %1176 = vmatpush1.bf16.xpose.msra.mxu0 0
        %1177 = vmatprep.subr.bf16.mxu0 0
        %1178 = vmatpush1.bf16.xpose.msra.mxu0 0
        %1179 = vmatprep.subr.bf16.mxu0 0
        %1180 = vmatpush1.bf16.xpose.msra.mxu0 0
        %1181 = vmatprep.subr.bf16.mxu0 0
        %1182 = vmatpush1.bf16.xpose.msra.mxu0 0
        %1183 = vmatprep.subr.bf16.mxu0 0
        %1184 = vmatpush1.bf16.xpose.msra.mxu0 0
        %1185 = vmatprep.subr.bf16.mxu0 0
        %1186 = vmatpush1.bf16.xpose.msra.mxu0 0
        %1187 = vmatprep.subr.bf16.mxu0 0
        %1188 = vmatpush1.bf16.xpose.msra.mxu0 0
        %1189 = vmatprep.subr.bf16.mxu0 0
        %1190 = vmatpush1.bf16.xpose.msra.mxu0 0
        %1191 = vmatprep.subr.bf16.mxu0 0
        %1192 = vmatpush1.bf16.xpose.msra.mxu0 0
        %1193 = vmatprep.subr.bf16.mxu0 0
        %1194 = vmatpush1.bf16.xpose.msra.mxu0 0
        %1195 = vmatprep.subr.bf16.mxu0 0
        %1196 = vmatpush1.bf16.xpose.msra.mxu0 0
        %1197 = vmatprep.subr.bf16.mxu0 0
        %1198 = vmatpush1.bf16.xpose.msra.mxu0 0
        %1199 = vmatprep.subr.bf16.mxu0 0
        %1200 = vmatpush1.bf16.xpose.msra.mxu0 0
        %1201 = vmatprep.subr.bf16.mxu0 0
        %1202 = vmatpush1.bf16.xpose.msra.mxu0 0
        %1203 = vmatprep.mubr.bf16.mxu0 0
        %1204 = vmatmul.mubr.bf16.gmra.mrb[0].mxu0 %v1166
        %v1205 = vpop.f32.mrb[0].mxu0
        %v1206 = vadd.f32 0.0, %v1205
        %v1207 = vpop.f32.mrb[0].mxu0
        %v1208 = vpop.f32.mrb[0].mxu0
        %v1209 = vpop.f32.mrb[0].mxu0
        %1210 = vdwg.mxu0
        %v1211 = vmul.f32 %v1206, 0.35355338
        %v1212 = vsel %vm830, %v1211, -inf
        %1213 = vmax.xlane.f32.xlu0 %v1212
        %v1214 = vpop.xlane.xlu0 %1213
        %v1215 = vsub.f32 %v1211, %v1214
        %v1216 = vmul.f32 %v1215, 1.442695
        %v1217 = vpow.pop %v1216
        %v1218 = vsel %vm830, %v1217, 0.0
        %1219 = vadd.xlane.f32.xlu0 %v1218
        %v1220 = vpop.xlane.xlu0 %1219
        %v1221 = vrcp.pop %v1220
        %v1222 = vmul.f32 %v1217, %v1221
        %v1223 = vpack.c.bf16 %v1222, %v1222
        %1224 = vrot.lane.b32.xlu0 %v826, 40
        %v1225 = vpop.permute.xlu0 %1224
        %v1227 = vsel %vm830, %v1223, 0
        %v1230 = vsel %vm895, %v1225, 0
        %1232 = vmatprep.subr.bf16.mxu0 0
        %1233 = vmatpush1.bf16.msra.mxu0 %v1230
        %1234 = vmatprep.subr.bf16.mxu0 0
        %1235 = vmatpush1.bf16.msra.mxu0 0
        %1236 = vmatprep.subr.bf16.mxu0 0
        %1237 = vmatpush1.bf16.msra.mxu0 0
        %1238 = vmatprep.subr.bf16.mxu0 0
        %1239 = vmatpush1.bf16.msra.mxu0 0
        %1240 = vmatprep.subr.bf16.mxu0 0
        %1241 = vmatpush1.bf16.msra.mxu0 0
        %1242 = vmatprep.subr.bf16.mxu0 0
        %1243 = vmatpush1.bf16.msra.mxu0 0
        %1244 = vmatprep.subr.bf16.mxu0 0
        %1245 = vmatpush1.bf16.msra.mxu0 0
        %1246 = vmatprep.subr.bf16.mxu0 0
        %1247 = vmatpush1.bf16.msra.mxu0 0
        %1248 = vmatprep.subr.bf16.mxu0 0
        %1249 = vmatpush1.bf16.msra.mxu0 0
        %1250 = vmatprep.subr.bf16.mxu0 0
        %1251 = vmatpush1.bf16.msra.mxu0 0
        %1252 = vmatprep.subr.bf16.mxu0 0
        %1253 = vmatpush1.bf16.msra.mxu0 0
        %1254 = vmatprep.subr.bf16.mxu0 0
        %1255 = vmatpush1.bf16.msra.mxu0 0
        %1256 = vmatprep.subr.bf16.mxu0 0
        %1257 = vmatpush1.bf16.msra.mxu0 0
        %1258 = vmatprep.subr.bf16.mxu0 0
        %1259 = vmatpush1.bf16.msra.mxu0 0
        %1260 = vmatprep.subr.bf16.mxu0 0
        %1261 = vmatpush1.bf16.msra.mxu0 0
        %1262 = vmatprep.subr.bf16.mxu0 0
        %1263 = vmatpush1.bf16.msra.mxu0 0
        %1264 = vmatprep.mubr.bf16.mxu0 0
        %1265 = vmatmul.mubr.bf16.gmra.mrb[0].mxu0 %v1227
        %v1266 = vpop.f32.mrb[0].mxu0
        %v1267 = vadd.f32 0.0, %v1266
        %v1268 = vpop.f32.mrb[0].mxu0
        %v1269 = vpop.f32.mrb[0].mxu0
        %v1270 = vpop.f32.mrb[0].mxu0
        %1271 = vdwg.mxu0
        %1273 = vrot.lane.b32.xlu0 %v1045, 8
        %v1274 = vpop.permute.xlu0 %1273
        %1277 = vrot.lane.b32.xlu0 %v1156, 16
        %v1278 = vpop.permute.xlu0 %1277
        %1281 = vrot.lane.b32.xlu0 %v1267, 24
        %v1282 = vpop.permute.xlu0 %1281
        %v1284 = vsel %vm830, %v934, %v1274
        %vm1285 = vcmask 130048
        %v1286 = vsel %vm1285, %v1284, %v1278
        %vm1287 = vcmask 195584
        %v1288 = vsel %vm1287, %v1286, %v1282
        %v1289 = vpack.c.bf16 %v1288, %v1288
        %v1290 = vld [vmem:[%s6] sm:$0xf]
        %v1291 = vld [vmem:[%s6 + $0x4] sm:$0xf]
        %v1292 = vld [vmem:[%s6 + $0x8] sm:$0xf]
        %v1293 = vld [vmem:[%s6 + $0xc] sm:$0xf]
        %v1294 = vld [vmem:[#allocation7] sm:$0x1]
        %v1296 = vlaneseq
        %v1297 = vshrl.u32 %v1296, 7
        %v1298 = vsub.s32 0, %v1297
        %v1299 = vrot.slane %v1294, %v1298
        %v1305 = vunpack.c.l.b16 %v1290
        %v1306 = vunpack.c.l.b16 %v1291
        %v1307 = vunpack.c.l.b16 %v1292
        %v1308 = vunpack.c.l.b16 %v1293
        %v1309 = vpack.c.b16 %v1306, %v1305
        %v1310 = vpack.c.b16 %v1308, %v1307
        %v1314 = vsel %vm742, %v1289, 0
        %1316 = vmatprep.subr.bf16.mxu0 0
        %1317 = vmatpush1.bf16.msra.mxu0 %v1309
        %1318 = vmatprep.subr.bf16.mxu0 0
        %1319 = vmatpush1.bf16.msra.mxu0 %v1310
        %1320 = vmatprep.subr.bf16.mxu0 0
        %1321 = vmatpush1.bf16.msra.mxu0 0
        %1322 = vmatprep.subr.bf16.mxu0 0
        %1323 = vmatpush1.bf16.msra.mxu0 0
        %1324 = vmatprep.subr.bf16.mxu0 0
        %1325 = vmatpush1.bf16.msra.mxu0 0
        %1326 = vmatprep.subr.bf16.mxu0 0
        %1327 = vmatpush1.bf16.msra.mxu0 0
        %1328 = vmatprep.subr.bf16.mxu0 0
        %1329 = vmatpush1.bf16.msra.mxu0 0
        %1330 = vmatprep.subr.bf16.mxu0 0
        %1331 = vmatpush1.bf16.msra.mxu0 0
        %1332 = vmatprep.subr.bf16.mxu0 0
        %1333 = vmatpush1.bf16.msra.mxu0 0
        %1334 = vmatprep.subr.bf16.mxu0 0
        %1335 = vmatpush1.bf16.msra.mxu0 0
        %1336 = vmatprep.subr.bf16.mxu0 0
        %1337 = vmatpush1.bf16.msra.mxu0 0
        %1338 = vmatprep.subr.bf16.mxu0 0
        %1339 = vmatpush1.bf16.msra.mxu0 0
        %1340 = vmatprep.subr.bf16.mxu0 0
        %1341 = vmatpush1.bf16.msra.mxu0 0
        %1342 = vmatprep.subr.bf16.mxu0 0
        %1343 = vmatpush1.bf16.msra.mxu0 0
        %1344 = vmatprep.subr.bf16.mxu0 0
        %1345 = vmatpush1.bf16.msra.mxu0 0
        %1346 = vmatprep.subr.bf16.mxu0 0
        %1347 = vmatpush1.bf16.msra.mxu0 0
        %1348 = vmatprep.mubr.bf16.mxu0 0
        %1349 = vmatmul.mubr.bf16.gmra.mrb[0].mxu0 %v1314
        %v1350 = vpop.f32.mrb[0].mxu0
        %v1351 = vadd.f32 %v1299, %v1350
        %v1352 = vpop.f32.mrb[0].mxu0
        %v1353 = vpop.f32.mrb[0].mxu0
        %v1354 = vpop.f32.mrb[0].mxu0
        %1355 = vdwg.mxu0
        %v1356 = vadd.f32 %v758, %v1351
        %v1357 = vsel %vm742, %v1356, 0.0
        %1358 = vadd.xlane.f32.xlu0 %v1357
        %v1359 = vpop.xlane.xlu0 %1358
        %v1360 = vmul.f32 %v1359, %v746
        %v1361 = vsub.f32 %v1356, %v1360
        %v1362 = vmul.f32 %v1361, %v1361
        %v1363 = vsel %vm742, %v1362, 0.0
        %1364 = vadd.xlane.f32.xlu0 %v1363
        %v1365 = vpop.xlane.xlu0 %1364
        %v1366 = vmul.f32 %v1365, %v746
        %v1367 = vadd.f32 %v1366, 1e-05
        %v1368 = vrsqrt.pop %v1367
        %v1369 = vmul.f32 %v1361, %v1368
        %v1370 = vmul.f32 %v1369, %v732
        %v1371 = vadd.f32 %v1370, %v739
        %v1372 = vpack.c.bf16 %v1371, %v1371
        %v1373 = vld [vmem:[%s8] sm:$0xf]
        %v1374 = vld [vmem:[%s8 + $0x4] sm:$0xf]
        %v1375 = vld [vmem:[%s8 + $0x8] sm:$0xf]
        %v1376 = vld [vmem:[%s8 + $0xc] sm:$0xf]
        %v1377 = vld [vmem:[%s9] sm:$0x1]
        %v1379 = vlaneseq
        %v1380 = vshrl.u32 %v1379, 7
        %v1381 = vsub.s32 0, %v1380
        %v1382 = vrot.slane %v1377, %v1381
        %v1388 = vunpack.c.l.b16 %v1373
        %v1389 = vunpack.c.l.b16 %v1374
        %v1390 = vunpack.c.l.b16 %v1375
        %v1391 = vunpack.c.l.b16 %v1376
        %v1392 = vpack.c.b16 %v1389, %v1388
        %v1393 = vpack.c.b16 %v1391, %v1390
        %v1397 = vsel %vm742, %v1372, 0
        %1399 = vmatprep.subr.bf16.mxu0 0
        %1400 = vmatpush1.bf16.msra.mxu0 %v1392
        %1401 = vmatprep.subr.bf16.mxu0 0
        %1402 = vmatpush1.bf16.msra.mxu0 %v1393
        %1403 = vmatprep.subr.bf16.mxu0 0
        %1404 = vmatpush1.bf16.msra.mxu0 0
        %1405 = vmatprep.subr.bf16.mxu0 0
        %1406 = vmatpush1.bf16.msra.mxu0 0
        %1407 = vmatprep.subr.bf16.mxu0 0
        %1408 = vmatpush1.bf16.msra.mxu0 0
        %1409 = vmatprep.subr.bf16.mxu0 0
        %1410 = vmatpush1.bf16.msra.mxu0 0
        %1411 = vmatprep.subr.bf16.mxu0 0
        %1412 = vmatpush1.bf16.msra.mxu0 0
        %1413 = vmatprep.subr.bf16.mxu0 0
        %1414 = vmatpush1.bf16.msra.mxu0 0
        %1415 = vmatprep.subr.bf16.mxu0 0
        %1416 = vmatpush1.bf16.msra.mxu0 0
        %1417 = vmatprep.subr.bf16.mxu0 0
        %1418 = vmatpush1.bf16.msra.mxu0 0
        %1419 = vmatprep.subr.bf16.mxu0 0
        %1420 = vmatpush1.bf16.msra.mxu0 0
        %1421 = vmatprep.subr.bf16.mxu0 0
        %1422 = vmatpush1.bf16.msra.mxu0 0
        %1423 = vmatprep.subr.bf16.mxu0 0
        %1424 = vmatpush1.bf16.msra.mxu0 0
        %1425 = vmatprep.subr.bf16.mxu0 0
        %1426 = vmatpush1.bf16.msra.mxu0 0
        %1427 = vmatprep.subr.bf16.mxu0 0
        %1428 = vmatpush1.bf16.msra.mxu0 0
        %1429 = vmatprep.subr.bf16.mxu0 0
        %1430 = vmatpush1.bf16.msra.mxu0 0
        %1431 = vmatprep.mubr.bf16.mxu0 0
        %1432 = vmatmul.mubr.bf16.gmra.mrb[0].mxu0 %v1397
        %v1433 = vpop.f32.mrb[0].mxu0
        %v1434 = vadd.f32 %v1382, %v1433
        %v1435 = vpop.f32.mrb[0].mxu0
        %v1436 = vpop.f32.mrb[0].mxu0
        %v1437 = vpop.f32.mrb[0].mxu0
        %1438 = vdwg.mxu0
        %v1439 = vld [vmem:[#allocation2] sm:$0xf]
        %v1440 = vld [vmem:[#allocation2 + $0x4] sm:$0x3]
        %v1441 = vld [vmem:[#allocation3] sm:$0xf]
        %v1442 = vld [vmem:[#allocation3 + $0x4] sm:$0x3]
        %v1443 = vpack.c.bf16 %v1434, %v1434
        %v1446 = vunpack.c.l.b16 %v1439
        %v1447 = vunpack.c.l.b16 %v1440
        %v1448 = vpack.c.b16 %v1447, %v1446
        %v1450 = vsel %vm830, %v1443, 0
        %v1453 = vsel %vm830, %v1448, 0
        %1455 = vmatprep.subr.bf16.mxu0 0
        %1456 = vmatpush1.bf16.xpose.msra.mxu0 %v1453
        %1457 = vmatprep.subr.bf16.mxu0 0
        %1458 = vmatpush1.bf16.xpose.msra.mxu0 0
        %1459 = vmatprep.subr.bf16.mxu0 0
        %1460 = vmatpush1.bf16.xpose.msra.mxu0 0
        %1461 = vmatprep.subr.bf16.mxu0 0
        %1462 = vmatpush1.bf16.xpose.msra.mxu0 0
        %1463 = vmatprep.subr.bf16.mxu0 0
        %1464 = vmatpush1.bf16.xpose.msra.mxu0 0
        %1465 = vmatprep.subr.bf16.mxu0 0
        %1466 = vmatpush1.bf16.xpose.msra.mxu0 0
        %1467 = vmatprep.subr.bf16.mxu0 0
        %1468 = vmatpush1.bf16.xpose.msra.mxu0 0
        %1469 = vmatprep.subr.bf16.mxu0 0
        %1470 = vmatpush1.bf16.xpose.msra.mxu0 0
        %1471 = vmatprep.subr.bf16.mxu0 0
        %1472 = vmatpush1.bf16.xpose.msra.mxu0 0
        %1473 = vmatprep.subr.bf16.mxu0 0
        %1474 = vmatpush1.bf16.xpose.msra.mxu0 0
        %1475 = vmatprep.subr.bf16.mxu0 0
        %1476 = vmatpush1.bf16.xpose.msra.mxu0 0
        %1477 = vmatprep.subr.bf16.mxu0 0
        %1478 = vmatpush1.bf16.xpose.msra.mxu0 0
        %1479 = vmatprep.subr.bf16.mxu0 0
        %1480 = vmatpush1.bf16.xpose.msra.mxu0 0
        %1481 = vmatprep.subr.bf16.mxu0 0
        %1482 = vmatpush1.bf16.xpose.msra.mxu0 0
        %1483 = vmatprep.subr.bf16.mxu0 0
        %1484 = vmatpush1.bf16.xpose.msra.mxu0 0
        %1485 = vmatprep.subr.bf16.mxu0 0
        %1486 = vmatpush1.bf16.xpose.msra.mxu0 0
        %1487 = vmatprep.mubr.bf16.mxu0 0
        %1488 = vmatmul.mubr.bf16.gmra.mrb[0].mxu0 %v1450
        %v1489 = vpop.f32.mrb[0].mxu0
        %v1490 = vadd.f32 0.0, %v1489
        %v1491 = vpop.f32.mrb[0].mxu0
        %v1492 = vpop.f32.mrb[0].mxu0
        %v1493 = vpop.f32.mrb[0].mxu0
        %1494 = vdwg.mxu0
        %v1495 = vmul.f32 %v1490, 0.35355338
        %vm1496 = vcmask 97280
        %v1497 = vsel %vm1496, %v1495, -inf
        %1498 = vmax.xlane.f32.xlu0 %v1497
        %v1499 = vpop.xlane.xlu0 %1498
        %v1500 = vsub.f32 %v1495, %v1499
        %v1501 = vmul.f32 %v1500, 1.442695
        %v1502 = vpow.pop %v1501
        %v1503 = vsel %vm1496, %v1502, 0.0
        %1504 = vadd.xlane.f32.xlu0 %v1503
        %v1505 = vpop.xlane.xlu0 %1504
        %v1506 = vrcp.pop %v1505
        %v1507 = vmul.f32 %v1502, %v1506
        %v1508 = vpack.c.bf16 %v1507, %v1507
        %v1511 = vunpack.c.l.b16 %v1441
        %v1512 = vunpack.c.l.b16 %v1442
        %v1513 = vpack.c.b16 %v1512, %v1511
        %v1515 = vsel %vm1496, %v1508, 0
        %vm1517 = vcmask 1045504
        %v1519 = vsel %vm1517, %v1513, 0
        %1521 = vmatprep.subr.bf16.mxu0 0
        %1522 = vmatpush1.bf16.msra.mxu0 %v1519
        %1523 = vmatprep.subr.bf16.mxu0 0
        %1524 = vmatpush1.bf16.msra.mxu0 0
        %1525 = vmatprep.subr.bf16.mxu0 0
        %1526 = vmatpush1.bf16.msra.mxu0 0
        %1527 = vmatprep.subr.bf16.mxu0 0
        %1528 = vmatpush1.bf16.msra.mxu0 0
        %1529 = vmatprep.subr.bf16.mxu0 0
        %1530 = vmatpush1.bf16.msra.mxu0 0
        %1531 = vmatprep.subr.bf16.mxu0 0
        %1532 = vmatpush1.bf16.msra.mxu0 0
        %1533 = vmatprep.subr.bf16.mxu0 0
        %1534 = vmatpush1.bf16.msra.mxu0 0
        %1535 = vmatprep.subr.bf16.mxu0 0
        %1536 = vmatpush1.bf16.msra.mxu0 0
        %1537 = vmatprep.subr.bf16.mxu0 0
        %1538 = vmatpush1.bf16.msra.mxu0 0
        %1539 = vmatprep.subr.bf16.mxu0 0
        %1540 = vmatpush1.bf16.msra.mxu0 0
        %1541 = vmatprep.subr.bf16.mxu0 0
        %1542 = vmatpush1.bf16.msra.mxu0 0
        %1543 = vmatprep.subr.bf16.mxu0 0
        %1544 = vmatpush1.bf16.msra.mxu0 0
        %1545 = vmatprep.subr.bf16.mxu0 0
        %1546 = vmatpush1.bf16.msra.mxu0 0
        %1547 = vmatprep.subr.bf16.mxu0 0
        %1548 = vmatpush1.bf16.msra.mxu0 0
        %1549 = vmatprep.subr.bf16.mxu0 0
        %1550 = vmatpush1.bf16.msra.mxu0 0
        %1551 = vmatprep.subr.bf16.mxu0 0
        %1552 = vmatpush1.bf16.msra.mxu0 0
        %1553 = vmatprep.mubr.bf16.mxu0 0
        %1554 = vmatmul.mubr.bf16.gmra.mrb[0].mxu0 %v1515
        %v1555 = vpop.f32.mrb[0].mxu0
        %v1556 = vadd.f32 0.0, %v1555
        %v1557 = vpop.f32.mrb[0].mxu0
        %v1558 = vpop.f32.mrb[0].mxu0
        %v1559 = vpop.f32.mrb[0].mxu0
        %1560 = vdwg.mxu0
        %1562 = vrot.lane.b32.xlu0 %v1443, 120
        %v1563 = vpop.permute.xlu0 %1562
        %1564 = vrot.lane.b32.xlu0 %v1448, 120
        %v1565 = vpop.permute.xlu0 %1564
        %v1567 = vsel %vm830, %v1563, 0
        %v1570 = vsel %vm830, %v1565, 0
        %1572 = vmatprep.subr.bf16.mxu0 0
        %1573 = vmatpush1.bf16.xpose.msra.mxu0 %v1570
        %1574 = vmatprep.subr.bf16.mxu0 0
        %1575 = vmatpush1.bf16.xpose.msra.mxu0 0
        %1576 = vmatprep.subr.bf16.mxu0 0
        %1577 = vmatpush1.bf16.xpose.msra.mxu0 0
        %1578 = vmatprep.subr.bf16.mxu0 0
        %1579 = vmatpush1.bf16.xpose.msra.mxu0 0
        %1580 = vmatprep.subr.bf16.mxu0 0
        %1581 = vmatpush1.bf16.xpose.msra.mxu0 0
        %1582 = vmatprep.subr.bf16.mxu0 0
        %1583 = vmatpush1.bf16.xpose.msra.mxu0 0
        %1584 = vmatprep.subr.bf16.mxu0 0
        %1585 = vmatpush1.bf16.xpose.msra.mxu0 0
        %1586 = vmatprep.subr.bf16.mxu0 0
        %1587 = vmatpush1.bf16.xpose.msra.mxu0 0
        %1588 = vmatprep.subr.bf16.mxu0 0
        %1589 = vmatpush1.bf16.xpose.msra.mxu0 0
        %1590 = vmatprep.subr.bf16.mxu0 0
        %1591 = vmatpush1.bf16.xpose.msra.mxu0 0
        %1592 = vmatprep.subr.bf16.mxu0 0
        %1593 = vmatpush1.bf16.xpose.msra.mxu0 0
        %1594 = vmatprep.subr.bf16.mxu0 0
        %1595 = vmatpush1.bf16.xpose.msra.mxu0 0
        %1596 = vmatprep.subr.bf16.mxu0 0
        %1597 = vmatpush1.bf16.xpose.msra.mxu0 0
        %1598 = vmatprep.subr.bf16.mxu0 0
        %1599 = vmatpush1.bf16.xpose.msra.mxu0 0
        %1600 = vmatprep.subr.bf16.mxu0 0
        %1601 = vmatpush1.bf16.xpose.msra.mxu0 0
        %1602 = vmatprep.subr.bf16.mxu0 0
        %1603 = vmatpush1.bf16.xpose.msra.mxu0 0
        %1604 = vmatprep.mubr.bf16.mxu0 0
        %1605 = vmatmul.mubr.bf16.gmra.mrb[0].mxu0 %v1567
        %v1606 = vpop.f32.mrb[0].mxu0
        %v1607 = vadd.f32 0.0, %v1606
        %v1608 = vpop.f32.mrb[0].mxu0
        %v1609 = vpop.f32.mrb[0].mxu0
        %v1610 = vpop.f32.mrb[0].mxu0
        %1611 = vdwg.mxu0
        %v1612 = vmul.f32 %v1607, 0.35355338
        %v1613 = vsel %vm1496, %v1612, -inf
        %1614 = vmax.xlane.f32.xlu0 %v1613
        %v1615 = vpop.xlane.xlu0 %1614
        %v1616 = vsub.f32 %v1612, %v1615
        %v1617 = vmul.f32 %v1616, 1.442695
        %v1618 = vpow.pop %v1617
        %v1619 = vsel %vm1496, %v1618, 0.0
        %1620 = vadd.xlane.f32.xlu0 %v1619
        %v1621 = vpop.xlane.xlu0 %1620
        %v1622 = vrcp.pop %v1621
        %v1623 = vmul.f32 %v1618, %v1622
        %v1624 = vpack.c.bf16 %v1623, %v1623
        %1625 = vrot.lane.b32.xlu0 %v1513, 120
        %v1626 = vpop.permute.xlu0 %1625
        %v1628 = vsel %vm1496, %v1624, 0
        %v1631 = vsel %vm1517, %v1626, 0
        %1633 = vmatprep.subr.bf16.mxu0 0
        %1634 = vmatpush1.bf16.msra.mxu0 %v1631
        %1635 = vmatprep.subr.bf16.mxu0 0
        %1636 = vmatpush1.bf16.msra.mxu0 0
        %1637 = vmatprep.subr.bf16.mxu0 0
        %1638 = vmatpush1.bf16.msra.mxu0 0
        %1639 = vmatprep.subr.bf16.mxu0 0
        %1640 = vmatpush1.bf16.msra.mxu0 0
        %1641 = vmatprep.subr.bf16.mxu0 0
        %1642 = vmatpush1.bf16.msra.mxu0 0
        %1643 = vmatprep.subr.bf16.mxu0 0
        %1644 = vmatpush1.bf16.msra.mxu0 0
        %1645 = vmatprep.subr.bf16.mxu0 0
        %1646 = vmatpush1.bf16.msra.mxu0 0
        %1647 = vmatprep.subr.bf16.mxu0 0
        %1648 = vmatpush1.bf16.msra.mxu0 0
        %1649 = vmatprep.subr.bf16.mxu0 0
        %1650 = vmatpush1.bf16.msra.mxu0 0
        %1651 = vmatprep.subr.bf16.mxu0 0
        %1652 = vmatpush1.bf16.msra.mxu0 0
        %1653 = vmatprep.subr.bf16.mxu0 0
        %1654 = vmatpush1.bf16.msra.mxu0 0
        %1655 = vmatprep.subr.bf16.mxu0 0
        %1656 = vmatpush1.bf16.msra.mxu0 0
        %1657 = vmatprep.subr.bf16.mxu0 0
        %1658 = vmatpush1.bf16.msra.mxu0 0
        %1659 = vmatprep.subr.bf16.mxu0 0
        %1660 = vmatpush1.bf16.msra.mxu0 0
        %1661 = vmatprep.subr.bf16.mxu0 0
        %1662 = vmatpush1.bf16.msra.mxu0 0
        %1663 = vmatprep.subr.bf16.mxu0 0
        %1664 = vmatpush1.bf16.msra.mxu0 0
        %1665 = vmatprep.mubr.bf16.mxu0 0
        %1666 = vmatmul.mubr.bf16.gmra.mrb[0].mxu0 %v1628
        %v1667 = vpop.f32.mrb[0].mxu0
        %v1668 = vadd.f32 0.0, %v1667
        %v1669 = vpop.f32.mrb[0].mxu0
        %v1670 = vpop.f32.mrb[0].mxu0
        %v1671 = vpop.f32.mrb[0].mxu0
        %1672 = vdwg.mxu0
        %1673 = vrot.lane.b32.xlu0 %v1443, 112
        %v1674 = vpop.permute.xlu0 %1673
        %1675 = vrot.lane.b32.xlu0 %v1448, 112
        %v1676 = vpop.permute.xlu0 %1675
        %v1678 = vsel %vm830, %v1674, 0
        %v1681 = vsel %vm830, %v1676, 0
        %1683 = vmatprep.subr.bf16.mxu0 0
        %1684 = vmatpush1.bf16.xpose.msra.mxu0 %v1681
        %1685 = vmatprep.subr.bf16.mxu0 0
        %1686 = vmatpush1.bf16.xpose.msra.mxu0 0
        %1687 = vmatprep.subr.bf16.mxu0 0
        %1688 = vmatpush1.bf16.xpose.msra.mxu0 0
        %1689 = vmatprep.subr.bf16.mxu0 0
        %1690 = vmatpush1.bf16.xpose.msra.mxu0 0
        %1691 = vmatprep.subr.bf16.mxu0 0
        %1692 = vmatpush1.bf16.xpose.msra.mxu0 0
        %1693 = vmatprep.subr.bf16.mxu0 0
        %1694 = vmatpush1.bf16.xpose.msra.mxu0 0
        %1695 = vmatprep.subr.bf16.mxu0 0
        %1696 = vmatpush1.bf16.xpose.msra.mxu0 0
        %1697 = vmatprep.subr.bf16.mxu0 0
        %1698 = vmatpush1.bf16.xpose.msra.mxu0 0
        %1699 = vmatprep.subr.bf16.mxu0 0
        %1700 = vmatpush1.bf16.xpose.msra.mxu0 0
        %1701 = vmatprep.subr.bf16.mxu0 0
        %1702 = vmatpush1.bf16.xpose.msra.mxu0 0
        %1703 = vmatprep.subr.bf16.mxu0 0
        %1704 = vmatpush1.bf16.xpose.msra.mxu0 0
        %1705 = vmatprep.subr.bf16.mxu0 0
        %1706 = vmatpush1.bf16.xpose.msra.mxu0 0
        %1707 = vmatprep.subr.bf16.mxu0 0
        %1708 = vmatpush1.bf16.xpose.msra.mxu0 0
        %1709 = vmatprep.subr.bf16.mxu0 0
        %1710 = vmatpush1.bf16.xpose.msra.mxu0 0
        %1711 = vmatprep.subr.bf16.mxu0 0
        %1712 = vmatpush1.bf16.xpose.msra.mxu0 0
        %1713 = vmatprep.subr.bf16.mxu0 0
        %1714 = vmatpush1.bf16.xpose.msra.mxu0 0
        %1715 = vmatprep.mubr.bf16.mxu0 0
        %1716 = vmatmul.mubr.bf16.gmra.mrb[0].mxu0 %v1678
        %v1717 = vpop.f32.mrb[0].mxu0
        %v1718 = vadd.f32 0.0, %v1717
        %v1719 = vpop.f32.mrb[0].mxu0
        %v1720 = vpop.f32.mrb[0].mxu0
        %v1721 = vpop.f32.mrb[0].mxu0
        %1722 = vdwg.mxu0
        %v1723 = vmul.f32 %v1718, 0.35355338
        %v1724 = vsel %vm1496, %v1723, -inf
        %1725 = vmax.xlane.f32.xlu0 %v1724
        %v1726 = vpop.xlane.xlu0 %1725
        %v1727 = vsub.f32 %v1723, %v1726
        %v1728 = vmul.f32 %v1727, 1.442695
        %v1729 = vpow.pop %v1728
        %v1730 = vsel %vm1496, %v1729, 0.0
        %1731 = vadd.xlane.f32.xlu0 %v1730
        %v1732 = vpop.xlane.xlu0 %1731
        %v1733 = vrcp.pop %v1732
        %v1734 = vmul.f32 %v1729, %v1733
        %v1735 = vpack.c.bf16 %v1734, %v1734
        %1736 = vrot.lane.b32.xlu0 %v1513, 112
        %v1737 = vpop.permute.xlu0 %1736
        %v1739 = vsel %vm1496, %v1735, 0
        %v1742 = vsel %vm1517, %v1737, 0
        %1744 = vmatprep.subr.bf16.mxu0 0
        %1745 = vmatpush1.bf16.msra.mxu0 %v1742
        %1746 = vmatprep.subr.bf16.mxu0 0
        %1747 = vmatpush1.bf16.msra.mxu0 0
        %1748 = vmatprep.subr.bf16.mxu0 0
        %1749 = vmatpush1.bf16.msra.mxu0 0
        %1750 = vmatprep.subr.bf16.mxu0 0
        %1751 = vmatpush1.bf16.msra.mxu0 0
        %1752 = vmatprep.subr.bf16.mxu0 0
        %1753 = vmatpush1.bf16.msra.mxu0 0
        %1754 = vmatprep.subr.bf16.mxu0 0
        %1755 = vmatpush1.bf16.msra.mxu0 0
        %1756 = vmatprep.subr.bf16.mxu0 0
        %1757 = vmatpush1.bf16.msra.mxu0 0
        %1758 = vmatprep.subr.bf16.mxu0 0
        %1759 = vmatpush1.bf16.msra.mxu0 0
        %1760 = vmatprep.subr.bf16.mxu0 0
        %1761 = vmatpush1.bf16.msra.mxu0 0
        %1762 = vmatprep.subr.bf16.mxu0 0
        %1763 = vmatpush1.bf16.msra.mxu0 0
        %1764 = vmatprep.subr.bf16.mxu0 0
        %1765 = vmatpush1.bf16.msra.mxu0 0
        %1766 = vmatprep.subr.bf16.mxu0 0
        %1767 = vmatpush1.bf16.msra.mxu0 0
        %1768 = vmatprep.subr.bf16.mxu0 0
        %1769 = vmatpush1.bf16.msra.mxu0 0
        %1770 = vmatprep.subr.bf16.mxu0 0
        %1771 = vmatpush1.bf16.msra.mxu0 0
        %1772 = vmatprep.subr.bf16.mxu0 0
        %1773 = vmatpush1.bf16.msra.mxu0 0
        %1774 = vmatprep.subr.bf16.mxu0 0
        %1775 = vmatpush1.bf16.msra.mxu0 0
        %1776 = vmatprep.mubr.bf16.mxu0 0
        %1777 = vmatmul.mubr.bf16.gmra.mrb[0].mxu0 %v1739
        %v1778 = vpop.f32.mrb[0].mxu0
        %v1779 = vadd.f32 0.0, %v1778
        %v1780 = vpop.f32.mrb[0].mxu0
        %v1781 = vpop.f32.mrb[0].mxu0
        %v1782 = vpop.f32.mrb[0].mxu0
        %1783 = vdwg.mxu0
        %1784 = vrot.lane.b32.xlu0 %v1443, 104
        %v1785 = vpop.permute.xlu0 %1784
        %1786 = vrot.lane.b32.xlu0 %v1448, 104
        %v1787 = vpop.permute.xlu0 %1786
        %v1789 = vsel %vm830, %v1785, 0
        %v1792 = vsel %vm830, %v1787, 0
        %1794 = vmatprep.subr.bf16.mxu0 0
        %1795 = vmatpush1.bf16.xpose.msra.mxu0 %v1792
        %1796 = vmatprep.subr.bf16.mxu0 0
        %1797 = vmatpush1.bf16.xpose.msra.mxu0 0
        %1798 = vmatprep.subr.bf16.mxu0 0
        %1799 = vmatpush1.bf16.xpose.msra.mxu0 0
        %1800 = vmatprep.subr.bf16.mxu0 0
        %1801 = vmatpush1.bf16.xpose.msra.mxu0 0
        %1802 = vmatprep.subr.bf16.mxu0 0
        %1803 = vmatpush1.bf16.xpose.msra.mxu0 0
        %1804 = vmatprep.subr.bf16.mxu0 0
        %1805 = vmatpush1.bf16.xpose.msra.mxu0 0
        %1806 = vmatprep.subr.bf16.mxu0 0
        %1807 = vmatpush1.bf16.xpose.msra.mxu0 0
        %1808 = vmatprep.subr.bf16.mxu0 0
        %1809 = vmatpush1.bf16.xpose.msra.mxu0 0
        %1810 = vmatprep.subr.bf16.mxu0 0
        %1811 = vmatpush1.bf16.xpose.msra.mxu0 0
        %1812 = vmatprep.subr.bf16.mxu0 0
        %1813 = vmatpush1.bf16.xpose.msra.mxu0 0
        %1814 = vmatprep.subr.bf16.mxu0 0
        %1815 = vmatpush1.bf16.xpose.msra.mxu0 0
        %1816 = vmatprep.subr.bf16.mxu0 0
        %1817 = vmatpush1.bf16.xpose.msra.mxu0 0
        %1818 = vmatprep.subr.bf16.mxu0 0
        %1819 = vmatpush1.bf16.xpose.msra.mxu0 0
        %1820 = vmatprep.subr.bf16.mxu0 0
        %1821 = vmatpush1.bf16.xpose.msra.mxu0 0
        %1822 = vmatprep.subr.bf16.mxu0 0
        %1823 = vmatpush1.bf16.xpose.msra.mxu0 0
        %1824 = vmatprep.subr.bf16.mxu0 0
        %1825 = vmatpush1.bf16.xpose.msra.mxu0 0
        %1826 = vmatprep.mubr.bf16.mxu0 0
        %1827 = vmatmul.mubr.bf16.gmra.mrb[0].mxu0 %v1789
        %v1828 = vpop.f32.mrb[0].mxu0
        %v1829 = vadd.f32 0.0, %v1828
        %v1830 = vpop.f32.mrb[0].mxu0
        %v1831 = vpop.f32.mrb[0].mxu0
        %v1832 = vpop.f32.mrb[0].mxu0
        %1833 = vdwg.mxu0
        %v1834 = vmul.f32 %v1829, 0.35355338
        %v1835 = vsel %vm1496, %v1834, -inf
        %1836 = vmax.xlane.f32.xlu0 %v1835
        %v1837 = vpop.xlane.xlu0 %1836
        %v1838 = vsub.f32 %v1834, %v1837
        %v1839 = vmul.f32 %v1838, 1.442695
        %v1840 = vpow.pop %v1839
        %v1841 = vsel %vm1496, %v1840, 0.0
        %1842 = vadd.xlane.f32.xlu0 %v1841
        %v1843 = vpop.xlane.xlu0 %1842
        %v1844 = vrcp.pop %v1843
        %v1845 = vmul.f32 %v1840, %v1844
        %v1846 = vpack.c.bf16 %v1845, %v1845
        %1847 = vrot.lane.b32.xlu0 %v1513, 104
        %v1848 = vpop.permute.xlu0 %1847
        %v1850 = vsel %vm1496, %v1846, 0
        %v1853 = vsel %vm1517, %v1848, 0
        %1855 = vmatprep.subr.bf16.mxu0 0
        %1856 = vmatpush1.bf16.msra.mxu0 %v1853
        %1857 = vmatprep.subr.bf16.mxu0 0
        %1858 = vmatpush1.bf16.msra.mxu0 0
        %1859 = vmatprep.subr.bf16.mxu0 0
        %1860 = vmatpush1.bf16.msra.mxu0 0
        %1861 = vmatprep.subr.bf16.mxu0 0
        %1862 = vmatpush1.bf16.msra.mxu0 0
        %1863 = vmatprep.subr.bf16.mxu0 0
        %1864 = vmatpush1.bf16.msra.mxu0 0
        %1865 = vmatprep.subr.bf16.mxu0 0
        %1866 = vmatpush1.bf16.msra.mxu0 0
        %1867 = vmatprep.subr.bf16.mxu0 0
        %1868 = vmatpush1.bf16.msra.mxu0 0
        %1869 = vmatprep.subr.bf16.mxu0 0
        %1870 = vmatpush1.bf16.msra.mxu0 0
        %1871 = vmatprep.subr.bf16.mxu0 0
        %1872 = vmatpush1.bf16.msra.mxu0 0
        %1873 = vmatprep.subr.bf16.mxu0 0
        %1874 = vmatpush1.bf16.msra.mxu0 0
        %1875 = vmatprep.subr.bf16.mxu0 0
        %1876 = vmatpush1.bf16.msra.mxu0 0
        %1877 = vmatprep.subr.bf16.mxu0 0
        %1878 = vmatpush1.bf16.msra.mxu0 0
        %1879 = vmatprep.subr.bf16.mxu0 0
        %1880 = vmatpush1.bf16.msra.mxu0 0
        %1881 = vmatprep.subr.bf16.mxu0 0
        %1882 = vmatpush1.bf16.msra.mxu0 0
        %1883 = vmatprep.subr.bf16.mxu0 0
        %1884 = vmatpush1.bf16.msra.mxu0 0
        %1885 = vmatprep.subr.bf16.mxu0 0
        %1886 = vmatpush1.bf16.msra.mxu0 0
        %1887 = vmatprep.mubr.bf16.mxu0 0
        %1888 = vmatmul.mubr.bf16.gmra.mrb[0].mxu0 %v1850
        %v1889 = vpop.f32.mrb[0].mxu0
        %v1890 = vadd.f32 0.0, %v1889
        %v1891 = vpop.f32.mrb[0].mxu0
        %v1892 = vpop.f32.mrb[0].mxu0
        %v1893 = vpop.f32.mrb[0].mxu0
        %1894 = vdwg.mxu0
        %1896 = vrot.lane.b32.xlu0 %v1668, 8
        %v1897 = vpop.permute.xlu0 %1896
        %1900 = vrot.lane.b32.xlu0 %v1779, 16
        %v1901 = vpop.permute.xlu0 %1900
        %1904 = vrot.lane.b32.xlu0 %v1890, 24
        %v1905 = vpop.permute.xlu0 %1904
        %v1907 = vsel %vm830, %v1556, %v1897
        %v1908 = vsel %vm1285, %v1907, %v1901
        %v1909 = vsel %vm1287, %v1908, %v1905
        %v1910 = vpack.c.bf16 %v1909, %v1909
        %v1911 = vld [vmem:[%s12] sm:$0xf]
        %v1912 = vld [vmem:[%s12 + $0x4] sm:$0xf]
        %v1913 = vld [vmem:[%s12 + $0x8] sm:$0xf]
        %v1914 = vld [vmem:[%s12 + $0xc] sm:$0xf]
        %v1915 = vld [vmem:[%s13] sm:$0x1]
        %v1917 = vlaneseq
        %v1918 = vshrl.u32 %v1917, 7
        %v1919 = vsub.s32 0, %v1918
        %v1920 = vrot.slane %v1915, %v1919
        %v1926 = vunpack.c.l.b16 %v1911
        %v1927 = vunpack.c.l.b16 %v1912
        %v1928 = vunpack.c.l.b16 %v1913
        %v1929 = vunpack.c.l.b16 %v1914
        %v1930 = vpack.c.b16 %v1927, %v1926
        %v1931 = vpack.c.b16 %v1929, %v1928
        %v1935 = vsel %vm742, %v1910, 0
        %1937 = vmatprep.subr.bf16.mxu0 0
        %1938 = vmatpush1.bf16.msra.mxu0 %v1930
        %1939 = vmatprep.subr.bf16.mxu0 0
        %1940 = vmatpush1.bf16.msra.mxu0 %v1931
        %1941 = vmatprep.subr.bf16.mxu0 0
        %1942 = vmatpush1.bf16.msra.mxu0 0
        %1943 = vmatprep.subr.bf16.mxu0 0
        %1944 = vmatpush1.bf16.msra.mxu0 0
        %1945 = vmatprep.subr.bf16.mxu0 0
        %1946 = vmatpush1.bf16.msra.mxu0 0
        %1947 = vmatprep.subr.bf16.mxu0 0
        %1948 = vmatpush1.bf16.msra.mxu0 0
        %1949 = vmatprep.subr.bf16.mxu0 0
        %1950 = vmatpush1.bf16.msra.mxu0 0
        %1951 = vmatprep.subr.bf16.mxu0 0
        %1952 = vmatpush1.bf16.msra.mxu0 0
        %1953 = vmatprep.subr.bf16.mxu0 0
        %1954 = vmatpush1.bf16.msra.mxu0 0
        %1955 = vmatprep.subr.bf16.mxu0 0
        %1956 = vmatpush1.bf16.msra.mxu0 0
        %1957 = vmatprep.subr.bf16.mxu0 0
        %1958 = vmatpush1.bf16.msra.mxu0 0
        %1959 = vmatprep.subr.bf16.mxu0 0
        %1960 = vmatpush1.bf16.msra.mxu0 0
        %1961 = vmatprep.subr.bf16.mxu0 0
        %1962 = vmatpush1.bf16.msra.mxu0 0
        %1963 = vmatprep.subr.bf16.mxu0 0
        %1964 = vmatpush1.bf16.msra.mxu0 0
        %1965 = vmatprep.subr.bf16.mxu0 0
        %1966 = vmatpush1.bf16.msra.mxu0 0
        %1967 = vmatprep.subr.bf16.mxu0 0
        %1968 = vmatpush1.bf16.msra.mxu0 0
        %1969 = vmatprep.mubr.bf16.mxu0 0
        %1970 = vmatmul.mubr.bf16.gmra.mrb[0].mxu0 %v1935
        %v1971 = vpop.f32.mrb[0].mxu0
        %v1972 = vadd.f32 %v1920, %v1971
        %v1973 = vpop.f32.mrb[0].mxu0
        %v1974 = vpop.f32.mrb[0].mxu0
        %v1975 = vpop.f32.mrb[0].mxu0
        %1976 = vdwg.mxu0
        %v1977 = vadd.f32 %v1371, %v1972
        %v1978 = vsel %vm742, %v1977, 0.0
        %1979 = vadd.xlane.f32.xlu0 %v1978
        %v1980 = vpop.xlane.xlu0 %1979
        %v1981 = vmul.f32 %v1980, %v746
        %v1982 = vsub.f32 %v1977, %v1981
        %v1983 = vmul.f32 %v1982, %v1982
        %v1984 = vsel %vm742, %v1983, 0.0
        %1985 = vadd.xlane.f32.xlu0 %v1984
        %v1986 = vpop.xlane.xlu0 %1985
        %v1987 = vmul.f32 %v1986, %v746
        %v1988 = vadd.f32 %v1987, 1e-05
        %v1989 = vrsqrt.pop %v1988
        %v1990 = vmul.f32 %v1982, %v1989
        %v1991 = vmul.f32 %v1990, %v732
        %v1992 = vadd.f32 %v1991, %v739
        %v1993 = vpack.c.bf16 %v1992, %v1992
        %v1994 = vld [vmem:[%s14] sm:$0xf]
        %v1995 = vld [vmem:[%s14 + $0x4] sm:$0xf]
        %v1996 = vld [vmem:[%s14 + $0x8] sm:$0xf]
        %v1997 = vld [vmem:[%s14 + $0xc] sm:$0xf]
        %v1998 = vld [vmem:[%s15] sm:$0x1]
        %v2000 = vlaneseq
        %v2001 = vshrl.u32 %v2000, 7
        %v2002 = vsub.s32 0, %v2001
        %v2003 = vrot.slane %v1998, %v2002
        %v2009 = vunpack.c.l.b16 %v1994
        %v2010 = vunpack.c.l.b16 %v1995
        %v2011 = vunpack.c.l.b16 %v1996
        %v2012 = vunpack.c.l.b16 %v1997
        %v2013 = vpack.c.b16 %v2010, %v2009
        %v2014 = vpack.c.b16 %v2012, %v2011
        %v2018 = vsel %vm742, %v1993, 0
        %2020 = vmatprep.subr.bf16.mxu0 0
        %2021 = vmatpush1.bf16.msra.mxu0 %v2013
        %2022 = vmatprep.subr.bf16.mxu0 0
        %2023 = vmatpush1.bf16.msra.mxu0 %v2014
        %2024 = vmatprep.subr.bf16.mxu0 0
        %2025 = vmatpush1.bf16.msra.mxu0 0
        %2026 = vmatprep.subr.bf16.mxu0 0
        %2027 = vmatpush1.bf16.msra.mxu0 0
        %2028 = vmatprep.subr.bf16.mxu0 0
        %2029 = vmatpush1.bf16.msra.mxu0 0
        %2030 = vmatprep.subr.bf16.mxu0 0
        %2031 = vmatpush1.bf16.msra.mxu0 0
        %2032 = vmatprep.subr.bf16.mxu0 0
        %2033 = vmatpush1.bf16.msra.mxu0 0
        %2034 = vmatprep.subr.bf16.mxu0 0
        %2035 = vmatpush1.bf16.msra.mxu0 0
        %2036 = vmatprep.subr.bf16.mxu0 0
        %2037 = vmatpush1.bf16.msra.mxu0 0
        %2038 = vmatprep.subr.bf16.mxu0 0
        %2039 = vmatpush1.bf16.msra.mxu0 0
        %2040 = vmatprep.subr.bf16.mxu0 0
        %2041 = vmatpush1.bf16.msra.mxu0 0
        %2042 = vmatprep.subr.bf16.mxu0 0
        %2043 = vmatpush1.bf16.msra.mxu0 0
        %2044 = vmatprep.subr.bf16.mxu0 0
        %2045 = vmatpush1.bf16.msra.mxu0 0
        %2046 = vmatprep.subr.bf16.mxu0 0
        %2047 = vmatpush1.bf16.msra.mxu0 0
        %2048 = vmatprep.subr.bf16.mxu0 0
        %2049 = vmatpush1.bf16.msra.mxu0 0
        %2050 = vmatprep.subr.bf16.mxu0 0
        %2051 = vmatpush1.bf16.msra.mxu0 0
        %2052 = vmatprep.mubr.bf16.mxu0 0
        %2053 = vmatmul.mubr.bf16.gmra.mrb[0].mxu0 %v2018
        %v2054 = vpop.f32.mrb[0].mxu0
        %v2055 = vadd.f32 %v2003, %v2054
        %v2056 = vpop.f32.mrb[0].mxu0
        %v2057 = vpop.f32.mrb[0].mxu0
        %v2058 = vpop.f32.mrb[0].mxu0
        %2059 = vdwg.mxu0
        %v2060 = vmax.f32 %v2055, 0.0
        %v2061 = vmul.f32 %v2060, %v2060
        %v2062 = vpack.c.bf16 %v2061, %v2061
        %v2063 = vld [vmem:[%s16] sm:$0xf]
        %v2064 = vld [vmem:[%s16 + $0x4] sm:$0xf]
        %v2065 = vld [vmem:[%s16 + $0x8] sm:$0xf]
        %v2066 = vld [vmem:[%s16 + $0xc] sm:$0xf]
        %v2067 = vld [vmem:[%s16 + $0x10] sm:$0xf]
        %v2068 = vld [vmem:[%s16 + $0x14] sm:$0xf]
        %v2069 = vld [vmem:[%s16 + $0x18] sm:$0xf]
        %v2070 = vld [vmem:[%s16 + $0x1c] sm:$0xf]
        %v2071 = vld [vmem:[%s17] sm:$0x1]
        %v2073 = vlaneseq
        %v2074 = vshrl.u32 %v2073, 7
        %v2075 = vsub.s32 0, %v2074
        %v2076 = vrot.slane %v2071, %v2075
        %v2086 = vunpack.c.l.b16 %v2063
        %v2087 = vunpack.c.l.b16 %v2064
        %v2088 = vunpack.c.l.b16 %v2065
        %v2089 = vunpack.c.l.b16 %v2066
        %v2090 = vunpack.c.l.b16 %v2067
        %v2091 = vunpack.c.l.b16 %v2068
        %v2092 = vunpack.c.l.b16 %v2069
        %v2093 = vunpack.c.l.b16 %v2070
        %v2094 = vpack.c.b16 %v2087, %v2086
        %v2095 = vpack.c.b16 %v2089, %v2088
        %v2096 = vpack.c.b16 %v2091, %v2090
        %v2097 = vpack.c.b16 %v2093, %v2092
        %vm2102 = vcmask 523264
        %v2104 = vsel %vm2102, %v2062, 0
        %2106 = vmatprep.subr.bf16.mxu0 0
        %2107 = vmatpush1.bf16.msra.mxu0 %v2094
        %2108 = vmatprep.subr.bf16.mxu0 0
        %2109 = vmatpush1.bf16.msra.mxu0 %v2095
        %2110 = vmatprep.subr.bf16.mxu0 0
        %2111 = vmatpush1.bf16.msra.mxu0 %v2096
        %2112 = vmatprep.subr.bf16.mxu0 0
        %2113 = vmatpush1.bf16.msra.mxu0 %v2097
        %2114 = vmatprep.subr.bf16.mxu0 0
        %2115 = vmatpush1.bf16.msra.mxu0 0
        %2116 = vmatprep.subr.bf16.mxu0 0
        %2117 = vmatpush1.bf16.msra.mxu0 0
        %2118 = vmatprep.subr.bf16.mxu0 0
        %2119 = vmatpush1.bf16.msra.mxu0 0
        %2120 = vmatprep.subr.bf16.mxu0 0
        %2121 = vmatpush1.bf16.msra.mxu0 0
        %2122 = vmatprep.subr.bf16.mxu0 0
        %2123 = vmatpush1.bf16.msra.mxu0 0
        %2124 = vmatprep.subr.bf16.mxu0 0
        %2125 = vmatpush1.bf16.msra.mxu0 0
        %2126 = vmatprep.subr.bf16.mxu0 0
        %2127 = vmatpush1.bf16.msra.mxu0 0
        %2128 = vmatprep.subr.bf16.mxu0 0
        %2129 = vmatpush1.bf16.msra.mxu0 0
        %2130 = vmatprep.subr.bf16.mxu0 0
        %2131 = vmatpush1.bf16.msra.mxu0 0
        %2132 = vmatprep.subr.bf16.mxu0 0
        %2133 = vmatpush1.bf16.msra.mxu0 0
        %2134 = vmatprep.subr.bf16.mxu0 0
        %2135 = vmatpush1.bf16.msra.mxu0 0
        %2136 = vmatprep.subr.bf16.mxu0 0
        %2137 = vmatpush1.bf16.msra.mxu0 0
        %2138 = vmatprep.mubr.bf16.mxu0 0
        %2139 = vmatmul.mubr.bf16.gmra.mrb[0].mxu0 %v2104
        %v2140 = vpop.f32.mrb[0].mxu0
        %v2141 = vadd.f32 %v2076, %v2140
        %v2142 = vpop.f32.mrb[0].mxu0
        %v2143 = vpop.f32.mrb[0].mxu0
        %v2144 = vpop.f32.mrb[0].mxu0
        %2145 = vdwg.mxu0
        %v2146 = vadd.f32 %v1992, %v2141
        %v2147 = vsel %vm742, %v2146, 0.0
        %2148 = vadd.xlane.f32.xlu0 %v2147
        %v2149 = vpop.xlane.xlu0 %2148
        %v2150 = vmul.f32 %v2149, %v746
        %v2151 = vsub.f32 %v2146, %v2150
        %v2152 = vmul.f32 %v2151, %v2151
        %v2153 = vsel %vm742, %v2152, 0.0
        %2154 = vadd.xlane.f32.xlu0 %v2153
        %v2155 = vpop.xlane.xlu0 %2154
        %v2156 = vmul.f32 %v2155, %v746
        %v2157 = vadd.f32 %v2156, 1e-05
        %v2158 = vrsqrt.pop %v2157
        %v2159 = vmul.f32 %v2151, %v2158
        %v2160 = vmul.f32 %v2159, %v732
        %v2161 = vadd.f32 %v2160, %v739
        %2162 = vst.msk [vmem:[%s619] sm:$0xff] %vm742, %v2161
        %s2163 = sand.u32 %s442, 1
        %s2164 = scalar_lea.sflag [#allocation6], %s2163
        %s2165 = sand.u32 %s442, 1
        %s2166 = smul.addr %s2165, 8
        %s2167 = scalar_lea.vmem [#allocation9], %s2166
        // Predicated region
        $region105: #{tpu_custom_call.1} parent=91 // pred_check
          %p2168 = pneg %p452
        $region106: #{tpu_custom_call.1} parent=91 // pred_check_branch
          %2170 = sbr.rel (%p2168) target = $region108
        $region107: #{tpu_custom_call.1} parent=91 // pred_region
          %s2172 = ssub.s32 128, 128
          %2173 = vsyncadd %s2164, %s2172
          %s2174 = smul.addr %s38, 128
          %s2175 = scalar_lea.hbm %s18, %s2174
          %s2177 = sshll.u32 %s2167, 4
          %s2178 = int_to_ptr.vmem [resolvable:$true] %s2177
          %2180 = dma.vmem_to_hbm [thread:$0]  %s2178, 128, %s2175, %s2164
        $region108: #{tpu_custom_call.1} parent=91 // pred_fallthru
          _
      $region92: #{tpu_custom_call.1} parent=5 // pred_fallthru
        _
      %p2181 = scmp.le.s32.totalorder 2, %s29
      // Predicated region
      $region109: #{tpu_custom_call.1} parent=5 // pred_check
        %p2182 = pneg %p2181
      $region110: #{tpu_custom_call.1} parent=5 // pred_check_branch
        %2184 = sbr.rel (%p2182) target = $region112
      $region111: #{tpu_custom_call.1} parent=5 // pred_region
        %s2185 = ssub.s32 %s29, 2
        // Predicated region
        $region113: #{tpu_custom_call.1} parent=111 // pred_check
          %p2186 = pneg %p458
        $region114: #{tpu_custom_call.1} parent=111 // pred_check_branch
          %2188 = sbr.rel (%p2186) target = $region116
        $region115: #{tpu_custom_call.1} parent=111 // pred_region
          %s2189 = sand.u32 %s443, 1
          %s2190 = scalar_lea.sflag [#allocation6], %s2189
          %s2191 = sand.u32 %s443, 1
          %s2192 = smul.addr %s2191, 8
          %s2193 = scalar_lea.vmem [#allocation9], %s2192
          %2194 = dma.done %s2190, 128
        $region116: #{tpu_custom_call.1} parent=111 // pred_fallthru
          _
      $region112: #{tpu_custom_call.1} parent=5 // pred_fallthru
        _
    $region6: #{tpu_custom_call.1} parent=1 // loop_footer
      %s33 = sadd.s32 1, %s29
    $region7: #{tpu_custom_call.1} parent=1 // loop_footer_branch
      %28 = sbr.rel target = $region3
    $region8: #{tpu_custom_call.1} parent=1 // loop_exit
      _
    %2195 = vsyncpa [#allocation5], 1
    %s2196 = scalar_lea.sflag [#allocation5], 1
    %2197 = vsyncpa %s2196, 1
    %2198 = vsyncpa [#allocation8], 1
    %2199 = vsyncpa [#allocation6], 1
    %s2200 = scalar_lea.sflag [#allocation6], 1
    %2201 = vsyncpa %s2200, 1

// kernel: tpu_custom_call.1
$region0: #{tpu_custom_call.1}
  #allocation0 [shape = 'u32[]', space=smem, size = 0x4, offset = 0x4, fixed_abs, tag = 'smem constant byte address 0x4 - core index']
  #allocation1 [shape = 'u32[144,128]{1,0:T(1,128)}', space=vmem, size = 0x12000, scoped, tag = 'internal scratch']
  #allocation2 [shape = 'bf16[12,32]{1,0:T(8,128)(2,1)}', space=vmem, size = 0x1000, scoped, tag = 'scratch operand']
  #allocation3 [shape = 'bf16[12,32]{1,0:T(8,128)(2,1)}', space=vmem, size = 0x1000, scoped, tag = 'scratch operand']
  %s0 = inlined_call_operand.vmem [shape: f32[2,8,32], index: 0, kind: input, shape index: {}]
  %s1 = inlined_call_operand.vmem [shape: f32[2,12,32], index: 1, kind: input, shape index: {}]
  %s2 = inlined_call_operand.vmem [shape: f32[1,32], index: 2, kind: input, shape index: {}]
  %s3 = inlined_call_operand.vmem [shape: f32[1,32], index: 3, kind: input, shape index: {}]
  %s4 = inlined_call_operand.vmem [shape: bf16[32,96], index: 4, kind: input, shape index: {}]
  %s5 = inlined_call_operand.hbm [shape: f32[1,96], index: 5, kind: input, shape index: {}]
  %s6 = inlined_call_operand.vmem [shape: bf16[32,32], index: 6, kind: input, shape index: {}]
  %s7 = inlined_call_operand.hbm [shape: f32[1,32], index: 7, kind: input, shape index: {}]
  %s8 = inlined_call_operand.vmem [shape: bf16[32,32], index: 8, kind: input, shape index: {}]
  %s9 = inlined_call_operand.vmem [shape: f32[1,32], index: 9, kind: input, shape index: {}]
  %s10 = inlined_call_operand.vmem [shape: bf16[32,64], index: 10, kind: input, shape index: {}]
  %s11 = inlined_call_operand.vmem [shape: f32[1,64], index: 11, kind: input, shape index: {}]
  %s12 = inlined_call_operand.vmem [shape: bf16[32,32], index: 12, kind: input, shape index: {}]
  %s13 = inlined_call_operand.vmem [shape: f32[1,32], index: 13, kind: input, shape index: {}]
  %s14 = inlined_call_operand.vmem [shape: bf16[32,64], index: 14, kind: input, shape index: {}]
  %s15 = inlined_call_operand.vmem [shape: f32[1,64], index: 15, kind: input, shape index: {}]
  %s16 = inlined_call_operand.vmem [shape: bf16[64,32], index: 16, kind: input, shape index: {}]
  %s17 = inlined_call_operand.vmem [shape: f32[1,32], index: 17, kind: input, shape index: {}]
  %s18 = inlined_call_operand.hbm [shape: f32[2,8,32], index: 18, kind: output, shape index: {}]
  %s19 = sld [smem:[#allocation0]]
  $region117: #{tpu_custom_call.1} parent=0
    _
  %s21 = ssub.s32 1, %s19
  %s22 = scalar_select 0, %s21, %s19
  $region1: #{tpu_custom_call.1} parent=0
    #allocation4 [shape = 'u8[512]{0}', space=vmem, size = 0x400, scoped, tag = 'input window, operand 5, single buffered']
    #allocation5 [shape = 's32[2]{0}', space=sflag, size = 0x8, scoped, tag = 'scoped memory for tpu_custom_call.1']
    #allocation6 [shape = 's32[2]{0}', space=sflag, size = 0x8, scoped, tag = 'scoped memory for tpu_custom_call.1']
    #allocation7 [shape = 'u8[512]{0}', space=vmem, size = 0x400, scoped, tag = 'input window, operand 7, single buffered']
    #allocation8 [shape = 's32[1]{0}', space=sflag, size = 0x4, scoped, tag = 'scoped memory for tpu_custom_call.1']
    #allocation9 [shape = 'u8[8192]{0}', space=vmem, size = 0x2000, scoped, tag = 'output window, operand 0']
    %23 = vsyncpa [#allocation5], 0
    %24 = vsyncpa [#allocation8], 0
    %25 = vsyncpa [#allocation6], 0
    %s26 = scalar_lea.sflag [#allocation6], 1
    %27 = vsyncpa %s26, 0
    loop: start=0, step=1, limit=6
    $region2: #{tpu_custom_call.1} parent=1 // loop_pre_header
      _
    $region3: #{tpu_custom_call.1} parent=1 // loop_header
      %s29 = sphi 0, %s33
      %p30 = scmp.ge.s32.totalorder %s29, 6
      %s36 = sphi 0, %s48
      %s37 = sphi 0, %s44
      %s38 = sphi 0, %s36
      %s39 = sphi 0, %s37
      %s40 = sphi 0, %s38
      %s41 = sphi 0, %s39
      %s51 = sphi 0, %s53
      %s54 = sphi 0, %s51
      %s55 = sphi 0, %s54
      %s71 = sphi 0, %s55
      %s77 = sphi 0, %s79
      %s80 = sphi 0, %s77
      %s81 = sphi 0, %s80
      %s97 = sphi 0, %s81
      %s101 = sphi 0, %s101
      %s103 = sphi 0, %s101
      %s104 = sphi 0, %s103
      %s118 = sphi 0, %s104
      %s122 = sphi 0, %s122
      %s124 = sphi 0, %s122
      %s125 = sphi 0, %s124
      %s139 = sphi 0, %s125
      %s143 = sphi 0, %s143
      %s145 = sphi 0, %s143
      %s146 = sphi 0, %s145
      %s160 = sphi 0, %s146
      %s164 = sphi 0, %s164
      %s166 = sphi 0, %s164
      %s167 = sphi 0, %s166
      %s181 = sphi 0, %s167
      %s185 = sphi 0, %s185
      %s187 = sphi 0, %s185
      %s188 = sphi 0, %s187
      %s202 = sphi 0, %s188
      %s206 = sphi 0, %s206
      %s208 = sphi 0, %s206
      %s209 = sphi 0, %s208
      %s223 = sphi 0, %s209
      %s227 = sphi 0, %s227
      %s229 = sphi 0, %s227
      %s230 = sphi 0, %s229
      %s244 = sphi 0, %s230
      %s248 = sphi 0, %s248
      %s250 = sphi 0, %s248
      %s251 = sphi 0, %s250
      %s265 = sphi 0, %s251
      %s269 = sphi 0, %s269
      %s271 = sphi 0, %s269
      %s272 = sphi 0, %s271
      %s286 = sphi 0, %s272
      %s290 = sphi 0, %s290
      %s292 = sphi 0, %s290
      %s293 = sphi 0, %s292
      %s307 = sphi 0, %s293
      %s311 = sphi 0, %s311
      %s313 = sphi 0, %s311
      %s314 = sphi 0, %s313
      %s328 = sphi 0, %s314
      %s332 = sphi 0, %s332
      %s334 = sphi 0, %s332
      %s335 = sphi 0, %s334
      %s349 = sphi 0, %s335
      %s353 = sphi 0, %s353
      %s355 = sphi 0, %s353
      %s356 = sphi 0, %s355
      %s370 = sphi 0, %s356
      %s374 = sphi 0, %s374
      %s376 = sphi 0, %s374
      %s377 = sphi 0, %s376
      %s391 = sphi 0, %s377
      %s395 = sphi 0, %s395
      %s397 = sphi 0, %s395
      %s398 = sphi 0, %s397
      %s412 = sphi 0, %s398
      %s416 = sphi 0, %s416
      %s418 = sphi 0, %s416
      %s419 = sphi 0, %s418
      %s433 = sphi 0, %s419
      %s439 = sphi 0, %s441
      %s442 = sphi 0, %s439
      %s443 = sphi 0, %s442
      %s459 = sphi 0, %s443
    $region4: #{tpu_custom_call.1} parent=1 // loop_header_branch
      %32 = sbr.rel (%p30) target = $region8
    $region5: #{tpu_custom_call.1} parent=1 // loop_body
      %s34 = ssub.s32 %s29, 1
      %s35 = ssub.s32 %s29, 2
      %s42 = sadd.s32 1, %s37
      %p43 = scmp.ge.s32.totalorder %s42, 2
      %s44 = scalar_select %p43, 0, %s42
      %s45 = sadd.s32 1, %s36
      %s46 = scalar_select %p43, %s45, %s36
      %p47 = scmp.ge.s32.totalorder %s46, 2
      %s48 = scalar_select %p47, 0, %s46
      %s49 = ssub.s32 %s36, %s48
      %p50 = scmp.eq.s32.totalorder %s49, 0
      %s52 = sadd.s32 %s51, 1
      %s53 = scalar_select %p50, %s51, %s52
      %p56 = pneg %p50
      %p57 = scmp.eq.s32.totalorder %s29, 3
      %p58 = por %p56, %p57
      %p59 = scmp.ne.s32.totalorder %s51, %s54
      %p60 = scmp.eq.s32.totalorder %s29, 0
      %p61 = por %p59, %p60
      %p62 = scmp.ne.s32.totalorder %s51, %s54
      %p63 = scmp.eq.s32.totalorder %s34, 3
      %p64 = por %p62, %p63
      %p65 = scmp.ne.s32.totalorder %s54, %s55
      %p66 = scmp.eq.s32.totalorder %s34, 0
      %p67 = por %p65, %p66
      %p68 = scmp.ne.s32.totalorder %s54, %s55
      %p69 = scmp.eq.s32.totalorder %s35, 3
      %p70 = por %p68, %p69
      %p72 = scmp.ne.s32.totalorder %s55, %s71
      %p73 = scmp.eq.s32.totalorder %s35, 0
      %p74 = por %p72, %p73
      %s75 = ssub.s32 %s36, %s48
      %p76 = scmp.eq.s32.totalorder %s75, 0
      %s78 = sadd.s32 %s77, 1
      %s79 = scalar_select %p76, %s77, %s78
      %p82 = pneg %p76
      %p83 = scmp.eq.s32.totalorder %s29, 3
      %p84 = por %p82, %p83
      %p85 = scmp.ne.s32.totalorder %s77, %s80
      %p86 = scmp.eq.s32.totalorder %s29, 0
      %p87 = por %p85, %p86
      %p88 = scmp.ne.s32.totalorder %s77, %s80
      %p89 = scmp.eq.s32.totalorder %s34, 3
      %p90 = por %p88, %p89
      %p91 = scmp.ne.s32.totalorder %s80, %s81
      %p92 = scmp.eq.s32.totalorder %s34, 0
      %p93 = por %p91, %p92
      %p94 = scmp.ne.s32.totalorder %s80, %s81
      %p95 = scmp.eq.s32.totalorder %s35, 3
      %p96 = por %p94, %p95
      %p98 = scmp.ne.s32.totalorder %s81, %s97
      %p99 = scmp.eq.s32.totalorder %s35, 0
      %p100 = por %p98, %p99
      %s102 = sadd.s32 %s101, 1
      %p105 = scmp.eq.s32.totalorder %s29, 3
      %p106 = scmp.ne.s32.totalorder %s101, %s103
      %p107 = scmp.eq.s32.totalorder %s29, 0
      %p108 = por %p106, %p107
      %p109 = scmp.ne.s32.totalorder %s101, %s103
      %p110 = scmp.eq.s32.totalorder %s34, 3
      %p111 = por %p109, %p110
      %p112 = scmp.ne.s32.totalorder %s103, %s104
      %p113 = scmp.eq.s32.totalorder %s34, 0
      %p114 = por %p112, %p113
      %p115 = scmp.ne.s32.totalorder %s103, %s104
      %p116 = scmp.eq.s32.totalorder %s35, 3
      %p117 = por %p115, %p116
      %p119 = scmp.ne.s32.totalorder %s104, %s118
      %p120 = scmp.eq.s32.totalorder %s35, 0
      %p121 = por %p119, %p120
      %s123 = sadd.s32 %s122, 1
      %p126 = scmp.eq.s32.totalorder %s29, 3
      %p127 = scmp.ne.s32.totalorder %s122, %s124
      %p128 = scmp.eq.s32.totalorder %s29, 0
      %p129 = por %p127, %p128
      %p130 = scmp.ne.s32.totalorder %s122, %s124
      %p131 = scmp.eq.s32.totalorder %s34, 3
      %p132 = por %p130, %p131
      %p133 = scmp.ne.s32.totalorder %s124, %s125
      %p134 = scmp.eq.s32.totalorder %s34, 0
      %p135 = por %p133, %p134
      %p136 = scmp.ne.s32.totalorder %s124, %s125
      %p137 = scmp.eq.s32.totalorder %s35, 3
      %p138 = por %p136, %p137
      %p140 = scmp.ne.s32.totalorder %s125, %s139
      %p141 = scmp.eq.s32.totalorder %s35, 0
      %p142 = por %p140, %p141
      %s144 = sadd.s32 %s143, 1
      %p147 = scmp.eq.s32.totalorder %s29, 3
      %p148 = scmp.ne.s32.totalorder %s143, %s145
      %p149 = scmp.eq.s32.totalorder %s29, 0
      %p150 = por %p148, %p149
      %p151 = scmp.ne.s32.totalorder %s143, %s145
      %p152 = scmp.eq.s32.totalorder %s34, 3
      %p153 = por %p151, %p152
      %p154 = scmp.ne.s32.totalorder %s145, %s146
      %p155 = scmp.eq.s32.totalorder %s34, 0
      %p156 = por %p154, %p155
      %p157 = scmp.ne.s32.totalorder %s145, %s146
      %p158 = scmp.eq.s32.totalorder %s35, 3
      %p159 = por %p157, %p158
      %p161 = scmp.ne.s32.totalorder %s146, %s160
      %p162 = scmp.eq.s32.totalorder %s35, 0
      %p163 = por %p161, %p162
      %s165 = sadd.s32 %s164, 1
      %p168 = scmp.eq.s32.totalorder %s29, 3
      %p169 = scmp.ne.s32.totalorder %s164, %s166
      %p170 = scmp.eq.s32.totalorder %s29, 0
      %p171 = por %p169, %p170
      %p172 = scmp.ne.s32.totalorder %s164, %s166
      %p173 = scmp.eq.s32.totalorder %s34, 3
      %p174 = por %p172, %p173
      %p175 = scmp.ne.s32.totalorder %s166, %s167
      %p176 = scmp.eq.s32.totalorder %s34, 0
      %p177 = por %p175, %p176
      %p178 = scmp.ne.s32.totalorder %s166, %s167
      %p179 = scmp.eq.s32.totalorder %s35, 3
      %p180 = por %p178, %p179
      %p182 = scmp.ne.s32.totalorder %s167, %s181
      %p183 = scmp.eq.s32.totalorder %s35, 0
      %p184 = por %p182, %p183
      %s186 = sadd.s32 %s185, 1
      %p189 = scmp.eq.s32.totalorder %s29, 3
      %p190 = scmp.ne.s32.totalorder %s185, %s187
      %p191 = scmp.eq.s32.totalorder %s29, 0
      %p192 = por %p190, %p191
      %p193 = scmp.ne.s32.totalorder %s185, %s187
      %p194 = scmp.eq.s32.totalorder %s34, 3
      %p195 = por %p193, %p194
      %p196 = scmp.ne.s32.totalorder %s187, %s188
      %p197 = scmp.eq.s32.totalorder %s34, 0
      %p198 = por %p196, %p197
      %p199 = scmp.ne.s32.totalorder %s187, %s188
      %p200 = scmp.eq.s32.totalorder %s35, 3
      %p201 = por %p199, %p200
      %p203 = scmp.ne.s32.totalorder %s188, %s202
      %p204 = scmp.eq.s32.totalorder %s35, 0
      %p205 = por %p203, %p204
      %s207 = sadd.s32 %s206, 1
      %p210 = scmp.eq.s32.totalorder %s29, 3
      %p211 = scmp.ne.s32.totalorder %s206, %s208
      %p212 = scmp.eq.s32.totalorder %s29, 0
      %p213 = por %p211, %p212
      %p214 = scmp.ne.s32.totalorder %s206, %s208
      %p215 = scmp.eq.s32.totalorder %s34, 3
      %p216 = por %p214, %p215
      %p217 = scmp.ne.s32.totalorder %s208, %s209
      %p218 = scmp.eq.s32.totalorder %s34, 0
      %p219 = por %p217, %p218
      %p220 = scmp.ne.s32.totalorder %s208, %s209
      %p221 = scmp.eq.s32.totalorder %s35, 3
      %p222 = por %p220, %p221
      %p224 = scmp.ne.s32.totalorder %s209, %s223
      %p225 = scmp.eq.s32.totalorder %s35, 0
      %p226 = por %p224, %p225
      %s228 = sadd.s32 %s227, 1
      %p231 = scmp.eq.s32.totalorder %s29, 3
      %p232 = scmp.ne.s32.totalorder %s227, %s229
      %p233 = scmp.eq.s32.totalorder %s29, 0
      %p234 = por %p232, %p233
      %p235 = scmp.ne.s32.totalorder %s227, %s229
      %p236 = scmp.eq.s32.totalorder %s34, 3
      %p237 = por %p235, %p236
      %p238 = scmp.ne.s32.totalorder %s229, %s230
      %p239 = scmp.eq.s32.totalorder %s34, 0
      %p240 = por %p238, %p239
      %p241 = scmp.ne.s32.totalorder %s229, %s230
      %p242 = scmp.eq.s32.totalorder %s35, 3
      %p243 = por %p241, %p242
      %p245 = scmp.ne.s32.totalorder %s230, %s244
      %p246 = scmp.eq.s32.totalorder %s35, 0
      %p247 = por %p245, %p246
      %s249 = sadd.s32 %s248, 1
      %p252 = scmp.eq.s32.totalorder %s29, 3
      %p253 = scmp.ne.s32.totalorder %s248, %s250
      %p254 = scmp.eq.s32.totalorder %s29, 0
      %p255 = por %p253, %p254
      %p256 = scmp.ne.s32.totalorder %s248, %s250
      %p257 = scmp.eq.s32.totalorder %s34, 3
      %p258 = por %p256, %p257
      %p259 = scmp.ne.s32.totalorder %s250, %s251
      %p260 = scmp.eq.s32.totalorder %s34, 0
      %p261 = por %p259, %p260
      %p262 = scmp.ne.s32.totalorder %s250, %s251
      %p263 = scmp.eq.s32.totalorder %s35, 3
      %p264 = por %p262, %p263
      %p266 = scmp.ne.s32.totalorder %s251, %s265
      %p267 = scmp.eq.s32.totalorder %s35, 0
      %p268 = por %p266, %p267
      %s270 = sadd.s32 %s269, 1
      %p273 = scmp.eq.s32.totalorder %s29, 3
      %p274 = scmp.ne.s32.totalorder %s269, %s271
      %p275 = scmp.eq.s32.totalorder %s29, 0
      %p276 = por %p274, %p275
      %p277 = scmp.ne.s32.totalorder %s269, %s271
      %p278 = scmp.eq.s32.totalorder %s34, 3
      %p279 = por %p277, %p278
      %p280 = scmp.ne.s32.totalorder %s271, %s272
      %p281 = scmp.eq.s32.totalorder %s34, 0
      %p282 = por %p280, %p281
      %p283 = scmp.ne.s32.totalorder %s271, %s272
      %p284 = scmp.eq.s32.totalorder %s35, 3
      %p285 = por %p283, %p284
      %p287 = scmp.ne.s32.totalorder %s272, %s286
      %p288 = scmp.eq.s32.totalorder %s35, 0
      %p289 = por %p287, %p288
      %s291 = sadd.s32 %s290, 1
      %p294 = scmp.eq.s32.totalorder %s29, 3
      %p295 = scmp.ne.s32.totalorder %s290, %s292
      %p296 = scmp.eq.s32.totalorder %s29, 0
      %p297 = por %p295, %p296
      %p298 = scmp.ne.s32.totalorder %s290, %s292
      %p299 = scmp.eq.s32.totalorder %s34, 3
      %p300 = por %p298, %p299
      %p301 = scmp.ne.s32.totalorder %s292, %s293
      %p302 = scmp.eq.s32.totalorder %s34, 0
      %p303 = por %p301, %p302
      %p304 = scmp.ne.s32.totalorder %s292, %s293
      %p305 = scmp.eq.s32.totalorder %s35, 3
      %p306 = por %p304, %p305
      %p308 = scmp.ne.s32.totalorder %s293, %s307
      %p309 = scmp.eq.s32.totalorder %s35, 0
      %p310 = por %p308, %p309
      %s312 = sadd.s32 %s311, 1
      %p315 = scmp.eq.s32.totalorder %s29, 3
      %p316 = scmp.ne.s32.totalorder %s311, %s313
      %p317 = scmp.eq.s32.totalorder %s29, 0
      %p318 = por %p316, %p317
      %p319 = scmp.ne.s32.totalorder %s311, %s313
      %p320 = scmp.eq.s32.totalorder %s34, 3
      %p321 = por %p319, %p320
      %p322 = scmp.ne.s32.totalorder %s313, %s314
      %p323 = scmp.eq.s32.totalorder %s34, 0
      %p324 = por %p322, %p323
      %p325 = scmp.ne.s32.totalorder %s313, %s314
      %p326 = scmp.eq.s32.totalorder %s35, 3
      %p327 = por %p325, %p326
      %p329 = scmp.ne.s32.totalorder %s314, %s328
      %p330 = scmp.eq.s32.totalorder %s35, 0
      %p331 = por %p329, %p330
      %s333 = sadd.s32 %s332, 1
      %p336 = scmp.eq.s32.totalorder %s29, 3
      %p337 = scmp.ne.s32.totalorder %s332, %s334
      %p338 = scmp.eq.s32.totalorder %s29, 0
      %p339 = por %p337, %p338
      %p340 = scmp.ne.s32.totalorder %s332, %s334
      %p341 = scmp.eq.s32.totalorder %s34, 3
      %p342 = por %p340, %p341
      %p343 = scmp.ne.s32.totalorder %s334, %s335
      %p344 = scmp.eq.s32.totalorder %s34, 0
      %p345 = por %p343, %p344
      %p346 = scmp.ne.s32.totalorder %s334, %s335
      %p347 = scmp.eq.s32.totalorder %s35, 3
      %p348 = por %p346, %p347
      %p350 = scmp.ne.s32.totalorder %s335, %s349
      %p351 = scmp.eq.s32.totalorder %s35, 0
      %p352 = por %p350, %p351
      %s354 = sadd.s32 %s353, 1
      %p357 = scmp.eq.s32.totalorder %s29, 3
      %p358 = scmp.ne.s32.totalorder %s353, %s355
      %p359 = scmp.eq.s32.totalorder %s29, 0
      %p360 = por %p358, %p359
      %p361 = scmp.ne.s32.totalorder %s353, %s355
      %p362 = scmp.eq.s32.totalorder %s34, 3
      %p363 = por %p361, %p362
      %p364 = scmp.ne.s32.totalorder %s355, %s356
      %p365 = scmp.eq.s32.totalorder %s34, 0
      %p366 = por %p364, %p365
      %p367 = scmp.ne.s32.totalorder %s355, %s356
      %p368 = scmp.eq.s32.totalorder %s35, 3
      %p369 = por %p367, %p368
      %p371 = scmp.ne.s32.totalorder %s356, %s370
      %p372 = scmp.eq.s32.totalorder %s35, 0
      %p373 = por %p371, %p372
      %s375 = sadd.s32 %s374, 1
      %p378 = scmp.eq.s32.totalorder %s29, 3
      %p379 = scmp.ne.s32.totalorder %s374, %s376
      %p380 = scmp.eq.s32.totalorder %s29, 0
      %p381 = por %p379, %p380
      %p382 = scmp.ne.s32.totalorder %s374, %s376
      %p383 = scmp.eq.s32.totalorder %s34, 3
      %p384 = por %p382, %p383
      %p385 = scmp.ne.s32.totalorder %s376, %s377
      %p386 = scmp.eq.s32.totalorder %s34, 0
      %p387 = por %p385, %p386
      %p388 = scmp.ne.s32.totalorder %s376, %s377
      %p389 = scmp.eq.s32.totalorder %s35, 3
      %p390 = por %p388, %p389
      %p392 = scmp.ne.s32.totalorder %s377, %s391
      %p393 = scmp.eq.s32.totalorder %s35, 0
      %p394 = por %p392, %p393
      %s396 = sadd.s32 %s395, 1
      %p399 = scmp.eq.s32.totalorder %s29, 3
      %p400 = scmp.ne.s32.totalorder %s395, %s397
      %p401 = scmp.eq.s32.totalorder %s29, 0
      %p402 = por %p400, %p401
      %p403 = scmp.ne.s32.totalorder %s395, %s397
      %p404 = scmp.eq.s32.totalorder %s34, 3
      %p405 = por %p403, %p404
      %p406 = scmp.ne.s32.totalorder %s397, %s398
      %p407 = scmp.eq.s32.totalorder %s34, 0
      %p408 = por %p406, %p407
      %p409 = scmp.ne.s32.totalorder %s397, %s398
      %p410 = scmp.eq.s32.totalorder %s35, 3
      %p411 = por %p409, %p410
      %p413 = scmp.ne.s32.totalorder %s398, %s412
      %p414 = scmp.eq.s32.totalorder %s35, 0
      %p415 = por %p413, %p414
      %s417 = sadd.s32 %s416, 1
      %p420 = scmp.eq.s32.totalorder %s29, 3
      %p421 = scmp.ne.s32.totalorder %s416, %s418
      %p422 = scmp.eq.s32.totalorder %s29, 0
      %p423 = por %p421, %p422
      %p424 = scmp.ne.s32.totalorder %s416, %s418
      %p425 = scmp.eq.s32.totalorder %s34, 3
      %p426 = por %p424, %p425
      %p427 = scmp.ne.s32.totalorder %s418, %s419
      %p428 = scmp.eq.s32.totalorder %s34, 0
      %p429 = por %p427, %p428
      %p430 = scmp.ne.s32.totalorder %s418, %s419
      %p431 = scmp.eq.s32.totalorder %s35, 3
      %p432 = por %p430, %p431
      %p434 = scmp.ne.s32.totalorder %s419, %s433
      %p435 = scmp.eq.s32.totalorder %s35, 0
      %p436 = por %p434, %p435
      %s437 = ssub.s32 %s36, %s48
      %p438 = scmp.eq.s32.totalorder %s437, 0
      %s440 = sadd.s32 %s439, 1
      %s441 = scalar_select %p438, %s439, %s440
      %p444 = pneg %p438
      %p445 = scmp.eq.s32.totalorder %s29, 3
      %p446 = por %p444, %p445
      %p447 = scmp.ne.s32.totalorder %s439, %s442
      %p448 = scmp.eq.s32.totalorder %s29, 0
      %p449 = por %p447, %p448
      %p450 = scmp.ne.s32.totalorder %s439, %s442
      %p451 = scmp.eq.s32.totalorder %s34, 3
      %p452 = por %p450, %p451
      %p453 = scmp.ne.s32.totalorder %s442, %s443
      %p454 = scmp.eq.s32.totalorder %s34, 0
      %p455 = por %p453, %p454
      %p456 = scmp.ne.s32.totalorder %s442, %s443
      %p457 = scmp.eq.s32.totalorder %s35, 3
      %p458 = por %p456, %p457
      %p460 = scmp.ne.s32.totalorder %s443, %s459
      %p461 = scmp.eq.s32.totalorder %s35, 0
      %p462 = por %p460, %p461
      %p463 = scmp.le.s32.totalorder 1, %s29
      %p464 = scmp.lt.s32.totalorder %s29, 5
      %p465 = pnand %p463, %p464
      %p466 = pneg %p465
      // Predicated region
      $region9: #{tpu_custom_call.1} parent=5 // pred_check
        _
      $region10: #{tpu_custom_call.1} parent=5 // pred_check_branch
        %468 = sbr.rel (%p465) target = $region12
      $region11: #{tpu_custom_call.1} parent=5 // pred_region
        %s469 = ssub.s32 %s29, 1
        // Predicated region
        $region13: #{tpu_custom_call.1} parent=11 // pred_check
          %p470 = pneg %p114
        $region14: #{tpu_custom_call.1} parent=11 // pred_check_branch
          %472 = sbr.rel (%p470) target = $region16
        $region15: #{tpu_custom_call.1} parent=11 // pred_region
          _
        $region16: #{tpu_custom_call.1} parent=11 // pred_fallthru
          _
        // Predicated region
        $region17: #{tpu_custom_call.1} parent=11 // pred_check
          %p473 = pneg %p135
        $region18: #{tpu_custom_call.1} parent=11 // pred_check_branch
          %475 = sbr.rel (%p473) target = $region20
        $region19: #{tpu_custom_call.1} parent=11 // pred_region
          _
        $region20: #{tpu_custom_call.1} parent=11 // pred_fallthru
          _
        // Predicated region
        $region21: #{tpu_custom_call.1} parent=11 // pred_check
          %p476 = pneg %p156
        $region22: #{tpu_custom_call.1} parent=11 // pred_check_branch
          %478 = sbr.rel (%p476) target = $region24
        $region23: #{tpu_custom_call.1} parent=11 // pred_region
          _
        $region24: #{tpu_custom_call.1} parent=11 // pred_fallthru
          _
        // Predicated region
        $region25: #{tpu_custom_call.1} parent=11 // pred_check
          %p479 = pneg %p177
        $region26: #{tpu_custom_call.1} parent=11 // pred_check_branch
          %481 = sbr.rel (%p479) target = $region28
        $region27: #{tpu_custom_call.1} parent=11 // pred_region
          %s483 = ssub.s32 16, 16
          %484 = vsyncadd [#allocation5], %s483
          %s486 = sshll.u32 [#allocation4], 4
          %s487 = int_to_ptr.vmem [resolvable:$true] %s486
          %489 = dma.hbm_to_vmem [thread:$0]  %s5, 16, %s487, [#allocation5]
        $region28: #{tpu_custom_call.1} parent=11 // pred_fallthru
          _
        // Predicated region
        $region29: #{tpu_custom_call.1} parent=11 // pred_check
          %p490 = pneg %p198
        $region30: #{tpu_custom_call.1} parent=11 // pred_check_branch
          %492 = sbr.rel (%p490) target = $region32
        $region31: #{tpu_custom_call.1} parent=11 // pred_region
          _
        $region32: #{tpu_custom_call.1} parent=11 // pred_fallthru
          _
        // Predicated region
        $region33: #{tpu_custom_call.1} parent=11 // pred_check
          %p493 = pneg %p219
        $region34: #{tpu_custom_call.1} parent=11 // pred_check_branch
          %495 = sbr.rel (%p493) target = $region36
        $region35: #{tpu_custom_call.1} parent=11 // pred_region
          %s497 = ssub.s32 16, 16
          %498 = vsyncadd [#allocation8], %s497
          %s500 = sshll.u32 [#allocation7], 4
          %s501 = int_to_ptr.vmem [resolvable:$true] %s500
          %503 = dma.hbm_to_vmem [thread:$0]  %s7, 16, %s501, [#allocation8]
        $region36: #{tpu_custom_call.1} parent=11 // pred_fallthru
          _
        // Predicated region
        $region37: #{tpu_custom_call.1} parent=11 // pred_check
          %p504 = pneg %p240
        $region38: #{tpu_custom_call.1} parent=11 // pred_check_branch
          %506 = sbr.rel (%p504) target = $region40
        $region39: #{tpu_custom_call.1} parent=11 // pred_region
          _
        $region40: #{tpu_custom_call.1} parent=11 // pred_fallthru
          _
        // Predicated region
        $region41: #{tpu_custom_call.1} parent=11 // pred_check
          %p507 = pneg %p261
        $region42: #{tpu_custom_call.1} parent=11 // pred_check_branch
          %509 = sbr.rel (%p507) target = $region44
        $region43: #{tpu_custom_call.1} parent=11 // pred_region
          _
        $region44: #{tpu_custom_call.1} parent=11 // pred_fallthru
          _
        // Predicated region
        $region45: #{tpu_custom_call.1} parent=11 // pred_check
          %p510 = pneg %p282
        $region46: #{tpu_custom_call.1} parent=11 // pred_check_branch
          %512 = sbr.rel (%p510) target = $region48
        $region47: #{tpu_custom_call.1} parent=11 // pred_region
          _
        $region48: #{tpu_custom_call.1} parent=11 // pred_fallthru
          _
        // Predicated region
        $region49: #{tpu_custom_call.1} parent=11 // pred_check
          %p513 = pneg %p303
        $region50: #{tpu_custom_call.1} parent=11 // pred_check_branch
          %515 = sbr.rel (%p513) target = $region52
        $region51: #{tpu_custom_call.1} parent=11 // pred_region
          _
        $region52: #{tpu_custom_call.1} parent=11 // pred_fallthru
          _
        // Predicated region
        $region53: #{tpu_custom_call.1} parent=11 // pred_check
          %p516 = pneg %p324
        $region54: #{tpu_custom_call.1} parent=11 // pred_check_branch
          %518 = sbr.rel (%p516) target = $region56
        $region55: #{tpu_custom_call.1} parent=11 // pred_region
          _
        $region56: #{tpu_custom_call.1} parent=11 // pred_fallthru
          _
        // Predicated region
        $region57: #{tpu_custom_call.1} parent=11 // pred_check
          %p519 = pneg %p345
        $region58: #{tpu_custom_call.1} parent=11 // pred_check_branch
          %521 = sbr.rel (%p519) target = $region60
        $region59: #{tpu_custom_call.1} parent=11 // pred_region
          _
        $region60: #{tpu_custom_call.1} parent=11 // pred_fallthru
          _
        // Predicated region
        $region61: #{tpu_custom_call.1} parent=11 // pred_check
          %p522 = pneg %p366
        $region62: #{tpu_custom_call.1} parent=11 // pred_check_branch
          %524 = sbr.rel (%p522) target = $region64
        $region63: #{tpu_custom_call.1} parent=11 // pred_region
          _
        $region64: #{tpu_custom_call.1} parent=11 // pred_fallthru
          _
        // Predicated region
        $region65: #{tpu_custom_call.1} parent=11 // pred_check
          %p525 = pneg %p387
        $region66: #{tpu_custom_call.1} parent=11 // pred_check_branch
          %527 = sbr.rel (%p525) target = $region68
        $region67: #{tpu_custom_call.1} parent=11 // pred_region
          _
        $region68: #{tpu_custom_call.1} parent=11 // pred_fallthru
          _
        // Predicated region
        $region69: #{tpu_custom_call.1} parent=11 // pred_check
          %p528 = pneg %p408
        $region70: #{tpu_custom_call.1} parent=11 // pred_check_branch
          %530 = sbr.rel (%p528) target = $region72
        $region71: #{tpu_custom_call.1} parent=11 // pred_region
          _
        $region72: #{tpu_custom_call.1} parent=11 // pred_fallthru
          _
        // Predicated region
        $region73: #{tpu_custom_call.1} parent=11 // pred_check
          %p531 = pneg %p429
        $region74: #{tpu_custom_call.1} parent=11 // pred_check_branch
          %533 = sbr.rel (%p531) target = $region76
        $region75: #{tpu_custom_call.1} parent=11 // pred_region
          _
        $region76: #{tpu_custom_call.1} parent=11 // pred_fallthru
          _
      $region12: #{tpu_custom_call.1} parent=5 // pred_fallthru
        _
      %p534 = scmp.lt.s32.totalorder %s29, 4
      // Predicated region
      $region77: #{tpu_custom_call.1} parent=5 // pred_check
        %p535 = pneg %p534
      $region78: #{tpu_custom_call.1} parent=5 // pred_check_branch
        %537 = sbr.rel (%p535) target = $region80
      $region79: #{tpu_custom_call.1} parent=5 // pred_region
        // Predicated region
        $region81: #{tpu_custom_call.1} parent=79 // pred_check
          %p538 = pneg %p61
        $region82: #{tpu_custom_call.1} parent=79 // pred_check_branch
          %540 = sbr.rel (%p538) target = $region84
        $region83: #{tpu_custom_call.1} parent=79 // pred_region
          %p541 = scmp.lt.s32.totalorder %s36, 1
          %s542 = scalar_select %p541, %s36, 1
          %s543 = smul.addr %s542, 8
          %s544 = scalar_lea.vmem %s0, %s543
        $region84: #{tpu_custom_call.1} parent=79 // pred_fallthru
          _
        // Predicated region
        $region85: #{tpu_custom_call.1} parent=79 // pred_check
          %p545 = pneg %p87
        $region86: #{tpu_custom_call.1} parent=79 // pred_check_branch
          %547 = sbr.rel (%p545) target = $region88
        $region87: #{tpu_custom_call.1} parent=79 // pred_region
          %p548 = scmp.lt.s32.totalorder %s36, 1
          %s549 = scalar_select %p548, %s36, 1
          %s550 = smul.addr %s549, 2
          %s551 = smul.addr %s550, 8
          %s552 = scalar_lea.vmem %s1, %s551
        $region88: #{tpu_custom_call.1} parent=79 // pred_fallthru
          _
      $region80: #{tpu_custom_call.1} parent=5 // pred_fallthru
        _
      %p553 = scmp.le.s32.totalorder 1, %s29
      %p554 = scmp.lt.s32.totalorder %s29, 5
      %p555 = pnand %p553, %p554
      %p556 = pneg %p555
      // Predicated region
      $region89: #{tpu_custom_call.1} parent=5 // pred_check
        _
      $region90: #{tpu_custom_call.1} parent=5 // pred_check_branch
        %558 = sbr.rel (%p555) target = $region92
      $region91: #{tpu_custom_call.1} parent=5 // pred_region
        %s559 = ssub.s32 %s29, 1
        // Predicated region
        $region93: #{tpu_custom_call.1} parent=91 // pred_check
          %p560 = pneg %p177
        $region94: #{tpu_custom_call.1} parent=91 // pred_check_branch
          %562 = sbr.rel (%p560) target = $region96
        $region95: #{tpu_custom_call.1} parent=91 // pred_region
          %563 = dma.done [#allocation5], 16
        $region96: #{tpu_custom_call.1} parent=91 // pred_fallthru
          _
        // Predicated region
        $region97: #{tpu_custom_call.1} parent=91 // pred_check
          %p564 = pneg %p219
        $region98: #{tpu_custom_call.1} parent=91 // pred_check_branch
          %566 = sbr.rel (%p564) target = $region100
        $region99: #{tpu_custom_call.1} parent=91 // pred_region
          %567 = dma.done [#allocation8], 16
        $region100: #{tpu_custom_call.1} parent=91 // pred_fallthru
          _
        %p568 = scmp.lt.s32.totalorder %s38, 1
        %s569 = scalar_select %p568, %s38, 1
        %s570 = smul.addr %s569, 8
        %s571 = scalar_lea.vmem %s0, %s570
        %p572 = pneg %p67
        %p573 = pneg %p64
        %p574 = scmp.lt.s32.totalorder %s38, 1
        %s575 = scalar_select %p574, %s38, 1
        %s576 = smul.addr %s575, 2
        %s577 = smul.addr %s576, 8
        %s578 = scalar_lea.vmem %s1, %s577
        %p579 = pneg %p93
        %p580 = pneg %p90
        %p581 = pneg %p114
        %p582 = pneg %p111
        %p583 = pneg %p135
        %p584 = pneg %p132
        %p585 = pneg %p156
        %p586 = pneg %p153
        %p587 = pneg %p177
        %p588 = pneg %p174
        %p589 = pneg %p198
        %p590 = pneg %p195
        %p591 = pneg %p219
        %p592 = pneg %p216
        %p593 = pneg %p240
        %p594 = pneg %p237
        %p595 = pneg %p261
        %p596 = pneg %p258
        %p597 = pneg %p282
        %p598 = pneg %p279
        %p599 = pneg %p303
        %p600 = pneg %p300
        %p601 = pneg %p324
        %p602 = pneg %p321
        %p603 = pneg %p345
        %p604 = pneg %p342
        %p605 = pneg %p366
        %p606 = pneg %p363
        %p607 = pneg %p387
        %p608 = pneg %p384
        %p609 = pneg %p408
        %p610 = pneg %p405
        %p611 = pneg %p429
        %p612 = pneg %p426
        %p613 = pneg %p455
        %p614 = pneg %p452
        %s615 = sand.u32 %s442, 1
        %s616 = scalar_lea.sflag [#allocation6], %s615
        %s617 = sand.u32 %s442, 1
        %s618 = smul.addr %s617, 8
        %s619 = scalar_lea.vmem [#allocation9], %s618
        %p620 = scmp.lt.s32.totalorder %s38, 1
        %s621 = scalar_select %p620, %s38, 1
        %s622 = smul.addr %s621, 8
        %s623 = scalar_lea.vmem %s0, %s622
        %p624 = scmp.lt.s32.totalorder %s38, 1
        %s625 = scalar_select %p624, %s38, 1
        %s626 = smul.addr %s625, 2
        %s627 = smul.addr %s626, 8
        %s628 = scalar_lea.vmem %s1, %s627
        %p630 = scmp.eq.s32.totalorder %s39, 0
        // Predicated region
        $region101: #{tpu_custom_call.1} parent=91 // pred_check
          %p631 = pneg %p630
        $region102: #{tpu_custom_call.1} parent=91 // pred_check_branch
          %633 = sbr.rel (%p631) target = $region104
        $region103: #{tpu_custom_call.1} parent=91 // pred_region
          %v634 = vld [vmem:[%s623] sm:$0xff]
          %vm635 = vcmask 261120
          %636 = vst.msk [vmem:[%s619] sm:$0xff] %vm635, %v634
          %v637 = vld [vmem:[%s628] sm:$0xff]
          %v638 = vld [vmem:[%s628 + $0x8] sm:$0xf]
          %v639 = vpack.c.bf16 %v638, %v637
          %v640 = vld [vmem:[%s10] sm:$0xf]
          %v641 = vld [vmem:[%s10 + $0x4] sm:$0xf]
          %v642 = vld [vmem:[%s10 + $0x8] sm:$0xf]
          %v643 = vld [vmem:[%s10 + $0xc] sm:$0xf]
          %v644 = vld [vmem:[%s11] sm:$0x1]
          %v646 = vlaneseq
          %v647 = vshrl.u32 %v646, 7
          %v648 = vsub.s32 0, %v647
          %v649 = vrot.slane %v644, %v648
          %v655 = vunpack.c.l.b16 %v640
          %v656 = vunpack.c.l.b16 %v641
          %v657 = vunpack.c.l.b16 %v642
          %v658 = vunpack.c.l.b16 %v643
          %v659 = vpack.c.b16 %v656, %v655
          %v660 = vpack.c.b16 %v658, %v657
          %v664 = vsel %vm635, %v639, 0
          %666 = vmatprep.subr.bf16.mxu0 0
          %667 = vmatpush1.bf16.msra.mxu0 %v659
          %668 = vmatprep.subr.bf16.mxu0 0
          %669 = vmatpush1.bf16.msra.mxu0 %v660
          %670 = vmatprep.subr.bf16.mxu0 0
          %671 = vmatpush1.bf16.msra.mxu0 0
          %672 = vmatprep.subr.bf16.mxu0 0
          %673 = vmatpush1.bf16.msra.mxu0 0
          %674 = vmatprep.subr.bf16.mxu0 0
          %675 = vmatpush1.bf16.msra.mxu0 0
          %676 = vmatprep.subr.bf16.mxu0 0
          %677 = vmatpush1.bf16.msra.mxu0 0
          %678 = vmatprep.subr.bf16.mxu0 0
          %679 = vmatpush1.bf16.msra.mxu0 0
          %680 = vmatprep.subr.bf16.mxu0 0
          %681 = vmatpush1.bf16.msra.mxu0 0
          %682 = vmatprep.subr.bf16.mxu0 0
          %683 = vmatpush1.bf16.msra.mxu0 0
          %684 = vmatprep.subr.bf16.mxu0 0
          %685 = vmatpush1.bf16.msra.mxu0 0
          %686 = vmatprep.subr.bf16.mxu0 0
          %687 = vmatpush1.bf16.msra.mxu0 0
          %688 = vmatprep.subr.bf16.mxu0 0
          %689 = vmatpush1.bf16.msra.mxu0 0
          %690 = vmatprep.subr.bf16.mxu0 0
          %691 = vmatpush1.bf16.msra.mxu0 0
          %692 = vmatprep.subr.bf16.mxu0 0
          %693 = vmatpush1.bf16.msra.mxu0 0
          %694 = vmatprep.subr.bf16.mxu0 0
          %695 = vmatpush1.bf16.msra.mxu0 0
          %696 = vmatprep.subr.bf16.mxu0 0
          %697 = vmatpush1.bf16.msra.mxu0 0
          %698 = vmatprep.mubr.bf16.mxu0 0
          %699 = vmatmul.mubr.bf16.gmra.mrb[0].mxu0 %v664
          %v700 = vpop.f32.mrb[0].mxu0
          %v701 = vadd.f32 %v649, %v700
          %v702 = vpop.f32.mrb[0].mxu0
          %v703 = vpop.f32.mrb[0].mxu0
          %v704 = vadd.f32 %v649, %v703
          %v705 = vpop.f32.mrb[0].mxu0
          %706 = vdwg.mxu0
          %v707 = vpack.c.bf16 %v704, %v701
          %v709 = vunpack.c.l.b16 %v707
          %v710 = vunpack.c.h.b16 %v707
          %v711 = vpack.c.b16 %v709, %v709
          %v712 = vpack.c.b16 %v710, %v710
          %vm715 = vcmask 257024
          %716 = vst.msk [vmem:[#allocation2] sm:$0xf] %vm715, %v711
          %vm717 = vcmask 254976
          %718 = vst.msk [vmem:[#allocation2 + $0x4] sm:$0x3] %vm717, %v712
          %719 = vrot.lane.b32.xlu0 %v711, 96
          %v720 = vpop.permute.xlu0 %719
          %721 = vrot.lane.b32.xlu0 %v712, 96
          %v722 = vpop.permute.xlu0 %721
          %725 = vst.msk [vmem:[#allocation3] sm:$0xf] %vm715, %v720
          %726 = vst.msk [vmem:[#allocation3 + $0x4] sm:$0x3] %vm717, %v722
        $region104: #{tpu_custom_call.1} parent=91 // pred_fallthru
          _
        %v727 = vld [vmem:[%s2] sm:$0x1]
        %v729 = vlaneseq
        %v730 = vshrl.u32 %v729, 7
        %v731 = vsub.s32 0, %v730
        %v732 = vrot.slane %v727, %v731
        %v734 = vld [vmem:[%s3] sm:$0x1]
        %v736 = vlaneseq
        %v737 = vshrl.u32 %v736, 7
        %v738 = vsub.s32 0, %v737
        %v739 = vrot.slane %v734, %v738
        %v741 = vld [vmem:[%s619] sm:$0xff]
        %vm742 = vcmask 261120
        %v743 = vsel %vm742, %v741, 0.0
        %744 = vadd.xlane.f32.xlu0 %v743
        %v745 = vpop.xlane.xlu0 %744
        %v746 = vrcp.pop 32.0
        %v747 = vmul.f32 %v745, %v746
        %v748 = vsub.f32 %v741, %v747
        %v749 = vmul.f32 %v748, %v748
        %v750 = vsel %vm742, %v749, 0.0
        %751 = vadd.xlane.f32.xlu0 %v750
        %v752 = vpop.xlane.xlu0 %751
        %v753 = vmul.f32 %v752, %v746
        %v754 = vadd.f32 %v753, 1e-05
        %v755 = vrsqrt.pop %v754
        %v756 = vmul.f32 %v748, %v755
        %v757 = vmul.f32 %v756, %v732
        %v758 = vadd.f32 %v757, %v739
        %v759 = vpack.c.bf16 %v758, %v758
        %v760 = vld [vmem:[%s4] sm:$0xf]
        %v761 = vld [vmem:[%s4 + $0x4] sm:$0xf]
        %v762 = vld [vmem:[%s4 + $0x8] sm:$0xf]
        %v763 = vld [vmem:[%s4 + $0xc] sm:$0xf]
        %v764 = vld [vmem:[#allocation4] sm:$0x1]
        %v766 = vlaneseq
        %v767 = vshrl.u32 %v766, 7
        %v768 = vsub.s32 0, %v767
        %v769 = vrot.slane %v764, %v768
        %v775 = vunpack.c.l.b16 %v760
        %v776 = vunpack.c.l.b16 %v761
        %v777 = vunpack.c.l.b16 %v762
        %v778 = vunpack.c.l.b16 %v763
        %v779 = vpack.c.b16 %v776, %v775
        %v780 = vpack.c.b16 %v778, %v777
        %v784 = vsel %vm742, %v759, 0
        %786 = vmatprep.subr.bf16.mxu0 0
        %787 = vmatpush1.bf16.msra.mxu0 %v779
        %788 = vmatprep.subr.bf16.mxu0 0
        %789 = vmatpush1.bf16.msra.mxu0 %v780
        %790 = vmatprep.subr.bf16.mxu0 0
        %791 = vmatpush1.bf16.msra.mxu0 0
        %792 = vmatprep.subr.bf16.mxu0 0
        %793 = vmatpush1.bf16.msra.mxu0 0
        %794 = vmatprep.subr.bf16.mxu0 0
        %795 = vmatpush1.bf16.msra.mxu0 0
        %796 = vmatprep.subr.bf16.mxu0 0
        %797 = vmatpush1.bf16.msra.mxu0 0
        %798 = vmatprep.subr.bf16.mxu0 0
        %799 = vmatpush1.bf16.msra.mxu0 0
        %800 = vmatprep.subr.bf16.mxu0 0
        %801 = vmatpush1.bf16.msra.mxu0 0
        %802 = vmatprep.subr.bf16.mxu0 0
        %803 = vmatpush1.bf16.msra.mxu0 0
        %804 = vmatprep.subr.bf16.mxu0 0
        %805 = vmatpush1.bf16.msra.mxu0 0
        %806 = vmatprep.subr.bf16.mxu0 0
        %807 = vmatpush1.bf16.msra.mxu0 0
        %808 = vmatprep.subr.bf16.mxu0 0
        %809 = vmatpush1.bf16.msra.mxu0 0
        %810 = vmatprep.subr.bf16.mxu0 0
        %811 = vmatpush1.bf16.msra.mxu0 0
        %812 = vmatprep.subr.bf16.mxu0 0
        %813 = vmatpush1.bf16.msra.mxu0 0
        %814 = vmatprep.subr.bf16.mxu0 0
        %815 = vmatpush1.bf16.msra.mxu0 0
        %816 = vmatprep.subr.bf16.mxu0 0
        %817 = vmatpush1.bf16.msra.mxu0 0
        %818 = vmatprep.mubr.bf16.mxu0 0
        %819 = vmatmul.mubr.bf16.gmra.mrb[0].mxu0 %v784
        %v820 = vpop.f32.mrb[0].mxu0
        %v821 = vadd.f32 %v769, %v820
        %v822 = vpop.f32.mrb[0].mxu0
        %v823 = vpop.f32.mrb[0].mxu0
        %v824 = vpop.f32.mrb[0].mxu0
        %825 = vdwg.mxu0
        %v826 = vpack.c.bf16 %v821, %v821
        %828 = vrot.lane.b32.xlu0 %v826, 96
        %v829 = vpop.permute.xlu0 %828
        %vm830 = vcmask 64512
        %v832 = vsel %vm830, %v826, 0
        %v835 = vsel %vm830, %v829, 0
        %837 = vmatprep.subr.bf16.mxu0 0
        %838 = vmatpush1.bf16.xpose.msra.mxu0 %v835
        %839 = vmatprep.subr.bf16.mxu0 0
        %840 = vmatpush1.bf16.xpose.msra.mxu0 0
        %841 = vmatprep.subr.bf16.mxu0 0
        %842 = vmatpush1.bf16.xpose.msra.mxu0 0
        %843 = vmatprep.subr.bf16.mxu0 0
        %844 = vmatpush1.bf16.xpose.msra.mxu0 0
        %845 = vmatprep.subr.bf16.mxu0 0
        %846 = vmatpush1.bf16.xpose.msra.mxu0 0
        %847 = vmatprep.subr.bf16.mxu0 0
        %848 = vmatpush1.bf16.xpose.msra.mxu0 0
        %849 = vmatprep.subr.bf16.mxu0 0
        %850 = vmatpush1.bf16.xpose.msra.mxu0 0
        %851 = vmatprep.subr.bf16.mxu0 0
        %852 = vmatpush1.bf16.xpose.msra.mxu0 0
        %853 = vmatprep.subr.bf16.mxu0 0
        %854 = vmatpush1.bf16.xpose.msra.mxu0 0
        %855 = vmatprep.subr.bf16.mxu0 0
        %856 = vmatpush1.bf16.xpose.msra.mxu0 0
        %857 = vmatprep.subr.bf16.mxu0 0
        %858 = vmatpush1.bf16.xpose.msra.mxu0 0
        %859 = vmatprep.subr.bf16.mxu0 0
        %860 = vmatpush1.bf16.xpose.msra.mxu0 0
        %861 = vmatprep.subr.bf16.mxu0 0
        %862 = vmatpush1.bf16.xpose.msra.mxu0 0
        %863 = vmatprep.subr.bf16.mxu0 0
        %864 = vmatpush1.bf16.xpose.msra.mxu0 0
        %865 = vmatprep.subr.bf16.mxu0 0
        %866 = vmatpush1.bf16.xpose.msra.mxu0 0
        %867 = vmatprep.subr.bf16.mxu0 0
        %868 = vmatpush1.bf16.xpose.msra.mxu0 0
        %869 = vmatprep.mubr.bf16.mxu0 0
        %870 = vmatmul.mubr.bf16.gmra.mrb[0].mxu0 %v832
        %v871 = vpop.f32.mrb[0].mxu0
        %v872 = vadd.f32 0.0, %v871
        %v873 = vpop.f32.mrb[0].mxu0
        %v874 = vpop.f32.mrb[0].mxu0
        %v875 = vpop.f32.mrb[0].mxu0
        %876 = vdwg.mxu0
        %v877 = vmul.f32 %v872, 0.35355338
        %v878 = vsel %vm830, %v877, -inf
        %879 = vmax.xlane.f32.xlu0 %v878
        %v880 = vpop.xlane.xlu0 %879
        %v881 = vsub.f32 %v877, %v880
        %v882 = vmul.f32 %v881, 1.442695
        %v883 = vpow.pop %v882
        %v884 = vsel %vm830, %v883, 0.0
        %885 = vadd.xlane.f32.xlu0 %v884
        %v886 = vpop.xlane.xlu0 %885
        %v887 = vrcp.pop %v886
        %v888 = vmul.f32 %v883, %v887
        %v889 = vpack.c.bf16 %v888, %v888
        %890 = vrot.lane.b32.xlu0 %v826, 64
        %v891 = vpop.permute.xlu0 %890
        %v893 = vsel %vm830, %v889, 0
        %vm895 = vcmask 1043456
        %v897 = vsel %vm895, %v891, 0
        %899 = vmatprep.subr.bf16.mxu0 0
        %900 = vmatpush1.bf16.msra.mxu0 %v897
        %901 = vmatprep.subr.bf16.mxu0 0
        %902 = vmatpush1.bf16.msra.mxu0 0
        %903 = vmatprep.subr.bf16.mxu0 0
        %904 = vmatpush1.bf16.msra.mxu0 0
        %905 = vmatprep.subr.bf16.mxu0 0
        %906 = vmatpush1.bf16.msra.mxu0 0
        %907 = vmatprep.subr.bf16.mxu0 0
        %908 = vmatpush1.bf16.msra.mxu0 0
        %909 = vmatprep.subr.bf16.mxu0 0
        %910 = vmatpush1.bf16.msra.mxu0 0
        %911 = vmatprep.subr.bf16.mxu0 0
        %912 = vmatpush1.bf16.msra.mxu0 0
        %913 = vmatprep.subr.bf16.mxu0 0
        %914 = vmatpush1.bf16.msra.mxu0 0
        %915 = vmatprep.subr.bf16.mxu0 0
        %916 = vmatpush1.bf16.msra.mxu0 0
        %917 = vmatprep.subr.bf16.mxu0 0
        %918 = vmatpush1.bf16.msra.mxu0 0
        %919 = vmatprep.subr.bf16.mxu0 0
        %920 = vmatpush1.bf16.msra.mxu0 0
        %921 = vmatprep.subr.bf16.mxu0 0
        %922 = vmatpush1.bf16.msra.mxu0 0
        %923 = vmatprep.subr.bf16.mxu0 0
        %924 = vmatpush1.bf16.msra.mxu0 0
        %925 = vmatprep.subr.bf16.mxu0 0
        %926 = vmatpush1.bf16.msra.mxu0 0
        %927 = vmatprep.subr.bf16.mxu0 0
        %928 = vmatpush1.bf16.msra.mxu0 0
        %929 = vmatprep.subr.bf16.mxu0 0
        %930 = vmatpush1.bf16.msra.mxu0 0
        %931 = vmatprep.mubr.bf16.mxu0 0
        %932 = vmatmul.mubr.bf16.gmra.mrb[0].mxu0 %v893
        %v933 = vpop.f32.mrb[0].mxu0
        %v934 = vadd.f32 0.0, %v933
        %v935 = vpop.f32.mrb[0].mxu0
        %v936 = vpop.f32.mrb[0].mxu0
        %v937 = vpop.f32.mrb[0].mxu0
        %938 = vdwg.mxu0
        %939 = vrot.lane.b32.xlu0 %v826, 120
        %v940 = vpop.permute.xlu0 %939
        %941 = vrot.lane.b32.xlu0 %v826, 88
        %v942 = vpop.permute.xlu0 %941
        %v944 = vsel %vm830, %v940, 0
        %v947 = vsel %vm830, %v942, 0
        %949 = vmatprep.subr.bf16.mxu0 0
        %950 = vmatpush1.bf16.xpose.msra.mxu0 %v947
        %951 = vmatprep.subr.bf16.mxu0 0
        %952 = vmatpush1.bf16.xpose.msra.mxu0 0
        %953 = vmatprep.subr.bf16.mxu0 0
        %954 = vmatpush1.bf16.xpose.msra.mxu0 0
        %955 = vmatprep.subr.bf16.mxu0 0
        %956 = vmatpush1.bf16.xpose.msra.mxu0 0
        %957 = vmatprep.subr.bf16.mxu0 0
        %958 = vmatpush1.bf16.xpose.msra.mxu0 0
        %959 = vmatprep.subr.bf16.mxu0 0
        %960 = vmatpush1.bf16.xpose.msra.mxu0 0
        %961 = vmatprep.subr.bf16.mxu0 0
        %962 = vmatpush1.bf16.xpose.msra.mxu0 0
        %963 = vmatprep.subr.bf16.mxu0 0
        %964 = vmatpush1.bf16.xpose.msra.mxu0 0
        %965 = vmatprep.subr.bf16.mxu0 0
        %966 = vmatpush1.bf16.xpose.msra.mxu0 0
        %967 = vmatprep.subr.bf16.mxu0 0
        %968 = vmatpush1.bf16.xpose.msra.mxu0 0
        %969 = vmatprep.subr.bf16.mxu0 0
        %970 = vmatpush1.bf16.xpose.msra.mxu0 0
        %971 = vmatprep.subr.bf16.mxu0 0
        %972 = vmatpush1.bf16.xpose.msra.mxu0 0
        %973 = vmatprep.subr.bf16.mxu0 0
        %974 = vmatpush1.bf16.xpose.msra.mxu0 0
        %975 = vmatprep.subr.bf16.mxu0 0
        %976 = vmatpush1.bf16.xpose.msra.mxu0 0
        %977 = vmatprep.subr.bf16.mxu0 0
        %978 = vmatpush1.bf16.xpose.msra.mxu0 0
        %979 = vmatprep.subr.bf16.mxu0 0
        %980 = vmatpush1.bf16.xpose.msra.mxu0 0
        %981 = vmatprep.mubr.bf16.mxu0 0
        %982 = vmatmul.mubr.bf16.gmra.mrb[0].mxu0 %v944
        %v983 = vpop.f32.mrb[0].mxu0
        %v984 = vadd.f32 0.0, %v983
        %v985 = vpop.f32.mrb[0].mxu0
        %v986 = vpop.f32.mrb[0].mxu0
        %v987 = vpop.f32.mrb[0].mxu0
        %988 = vdwg.mxu0
        %v989 = vmul.f32 %v984, 0.35355338
        %v990 = vsel %vm830, %v989, -inf
        %991 = vmax.xlane.f32.xlu0 %v990
        %v992 = vpop.xlane.xlu0 %991
        %v993 = vsub.f32 %v989, %v992
        %v994 = vmul.f32 %v993, 1.442695
        %v995 = vpow.pop %v994
        %v996 = vsel %vm830, %v995, 0.0
        %997 = vadd.xlane.f32.xlu0 %v996
        %v998 = vpop.xlane.xlu0 %997
        %v999 = vrcp.pop %v998
        %v1000 = vmul.f32 %v995, %v999
        %v1001 = vpack.c.bf16 %v1000, %v1000
        %1002 = vrot.lane.b32.xlu0 %v826, 56
        %v1003 = vpop.permute.xlu0 %1002
        %v1005 = vsel %vm830, %v1001, 0
        %v1008 = vsel %vm895, %v1003, 0
        %1010 = vmatprep.subr.bf16.mxu0 0
        %1011 = vmatpush1.bf16.msra.mxu0 %v1008
        %1012 = vmatprep.subr.bf16.mxu0 0
        %1013 = vmatpush1.bf16.msra.mxu0 0
        %1014 = vmatprep.subr.bf16.mxu0 0
        %1015 = vmatpush1.bf16.msra.mxu0 0
        %1016 = vmatprep.subr.bf16.mxu0 0
        %1017 = vmatpush1.bf16.msra.mxu0 0
        %1018 = vmatprep.subr.bf16.mxu0 0
        %1019 = vmatpush1.bf16.msra.mxu0 0
        %1020 = vmatprep.subr.bf16.mxu0 0
        %1021 = vmatpush1.bf16.msra.mxu0 0
        %1022 = vmatprep.subr.bf16.mxu0 0
        %1023 = vmatpush1.bf16.msra.mxu0 0
        %1024 = vmatprep.subr.bf16.mxu0 0
        %1025 = vmatpush1.bf16.msra.mxu0 0
        %1026 = vmatprep.subr.bf16.mxu0 0
        %1027 = vmatpush1.bf16.msra.mxu0 0
        %1028 = vmatprep.subr.bf16.mxu0 0
        %1029 = vmatpush1.bf16.msra.mxu0 0
        %1030 = vmatprep.subr.bf16.mxu0 0
        %1031 = vmatpush1.bf16.msra.mxu0 0
        %1032 = vmatprep.subr.bf16.mxu0 0
        %1033 = vmatpush1.bf16.msra.mxu0 0
        %1034 = vmatprep.subr.bf16.mxu0 0
        %1035 = vmatpush1.bf16.msra.mxu0 0
        %1036 = vmatprep.subr.bf16.mxu0 0
        %1037 = vmatpush1.bf16.msra.mxu0 0
        %1038 = vmatprep.subr.bf16.mxu0 0
        %1039 = vmatpush1.bf16.msra.mxu0 0
        %1040 = vmatprep.subr.bf16.mxu0 0
        %1041 = vmatpush1.bf16.msra.mxu0 0
        %1042 = vmatprep.mubr.bf16.mxu0 0
        %1043 = vmatmul.mubr.bf16.gmra.mrb[0].mxu0 %v1005
        %v1044 = vpop.f32.mrb[0].mxu0
        %v1045 = vadd.f32 0.0, %v1044
        %v1046 = vpop.f32.mrb[0].mxu0
        %v1047 = vpop.f32.mrb[0].mxu0
        %v1048 = vpop.f32.mrb[0].mxu0
        %1049 = vdwg.mxu0
        %1050 = vrot.lane.b32.xlu0 %v826, 112
        %v1051 = vpop.permute.xlu0 %1050
        %1052 = vrot.lane.b32.xlu0 %v826, 80
        %v1053 = vpop.permute.xlu0 %1052
        %v1055 = vsel %vm830, %v1051, 0
        %v1058 = vsel %vm830, %v1053, 0
        %1060 = vmatprep.subr.bf16.mxu0 0
        %1061 = vmatpush1.bf16.xpose.msra.mxu0 %v1058
        %1062 = vmatprep.subr.bf16.mxu0 0
        %1063 = vmatpush1.bf16.xpose.msra.mxu0 0
        %1064 = vmatprep.subr.bf16.mxu0 0
        %1065 = vmatpush1.bf16.xpose.msra.mxu0 0
        %1066 = vmatprep.subr.bf16.mxu0 0
        %1067 = vmatpush1.bf16.xpose.msra.mxu0 0
        %1068 = vmatprep.subr.bf16.mxu0 0
        %1069 = vmatpush1.bf16.xpose.msra.mxu0 0
        %1070 = vmatprep.subr.bf16.mxu0 0
        %1071 = vmatpush1.bf16.xpose.msra.mxu0 0
        %1072 = vmatprep.subr.bf16.mxu0 0
        %1073 = vmatpush1.bf16.xpose.msra.mxu0 0
        %1074 = vmatprep.subr.bf16.mxu0 0
        %1075 = vmatpush1.bf16.xpose.msra.mxu0 0
        %1076 = vmatprep.subr.bf16.mxu0 0
        %1077 = vmatpush1.bf16.xpose.msra.mxu0 0
        %1078 = vmatprep.subr.bf16.mxu0 0
        %1079 = vmatpush1.bf16.xpose.msra.mxu0 0
        %1080 = vmatprep.subr.bf16.mxu0 0
        %1081 = vmatpush1.bf16.xpose.msra.mxu0 0
        %1082 = vmatprep.subr.bf16.mxu0 0
        %1083 = vmatpush1.bf16.xpose.msra.mxu0 0
        %1084 = vmatprep.subr.bf16.mxu0 0
        %1085 = vmatpush1.bf16.xpose.msra.mxu0 0
        %1086 = vmatprep.subr.bf16.mxu0 0
        %1087 = vmatpush1.bf16.xpose.msra.mxu0 0
        %1088 = vmatprep.subr.bf16.mxu0 0
        %1089 = vmatpush1.bf16.xpose.msra.mxu0 0
        %1090 = vmatprep.subr.bf16.mxu0 0
        %1091 = vmatpush1.bf16.xpose.msra.mxu0 0
        %1092 = vmatprep.mubr.bf16.mxu0 0
        %1093 = vmatmul.mubr.bf16.gmra.mrb[0].mxu0 %v1055
        %v1094 = vpop.f32.mrb[0].mxu0
        %v1095 = vadd.f32 0.0, %v1094
        %v1096 = vpop.f32.mrb[0].mxu0
        %v1097 = vpop.f32.mrb[0].mxu0
        %v1098 = vpop.f32.mrb[0].mxu0
        %1099 = vdwg.mxu0
        %v1100 = vmul.f32 %v1095, 0.35355338
        %v1101 = vsel %vm830, %v1100, -inf
        %1102 = vmax.xlane.f32.xlu0 %v1101
        %v1103 = vpop.xlane.xlu0 %1102
        %v1104 = vsub.f32 %v1100, %v1103
        %v1105 = vmul.f32 %v1104, 1.442695
        %v1106 = vpow.pop %v1105
        %v1107 = vsel %vm830, %v1106, 0.0
        %1108 = vadd.xlane.f32.xlu0 %v1107
        %v1109 = vpop.xlane.xlu0 %1108
        %v1110 = vrcp.pop %v1109
        %v1111 = vmul.f32 %v1106, %v1110
        %v1112 = vpack.c.bf16 %v1111, %v1111
        %1113 = vrot.lane.b32.xlu0 %v826, 48
        %v1114 = vpop.permute.xlu0 %1113
        %v1116 = vsel %vm830, %v1112, 0
        %v1119 = vsel %vm895, %v1114, 0
        %1121 = vmatprep.subr.bf16.mxu0 0
        %1122 = vmatpush1.bf16.msra.mxu0 %v1119
        %1123 = vmatprep.subr.bf16.mxu0 0
        %1124 = vmatpush1.bf16.msra.mxu0 0
        %1125 = vmatprep.subr.bf16.mxu0 0
        %1126 = vmatpush1.bf16.msra.mxu0 0
        %1127 = vmatprep.subr.bf16.mxu0 0
        %1128 = vmatpush1.bf16.msra.mxu0 0
        %1129 = vmatprep.subr.bf16.mxu0 0
        %1130 = vmatpush1.bf16.msra.mxu0 0
        %1131 = vmatprep.subr.bf16.mxu0 0
        %1132 = vmatpush1.bf16.msra.mxu0 0
        %1133 = vmatprep.subr.bf16.mxu0 0
        %1134 = vmatpush1.bf16.msra.mxu0 0
        %1135 = vmatprep.subr.bf16.mxu0 0
        %1136 = vmatpush1.bf16.msra.mxu0 0
        %1137 = vmatprep.subr.bf16.mxu0 0
        %1138 = vmatpush1.bf16.msra.mxu0 0
        %1139 = vmatprep.subr.bf16.mxu0 0
        %1140 = vmatpush1.bf16.msra.mxu0 0
        %1141 = vmatprep.subr.bf16.mxu0 0
        %1142 = vmatpush1.bf16.msra.mxu0 0
        %1143 = vmatprep.subr.bf16.mxu0 0
        %1144 = vmatpush1.bf16.msra.mxu0 0
        %1145 = vmatprep.subr.bf16.mxu0 0
        %1146 = vmatpush1.bf16.msra.mxu0 0
        %1147 = vmatprep.subr.bf16.mxu0 0
        %1148 = vmatpush1.bf16.msra.mxu0 0
        %1149 = vmatprep.subr.bf16.mxu0 0
        %1150 = vmatpush1.bf16.msra.mxu0 0
        %1151 = vmatprep.subr.bf16.mxu0 0
        %1152 = vmatpush1.bf16.msra.mxu0 0
        %1153 = vmatprep.mubr.bf16.mxu0 0
        %1154 = vmatmul.mubr.bf16.gmra.mrb[0].mxu0 %v1116
        %v1155 = vpop.f32.mrb[0].mxu0
        %v1156 = vadd.f32 0.0, %v1155
        %v1157 = vpop.f32.mrb[0].mxu0
        %v1158 = vpop.f32.mrb[0].mxu0
        %v1159 = vpop.f32.mrb[0].mxu0
        %1160 = vdwg.mxu0
        %1161 = vrot.lane.b32.xlu0 %v826, 104
        %v1162 = vpop.permute.xlu0 %1161
        %1163 = vrot.lane.b32.xlu0 %v826, 72
        %v1164 = vpop.permute.xlu0 %1163
        %v1166 = vsel %vm830, %v1162, 0
        %v1169 = vsel %vm830, %v1164, 0
        %1171 = vmatprep.subr.bf16.mxu0 0
        %1172 = vmatpush1.bf16.xpose.msra.mxu0 %v1169
        %1173 = vmatprep.subr.bf16.mxu0 0
        %1174 = vmatpush1.bf16.xpose.msra.mxu0 0
        %1175 = vmatprep.subr.bf16.mxu0 0
        %1176 = vmatpush1.bf16.xpose.msra.mxu0 0
        %1177 = vmatprep.subr.bf16.mxu0 0
        %1178 = vmatpush1.bf16.xpose.msra.mxu0 0
        %1179 = vmatprep.subr.bf16.mxu0 0
        %1180 = vmatpush1.bf16.xpose.msra.mxu0 0
        %1181 = vmatprep.subr.bf16.mxu0 0
        %1182 = vmatpush1.bf16.xpose.msra.mxu0 0
        %1183 = vmatprep.subr.bf16.mxu0 0
        %1184 = vmatpush1.bf16.xpose.msra.mxu0 0
        %1185 = vmatprep.subr.bf16.mxu0 0
        %1186 = vmatpush1.bf16.xpose.msra.mxu0 0
        %1187 = vmatprep.subr.bf16.mxu0 0
        %1188 = vmatpush1.bf16.xpose.msra.mxu0 0
        %1189 = vmatprep.subr.bf16.mxu0 0
        %1190 = vmatpush1.bf16.xpose.msra.mxu0 0
        %1191 = vmatprep.subr.bf16.mxu0 0
        %1192 = vmatpush1.bf16.xpose.msra.mxu0 0
        %1193 = vmatprep.subr.bf16.mxu0 0
        %1194 = vmatpush1.bf16.xpose.msra.mxu0 0
        %1195 = vmatprep.subr.bf16.mxu0 0
        %1196 = vmatpush1.bf16.xpose.msra.mxu0 0
        %1197 = vmatprep.subr.bf16.mxu0 0
        %1198 = vmatpush1.bf16.xpose.msra.mxu0 0
        %1199 = vmatprep.subr.bf16.mxu0 0
        %1200 = vmatpush1.bf16.xpose.msra.mxu0 0
        %1201 = vmatprep.subr.bf16.mxu0 0
        %1202 = vmatpush1.bf16.xpose.msra.mxu0 0
        %1203 = vmatprep.mubr.bf16.mxu0 0
        %1204 = vmatmul.mubr.bf16.gmra.mrb[0].mxu0 %v1166
        %v1205 = vpop.f32.mrb[0].mxu0
        %v1206 = vadd.f32 0.0, %v1205
        %v1207 = vpop.f32.mrb[0].mxu0
        %v1208 = vpop.f32.mrb[0].mxu0
        %v1209 = vpop.f32.mrb[0].mxu0
        %1210 = vdwg.mxu0
        %v1211 = vmul.f32 %v1206, 0.35355338
        %v1212 = vsel %vm830, %v1211, -inf
        %1213 = vmax.xlane.f32.xlu0 %v1212
        %v1214 = vpop.xlane.xlu0 %1213
        %v1215 = vsub.f32 %v1211, %v1214
        %v1216 = vmul.f32 %v1215, 1.442695
        %v1217 = vpow.pop %v1216
        %v1218 = vsel %vm830, %v1217, 0.0
        %1219 = vadd.xlane.f32.xlu0 %v1218
        %v1220 = vpop.xlane.xlu0 %1219
        %v1221 = vrcp.pop %v1220
        %v1222 = vmul.f32 %v1217, %v1221
        %v1223 = vpack.c.bf16 %v1222, %v1222
        %1224 = vrot.lane.b32.xlu0 %v826, 40
        %v1225 = vpop.permute.xlu0 %1224
        %v1227 = vsel %vm830, %v1223, 0
        %v1230 = vsel %vm895, %v1225, 0
        %1232 = vmatprep.subr.bf16.mxu0 0
        %1233 = vmatpush1.bf16.msra.mxu0 %v1230
        %1234 = vmatprep.subr.bf16.mxu0 0
        %1235 = vmatpush1.bf16.msra.mxu0 0
        %1236 = vmatprep.subr.bf16.mxu0 0
        %1237 = vmatpush1.bf16.msra.mxu0 0
        %1238 = vmatprep.subr.bf16.mxu0 0
        %1239 = vmatpush1.bf16.msra.mxu0 0
        %1240 = vmatprep.subr.bf16.mxu0 0
        %1241 = vmatpush1.bf16.msra.mxu0 0
        %1242 = vmatprep.subr.bf16.mxu0 0
        %1243 = vmatpush1.bf16.msra.mxu0 0
        %1244 = vmatprep.subr.bf16.mxu0 0
        %1245 = vmatpush1.bf16.msra.mxu0 0
        %1246 = vmatprep.subr.bf16.mxu0 0
        %1247 = vmatpush1.bf16.msra.mxu0 0
        %1248 = vmatprep.subr.bf16.mxu0 0
        %1249 = vmatpush1.bf16.msra.mxu0 0
        %1250 = vmatprep.subr.bf16.mxu0 0
        %1251 = vmatpush1.bf16.msra.mxu0 0
        %1252 = vmatprep.subr.bf16.mxu0 0
        %1253 = vmatpush1.bf16.msra.mxu0 0
        %1254 = vmatprep.subr.bf16.mxu0 0
        %1255 = vmatpush1.bf16.msra.mxu0 0
        %1256 = vmatprep.subr.bf16.mxu0 0
        %1257 = vmatpush1.bf16.msra.mxu0 0
        %1258 = vmatprep.subr.bf16.mxu0 0
        %1259 = vmatpush1.bf16.msra.mxu0 0
        %1260 = vmatprep.subr.bf16.mxu0 0
        %1261 = vmatpush1.bf16.msra.mxu0 0
        %1262 = vmatprep.subr.bf16.mxu0 0
        %1263 = vmatpush1.bf16.msra.mxu0 0
        %1264 = vmatprep.mubr.bf16.mxu0 0
        %1265 = vmatmul.mubr.bf16.gmra.mrb[0].mxu0 %v1227
        %v1266 = vpop.f32.mrb[0].mxu0
        %v1267 = vadd.f32 0.0, %v1266
        %v1268 = vpop.f32.mrb[0].mxu0
        %v1269 = vpop.f32.mrb[0].mxu0
        %v1270 = vpop.f32.mrb[0].mxu0
        %1271 = vdwg.mxu0
        %1273 = vrot.lane.b32.xlu0 %v1045, 8
        %v1274 = vpop.permute.xlu0 %1273
        %1277 = vrot.lane.b32.xlu0 %v1156, 16
        %v1278 = vpop.permute.xlu0 %1277
        %1281 = vrot.lane.b32.xlu0 %v1267, 24
        %v1282 = vpop.permute.xlu0 %1281
        %v1284 = vsel %vm830, %v934, %v1274
        %vm1285 = vcmask 130048
        %v1286 = vsel %vm1285, %v1284, %v1278
        %vm1287 = vcmask 195584
        %v1288 = vsel %vm1287, %v1286, %v1282
        %v1289 = vpack.c.bf16 %v1288, %v1288
        %v1290 = vld [vmem:[%s6] sm:$0xf]
        %v1291 = vld [vmem:[%s6 + $0x4] sm:$0xf]
        %v1292 = vld [vmem:[%s6 + $0x8] sm:$0xf]
        %v1293 = vld [vmem:[%s6 + $0xc] sm:$0xf]
        %v1294 = vld [vmem:[#allocation7] sm:$0x1]
        %v1296 = vlaneseq
        %v1297 = vshrl.u32 %v1296, 7
        %v1298 = vsub.s32 0, %v1297
        %v1299 = vrot.slane %v1294, %v1298
        %v1305 = vunpack.c.l.b16 %v1290
        %v1306 = vunpack.c.l.b16 %v1291
        %v1307 = vunpack.c.l.b16 %v1292
        %v1308 = vunpack.c.l.b16 %v1293
        %v1309 = vpack.c.b16 %v1306, %v1305
        %v1310 = vpack.c.b16 %v1308, %v1307
        %v1314 = vsel %vm742, %v1289, 0
        %1316 = vmatprep.subr.bf16.mxu0 0
        %1317 = vmatpush1.bf16.msra.mxu0 %v1309
        %1318 = vmatprep.subr.bf16.mxu0 0
        %1319 = vmatpush1.bf16.msra.mxu0 %v1310
        %1320 = vmatprep.subr.bf16.mxu0 0
        %1321 = vmatpush1.bf16.msra.mxu0 0
        %1322 = vmatprep.subr.bf16.mxu0 0
        %1323 = vmatpush1.bf16.msra.mxu0 0
        %1324 = vmatprep.subr.bf16.mxu0 0
        %1325 = vmatpush1.bf16.msra.mxu0 0
        %1326 = vmatprep.subr.bf16.mxu0 0
        %1327 = vmatpush1.bf16.msra.mxu0 0
        %1328 = vmatprep.subr.bf16.mxu0 0
        %1329 = vmatpush1.bf16.msra.mxu0 0
        %1330 = vmatprep.subr.bf16.mxu0 0
        %1331 = vmatpush1.bf16.msra.mxu0 0
        %1332 = vmatprep.subr.bf16.mxu0 0
        %1333 = vmatpush1.bf16.msra.mxu0 0
        %1334 = vmatprep.subr.bf16.mxu0 0
        %1335 = vmatpush1.bf16.msra.mxu0 0
        %1336 = vmatprep.subr.bf16.mxu0 0
        %1337 = vmatpush1.bf16.msra.mxu0 0
        %1338 = vmatprep.subr.bf16.mxu0 0
        %1339 = vmatpush1.bf16.msra.mxu0 0
        %1340 = vmatprep.subr.bf16.mxu0 0
        %1341 = vmatpush1.bf16.msra.mxu0 0
        %1342 = vmatprep.subr.bf16.mxu0 0
        %1343 = vmatpush1.bf16.msra.mxu0 0
        %1344 = vmatprep.subr.bf16.mxu0 0
        %1345 = vmatpush1.bf16.msra.mxu0 0
        %1346 = vmatprep.subr.bf16.mxu0 0
        %1347 = vmatpush1.bf16.msra.mxu0 0
        %1348 = vmatprep.mubr.bf16.mxu0 0
        %1349 = vmatmul.mubr.bf16.gmra.mrb[0].mxu0 %v1314
        %v1350 = vpop.f32.mrb[0].mxu0
        %v1351 = vadd.f32 %v1299, %v1350
        %v1352 = vpop.f32.mrb[0].mxu0
        %v1353 = vpop.f32.mrb[0].mxu0
        %v1354 = vpop.f32.mrb[0].mxu0
        %1355 = vdwg.mxu0
        %v1356 = vadd.f32 %v758, %v1351
        %v1357 = vsel %vm742, %v1356, 0.0
        %1358 = vadd.xlane.f32.xlu0 %v1357
        %v1359 = vpop.xlane.xlu0 %1358
        %v1360 = vmul.f32 %v1359, %v746
        %v1361 = vsub.f32 %v1356, %v1360
        %v1362 = vmul.f32 %v1361, %v1361
        %v1363 = vsel %vm742, %v1362, 0.0
        %1364 = vadd.xlane.f32.xlu0 %v1363
        %v1365 = vpop.xlane.xlu0 %1364
        %v1366 = vmul.f32 %v1365, %v746
        %v1367 = vadd.f32 %v1366, 1e-05
        %v1368 = vrsqrt.pop %v1367
        %v1369 = vmul.f32 %v1361, %v1368
        %v1370 = vmul.f32 %v1369, %v732
        %v1371 = vadd.f32 %v1370, %v739
        %v1372 = vpack.c.bf16 %v1371, %v1371
        %v1373 = vld [vmem:[%s8] sm:$0xf]
        %v1374 = vld [vmem:[%s8 + $0x4] sm:$0xf]
        %v1375 = vld [vmem:[%s8 + $0x8] sm:$0xf]
        %v1376 = vld [vmem:[%s8 + $0xc] sm:$0xf]
        %v1377 = vld [vmem:[%s9] sm:$0x1]
        %v1379 = vlaneseq
        %v1380 = vshrl.u32 %v1379, 7
        %v1381 = vsub.s32 0, %v1380
        %v1382 = vrot.slane %v1377, %v1381
        %v1388 = vunpack.c.l.b16 %v1373
        %v1389 = vunpack.c.l.b16 %v1374
        %v1390 = vunpack.c.l.b16 %v1375
        %v1391 = vunpack.c.l.b16 %v1376
        %v1392 = vpack.c.b16 %v1389, %v1388
        %v1393 = vpack.c.b16 %v1391, %v1390
        %v1397 = vsel %vm742, %v1372, 0
        %1399 = vmatprep.subr.bf16.mxu0 0
        %1400 = vmatpush1.bf16.msra.mxu0 %v1392
        %1401 = vmatprep.subr.bf16.mxu0 0
        %1402 = vmatpush1.bf16.msra.mxu0 %v1393
        %1403 = vmatprep.subr.bf16.mxu0 0
        %1404 = vmatpush1.bf16.msra.mxu0 0
        %1405 = vmatprep.subr.bf16.mxu0 0
        %1406 = vmatpush1.bf16.msra.mxu0 0
        %1407 = vmatprep.subr.bf16.mxu0 0
        %1408 = vmatpush1.bf16.msra.mxu0 0
        %1409 = vmatprep.subr.bf16.mxu0 0
        %1410 = vmatpush1.bf16.msra.mxu0 0
        %1411 = vmatprep.subr.bf16.mxu0 0
        %1412 = vmatpush1.bf16.msra.mxu0 0
        %1413 = vmatprep.subr.bf16.mxu0 0
        %1414 = vmatpush1.bf16.msra.mxu0 0
        %1415 = vmatprep.subr.bf16.mxu0 0
        %1416 = vmatpush1.bf16.msra.mxu0 0
        %1417 = vmatprep.subr.bf16.mxu0 0
        %1418 = vmatpush1.bf16.msra.mxu0 0
        %1419 = vmatprep.subr.bf16.mxu0 0
        %1420 = vmatpush1.bf16.msra.mxu0 0
        %1421 = vmatprep.subr.bf16.mxu0 0
        %1422 = vmatpush1.bf16.msra.mxu0 0
        %1423 = vmatprep.subr.bf16.mxu0 0
        %1424 = vmatpush1.bf16.msra.mxu0 0
        %1425 = vmatprep.subr.bf16.mxu0 0
        %1426 = vmatpush1.bf16.msra.mxu0 0
        %1427 = vmatprep.subr.bf16.mxu0 0
        %1428 = vmatpush1.bf16.msra.mxu0 0
        %1429 = vmatprep.subr.bf16.mxu0 0
        %1430 = vmatpush1.bf16.msra.mxu0 0
        %1431 = vmatprep.mubr.bf16.mxu0 0
        %1432 = vmatmul.mubr.bf16.gmra.mrb[0].mxu0 %v1397
        %v1433 = vpop.f32.mrb[0].mxu0
        %v1434 = vadd.f32 %v1382, %v1433
        %v1435 = vpop.f32.mrb[0].mxu0
        %v1436 = vpop.f32.mrb[0].mxu0
        %v1437 = vpop.f32.mrb[0].mxu0
        %1438 = vdwg.mxu0
        %v1439 = vld [vmem:[#allocation2] sm:$0xf]
        %v1440 = vld [vmem:[#allocation2 + $0x4] sm:$0x3]
        %v1441 = vld [vmem:[#allocation3] sm:$0xf]
        %v1442 = vld [vmem:[#allocation3 + $0x4] sm:$0x3]
        %v1443 = vpack.c.bf16 %v1434, %v1434
        %v1446 = vunpack.c.l.b16 %v1439
        %v1447 = vunpack.c.l.b16 %v1440
        %v1448 = vpack.c.b16 %v1447, %v1446
        %v1450 = vsel %vm830, %v1443, 0
        %v1453 = vsel %vm830, %v1448, 0
        %1455 = vmatprep.subr.bf16.mxu0 0
        %1456 = vmatpush1.bf16.xpose.msra.mxu0 %v1453
        %1457 = vmatprep.subr.bf16.mxu0 0
        %1458 = vmatpush1.bf16.xpose.msra.mxu0 0
        %1459 = vmatprep.subr.bf16.mxu0 0
        %1460 = vmatpush1.bf16.xpose.msra.mxu0 0
        %1461 = vmatprep.subr.bf16.mxu0 0
        %1462 = vmatpush1.bf16.xpose.msra.mxu0 0
        %1463 = vmatprep.subr.bf16.mxu0 0
        %1464 = vmatpush1.bf16.xpose.msra.mxu0 0
        %1465 = vmatprep.subr.bf16.mxu0 0
        %1466 = vmatpush1.bf16.xpose.msra.mxu0 0
        %1467 = vmatprep.subr.bf16.mxu0 0
        %1468 = vmatpush1.bf16.xpose.msra.mxu0 0
        %1469 = vmatprep.subr.bf16.mxu0 0
        %1470 = vmatpush1.bf16.xpose.msra.mxu0 0
        %1471 = vmatprep.subr.bf16.mxu0 0
        %1472 = vmatpush1.bf16.xpose.msra.mxu0 0
        %1473 = vmatprep.subr.bf16.mxu0 0
        %1474 = vmatpush1.bf16.xpose.msra.mxu0 0
        %1475 = vmatprep.subr.bf16.mxu0 0
        %1476 = vmatpush1.bf16.xpose.msra.mxu0 0
        %1477 = vmatprep.subr.bf16.mxu0 0
        %1478 = vmatpush1.bf16.xpose.msra.mxu0 0
        %1479 = vmatprep.subr.bf16.mxu0 0
        %1480 = vmatpush1.bf16.xpose.msra.mxu0 0
        %1481 = vmatprep.subr.bf16.mxu0 0
        %1482 = vmatpush1.bf16.xpose.msra.mxu0 0
        %1483 = vmatprep.subr.bf16.mxu0 0
        %1484 = vmatpush1.bf16.xpose.msra.mxu0 0
        %1485 = vmatprep.subr.bf16.mxu0 0
        %1486 = vmatpush1.bf16.xpose.msra.mxu0 0
        %1487 = vmatprep.mubr.bf16.mxu0 0
        %1488 = vmatmul.mubr.bf16.gmra.mrb[0].mxu0 %v1450
        %v1489 = vpop.f32.mrb[0].mxu0
        %v1490 = vadd.f32 0.0, %v1489
        %v1491 = vpop.f32.mrb[0].mxu0
        %v1492 = vpop.f32.mrb[0].mxu0
        %v1493 = vpop.f32.mrb[0].mxu0
        %1494 = vdwg.mxu0
        %v1495 = vmul.f32 %v1490, 0.35355338
        %vm1496 = vcmask 97280
        %v1497 = vsel %vm1496, %v1495, -inf
        %1498 = vmax.xlane.f32.xlu0 %v1497
        %v1499 = vpop.xlane.xlu0 %1498
        %v1500 = vsub.f32 %v1495, %v1499
        %v1501 = vmul.f32 %v1500, 1.442695
        %v1502 = vpow.pop %v1501
        %v1503 = vsel %vm1496, %v1502, 0.0
        %1504 = vadd.xlane.f32.xlu0 %v1503
        %v1505 = vpop.xlane.xlu0 %1504
        %v1506 = vrcp.pop %v1505
        %v1507 = vmul.f32 %v1502, %v1506
        %v1508 = vpack.c.bf16 %v1507, %v1507
        %v1511 = vunpack.c.l.b16 %v1441
        %v1512 = vunpack.c.l.b16 %v1442
        %v1513 = vpack.c.b16 %v1512, %v1511
        %v1515 = vsel %vm1496, %v1508, 0
        %vm1517 = vcmask 1045504
        %v1519 = vsel %vm1517, %v1513, 0
        %1521 = vmatprep.subr.bf16.mxu0 0
        %1522 = vmatpush1.bf16.msra.mxu0 %v1519
        %1523 = vmatprep.subr.bf16.mxu0 0
        %1524 = vmatpush1.bf16.msra.mxu0 0
        %1525 = vmatprep.subr.bf16.mxu0 0
        %1526 = vmatpush1.bf16.msra.mxu0 0
        %1527 = vmatprep.subr.bf16.mxu0 0
        %1528 = vmatpush1.bf16.msra.mxu0 0
        %1529 = vmatprep.subr.bf16.mxu0 0
        %1530 = vmatpush1.bf16.msra.mxu0 0
        %1531 = vmatprep.subr.bf16.mxu0 0
        %1532 = vmatpush1.bf16.msra.mxu0 0
        %1533 = vmatprep.subr.bf16.mxu0 0
        %1534 = vmatpush1.bf16.msra.mxu0 0
        %1535 = vmatprep.subr.bf16.mxu0 0
        %1536 = vmatpush1.bf16.msra.mxu0 0
        %1537 = vmatprep.subr.bf16.mxu0 0
        %1538 = vmatpush1.bf16.msra.mxu0 0
        %1539 = vmatprep.subr.bf16.mxu0 0
        %1540 = vmatpush1.bf16.msra.mxu0 0
        %1541 = vmatprep.subr.bf16.mxu0 0
        %1542 = vmatpush1.bf16.msra.mxu0 0
        %1543 = vmatprep.subr.bf16.mxu0 0
        %1544 = vmatpush1.bf16.msra.mxu0 0
        %1545 = vmatprep.subr.bf16.mxu0 0
        %1546 = vmatpush1.bf16.msra.mxu0 0
        %1547 = vmatprep.subr.bf16.mxu0 0
        %1548 = vmatpush1.bf16.msra.mxu0 0
        %1549 = vmatprep.subr.bf16.mxu0 0
        %1550 = vmatpush1.bf16.msra.mxu0 0
        %1551 = vmatprep.subr.bf16.mxu0 0
        %1552 = vmatpush1.bf16.msra.mxu0 0
        %1553 = vmatprep.mubr.bf16.mxu0 0
        %1554 = vmatmul.mubr.bf16.gmra.mrb[0].mxu0 %v1515
        %v1555 = vpop.f32.mrb[0].mxu0
        %v1556 = vadd.f32 0.0, %v1555
        %v1557 = vpop.f32.mrb[0].mxu0
        %v1558 = vpop.f32.mrb[0].mxu0
        %v1559 = vpop.f32.mrb[0].mxu0
        %1560 = vdwg.mxu0
        %1562 = vrot.lane.b32.xlu0 %v1443, 120
        %v1563 = vpop.permute.xlu0 %1562
        %1564 = vrot.lane.b32.xlu0 %v1448, 120
        %v1565 = vpop.permute.xlu0 %1564
        %v1567 = vsel %vm830, %v1563, 0
        %v1570 = vsel %vm830, %v1565, 0
        %1572 = vmatprep.subr.bf16.mxu0 0
        %1573 = vmatpush1.bf16.xpose.msra.mxu0 %v1570
        %1574 = vmatprep.subr.bf16.mxu0 0
        %1575 = vmatpush1.bf16.xpose.msra.mxu0 0
        %1576 = vmatprep.subr.bf16.mxu0 0
        %1577 = vmatpush1.bf16.xpose.msra.mxu0 0
        %1578 = vmatprep.subr.bf16.mxu0 0
        %1579 = vmatpush1.bf16.xpose.msra.mxu0 0
        %1580 = vmatprep.subr.bf16.mxu0 0
        %1581 = vmatpush1.bf16.xpose.msra.mxu0 0
        %1582 = vmatprep.subr.bf16.mxu0 0
        %1583 = vmatpush1.bf16.xpose.msra.mxu0 0
        %1584 = vmatprep.subr.bf16.mxu0 0
        %1585 = vmatpush1.bf16.xpose.msra.mxu0 0
        %1586 = vmatprep.subr.bf16.mxu0 0
        %1587 = vmatpush1.bf16.xpose.msra.mxu0 0
        %1588 = vmatprep.subr.bf16.mxu0 0
        %1589 = vmatpush1.bf16.xpose.msra.mxu0 0
        %1590 = vmatprep.subr.bf16.mxu0 0
        %1591 = vmatpush1.bf16.xpose.msra.mxu0 0
        %1592 = vmatprep.subr.bf16.mxu0 0
        %1593 = vmatpush1.bf16.xpose.msra.mxu0 0
        %1594 = vmatprep.subr.bf16.mxu0 0
        %1595 = vmatpush1.bf16.xpose.msra.mxu0 0
        %1596 = vmatprep.subr.bf16.mxu0 0
        %1597 = vmatpush1.bf16.xpose.msra.mxu0 0
        %1598 = vmatprep.subr.bf16.mxu0 0
        %1599 = vmatpush1.bf16.xpose.msra.mxu0 0
        %1600 = vmatprep.subr.bf16.mxu0 0
        %1601 = vmatpush1.bf16.xpose.msra.mxu0 0
        %1602 = vmatprep.subr.bf16.mxu0 0
        %1603 = vmatpush1.bf16.xpose.msra.mxu0 0
        %1604 = vmatprep.mubr.bf16.mxu0 0
        %1605 = vmatmul.mubr.bf16.gmra.mrb[0].mxu0 %v1567
        %v1606 = vpop.f32.mrb[0].mxu0
        %v1607 = vadd.f32 0.0, %v1606
        %v1608 = vpop.f32.mrb[0].mxu0
        %v1609 = vpop.f32.mrb[0].mxu0
        %v1610 = vpop.f32.mrb[0].mxu0
        %1611 = vdwg.mxu0
        %v1612 = vmul.f32 %v1607, 0.35355338
        %v1613 = vsel %vm1496, %v1612, -inf
        %1614 = vmax.xlane.f32.xlu0 %v1613
        %v1615 = vpop.xlane.xlu0 %1614
        %v1616 = vsub.f32 %v1612, %v1615
        %v1617 = vmul.f32 %v1616, 1.442695
        %v1618 = vpow.pop %v1617
        %v1619 = vsel %vm1496, %v1618, 0.0
        %1620 = vadd.xlane.f32.xlu0 %v1619
        %v1621 = vpop.xlane.xlu0 %1620
        %v1622 = vrcp.pop %v1621
        %v1623 = vmul.f32 %v1618, %v1622
        %v1624 = vpack.c.bf16 %v1623, %v1623
        %1625 = vrot.lane.b32.xlu0 %v1513, 120
        %v1626 = vpop.permute.xlu0 %1625
        %v1628 = vsel %vm1496, %v1624, 0
        %v1631 = vsel %vm1517, %v1626, 0
        %1633 = vmatprep.subr.bf16.mxu0 0
        %1634 = vmatpush1.bf16.msra.mxu0 %v1631
        %1635 = vmatprep.subr.bf16.mxu0 0
        %1636 = vmatpush1.bf16.msra.mxu0 0
        %1637 = vmatprep.subr.bf16.mxu0 0
        %1638 = vmatpush1.bf16.msra.mxu0 0
        %1639 = vmatprep.subr.bf16.mxu0 0
        %1640 = vmatpush1.bf16.msra.mxu0 0
        %1641 = vmatprep.subr.bf16.mxu0 0
        %1642 = vmatpush1.bf16.msra.mxu0 0
        %1643 = vmatprep.subr.bf16.mxu0 0
        %1644 = vmatpush1.bf16.msra.mxu0 0
        %1645 = vmatprep.subr.bf16.mxu0 0
        %1646 = vmatpush1.bf16.msra.mxu0 0
        %1647 = vmatprep.subr.bf16.mxu0 0
        %1648 = vmatpush1.bf16.msra.mxu0 0
        %1649 = vmatprep.subr.bf16.mxu0 0
        %1650 = vmatpush1.bf16.msra.mxu0 0
        %1651 = vmatprep.subr.bf16.mxu0 0
        %1652 = vmatpush1.bf16.msra.mxu0 0
        %1653 = vmatprep.subr.bf16.mxu0 0
        %1654 = vmatpush1.bf16.msra.mxu0 0
        %1655 = vmatprep.subr.bf16.mxu0 0
        %1656 = vmatpush1.bf16.msra.mxu0 0
        %1657 = vmatprep.subr.bf16.mxu0 0
        %1658 = vmatpush1.bf16.msra.mxu0 0
        %1659 = vmatprep.subr.bf16.mxu0 0
        %1660 = vmatpush1.bf16.msra.mxu0 0
        %1661 = vmatprep.subr.bf16.mxu0 0
        %1662 = vmatpush1.bf16.msra.mxu0 0
        %1663 = vmatprep.subr.bf16.mxu0 0
        %1664 = vmatpush1.bf16.msra.mxu0 0
        %1665 = vmatprep.mubr.bf16.mxu0 0
        %1666 = vmatmul.mubr.bf16.gmra.mrb[0].mxu0 %v1628
        %v1667 = vpop.f32.mrb[0].mxu0
        %v1668 = vadd.f32 0.0, %v1667
        %v1669 = vpop.f32.mrb[0].mxu0
        %v1670 = vpop.f32.mrb[0].mxu0
        %v1671 = vpop.f32.mrb[0].mxu0
        %1672 = vdwg.mxu0
        %1673 = vrot.lane.b32.xlu0 %v1443, 112
        %v1674 = vpop.permute.xlu0 %1673
        %1675 = vrot.lane.b32.xlu0 %v1448, 112
        %v1676 = vpop.permute.xlu0 %1675
        %v1678 = vsel %vm830, %v1674, 0
        %v1681 = vsel %vm830, %v1676, 0
        %1683 = vmatprep.subr.bf16.mxu0 0
        %1684 = vmatpush1.bf16.xpose.msra.mxu0 %v1681
        %1685 = vmatprep.subr.bf16.mxu0 0
        %1686 = vmatpush1.bf16.xpose.msra.mxu0 0
        %1687 = vmatprep.subr.bf16.mxu0 0
        %1688 = vmatpush1.bf16.xpose.msra.mxu0 0
        %1689 = vmatprep.subr.bf16.mxu0 0
        %1690 = vmatpush1.bf16.xpose.msra.mxu0 0
        %1691 = vmatprep.subr.bf16.mxu0 0
        %1692 = vmatpush1.bf16.xpose.msra.mxu0 0
        %1693 = vmatprep.subr.bf16.mxu0 0
        %1694 = vmatpush1.bf16.xpose.msra.mxu0 0
        %1695 = vmatprep.subr.bf16.mxu0 0
        %1696 = vmatpush1.bf16.xpose.msra.mxu0 0
        %1697 = vmatprep.subr.bf16.mxu0 0
        %1698 = vmatpush1.bf16.xpose.msra.mxu0 0
        %1699 = vmatprep.subr.bf16.mxu0 0
        %1700 = vmatpush1.bf16.xpose.msra.mxu0 0
        %1701 = vmatprep.subr.bf16.mxu0 0
        %1702 = vmatpush1.bf16.xpose.msra.mxu0 0
        %1703 = vmatprep.subr.bf16.mxu0 0
        %1704 = vmatpush1.bf16.xpose.msra.mxu0 0
        %1705 = vmatprep.subr.bf16.mxu0 0
        %1706 = vmatpush1.bf16.xpose.msra.mxu0 0
        %1707 = vmatprep.subr.bf16.mxu0 0
        %1708 = vmatpush1.bf16.xpose.msra.mxu0 0
        %1709 = vmatprep.subr.bf16.mxu0 0
        %1710 = vmatpush1.bf16.xpose.msra.mxu0 0
        %1711 = vmatprep.subr.bf16.mxu0 0
        %1712 = vmatpush1.bf16.xpose.msra.mxu0 0
        %1713 = vmatprep.subr.bf16.mxu0 0
        %1714 = vmatpush1.bf16.xpose.msra.mxu0 0
        %1715 = vmatprep.mubr.bf16.mxu0 0
        %1716 = vmatmul.mubr.bf16.gmra.mrb[0].mxu0 %v1678
        %v1717 = vpop.f32.mrb[0].mxu0
        %v1718 = vadd.f32 0.0, %v1717
        %v1719 = vpop.f32.mrb[0].mxu0
        %v1720 = vpop.f32.mrb[0].mxu0
        %v1721 = vpop.f32.mrb[0].mxu0
        %1722 = vdwg.mxu0
        %v1723 = vmul.f32 %v1718, 0.35355338
        %v1724 = vsel %vm1496, %v1723, -inf
        %1725 = vmax.xlane.f32.xlu0 %v1724
        %v1726 = vpop.xlane.xlu0 %1725
        %v1727 = vsub.f32 %v1723, %v1726
        %v1728 = vmul.f32 %v1727, 1.442695
        %v1729 = vpow.pop %v1728
        %v1730 = vsel %vm1496, %v1729, 0.0
        %1731 = vadd.xlane.f32.xlu0 %v1730
        %v1732 = vpop.xlane.xlu0 %1731
        %v1733 = vrcp.pop %v1732
        %v1734 = vmul.f32 %v1729, %v1733
        %v1735 = vpack.c.bf16 %v1734, %v1734
        %1736 = vrot.lane.b32.xlu0 %v1513, 112
        %v1737 = vpop.permute.xlu0 %1736
        %v1739 = vsel %vm1496, %v1735, 0
        %v1742 = vsel %vm1517, %v1737, 0
        %1744 = vmatprep.subr.bf16.mxu0 0
        %1745 = vmatpush1.bf16.msra.mxu0 %v1742
        %1746 = vmatprep.subr.bf16.mxu0 0
        %1747 = vmatpush1.bf16.msra.mxu0 0
        %1748 = vmatprep.subr.bf16.mxu0 0
        %1749 = vmatpush1.bf16.msra.mxu0 0
        %1750 = vmatprep.subr.bf16.mxu0 0
        %1751 = vmatpush1.bf16.msra.mxu0 0
        %1752 = vmatprep.subr.bf16.mxu0 0
        %1753 = vmatpush1.bf16.msra.mxu0 0
        %1754 = vmatprep.subr.bf16.mxu0 0
        %1755 = vmatpush1.bf16.msra.mxu0 0
        %1756 = vmatprep.subr.bf16.mxu0 0
        %1757 = vmatpush1.bf16.msra.mxu0 0
        %1758 = vmatprep.subr.bf16.mxu0 0
        %1759 = vmatpush1.bf16.msra.mxu0 0
        %1760 = vmatprep.subr.bf16.mxu0 0
        %1761 = vmatpush1.bf16.msra.mxu0 0
        %1762 = vmatprep.subr.bf16.mxu0 0
        %1763 = vmatpush1.bf16.msra.mxu0 0
        %1764 = vmatprep.subr.bf16.mxu0 0
        %1765 = vmatpush1.bf16.msra.mxu0 0
        %1766 = vmatprep.subr.bf16.mxu0 0
        %1767 = vmatpush1.bf16.msra.mxu0 0
        %1768 = vmatprep.subr.bf16.mxu0 0
        %1769 = vmatpush1.bf16.msra.mxu0 0
        %1770 = vmatprep.subr.bf16.mxu0 0
        %1771 = vmatpush1.bf16.msra.mxu0 0
        %1772 = vmatprep.subr.bf16.mxu0 0
        %1773 = vmatpush1.bf16.msra.mxu0 0
        %1774 = vmatprep.subr.bf16.mxu0 0
        %1775 = vmatpush1.bf16.msra.mxu0 0
        %1776 = vmatprep.mubr.bf16.mxu0 0
        %1777 = vmatmul.mubr.bf16.gmra.mrb[0].mxu0 %v1739
        %v1778 = vpop.f32.mrb[0].mxu0
        %v1779 = vadd.f32 0.0, %v1778
        %v1780 = vpop.f32.mrb[0].mxu0
        %v1781 = vpop.f32.mrb[0].mxu0
        %v1782 = vpop.f32.mrb[0].mxu0
        %1783 = vdwg.mxu0
        %1784 = vrot.lane.b32.xlu0 %v1443, 104
        %v1785 = vpop.permute.xlu0 %1784
        %1786 = vrot.lane.b32.xlu0 %v1448, 104
        %v1787 = vpop.permute.xlu0 %1786
        %v1789 = vsel %vm830, %v1785, 0
        %v1792 = vsel %vm830, %v1787, 0
        %1794 = vmatprep.subr.bf16.mxu0 0
        %1795 = vmatpush1.bf16.xpose.msra.mxu0 %v1792
        %1796 = vmatprep.subr.bf16.mxu0 0
        %1797 = vmatpush1.bf16.xpose.msra.mxu0 0
        %1798 = vmatprep.subr.bf16.mxu0 0
        %1799 = vmatpush1.bf16.xpose.msra.mxu0 0
        %1800 = vmatprep.subr.bf16.mxu0 0
        %1801 = vmatpush1.bf16.xpose.msra.mxu0 0
        %1802 = vmatprep.subr.bf16.mxu0 0
        %1803 = vmatpush1.bf16.xpose.msra.mxu0 0
        %1804 = vmatprep.subr.bf16.mxu0 0
        %1805 = vmatpush1.bf16.xpose.msra.mxu0 0
        %1806 = vmatprep.subr.bf16.mxu0 0
        %1807 = vmatpush1.bf16.xpose.msra.mxu0 0
        %1808 = vmatprep.subr.bf16.mxu0 0
        %1809 = vmatpush1.bf16.xpose.msra.mxu0 0
        %1810 = vmatprep.subr.bf16.mxu0 0
        %1811 = vmatpush1.bf16.xpose.msra.mxu0 0
        %1812 = vmatprep.subr.bf16.mxu0 0
        %1813 = vmatpush1.bf16.xpose.msra.mxu0 0
        %1814 = vmatprep.subr.bf16.mxu0 0
        %1815 = vmatpush1.bf16.xpose.msra.mxu0 0
        %1816 = vmatprep.subr.bf16.mxu0 0
        %1817 = vmatpush1.bf16.xpose.msra.mxu0 0
        %1818 = vmatprep.subr.bf16.mxu0 0
        %1819 = vmatpush1.bf16.xpose.msra.mxu0 0
        %1820 = vmatprep.subr.bf16.mxu0 0
        %1821 = vmatpush1.bf16.xpose.msra.mxu0 0
        %1822 = vmatprep.subr.bf16.mxu0 0
        %1823 = vmatpush1.bf16.xpose.msra.mxu0 0
        %1824 = vmatprep.subr.bf16.mxu0 0
        %1825 = vmatpush1.bf16.xpose.msra.mxu0 0
        %1826 = vmatprep.mubr.bf16.mxu0 0
        %1827 = vmatmul.mubr.bf16.gmra.mrb[0].mxu0 %v1789
        %v1828 = vpop.f32.mrb[0].mxu0
        %v1829 = vadd.f32 0.0, %v1828
        %v1830 = vpop.f32.mrb[0].mxu0
        %v1831 = vpop.f32.mrb[0].mxu0
        %v1832 = vpop.f32.mrb[0].mxu0
        %1833 = vdwg.mxu0
        %v1834 = vmul.f32 %v1829, 0.35355338
        %v1835 = vsel %vm1496, %v1834, -inf
        %1836 = vmax.xlane.f32.xlu0 %v1835
        %v1837 = vpop.xlane.xlu0 %1836
        %v1838 = vsub.f32 %v1834, %v1837
        %v1839 = vmul.f32 %v1838, 1.442695
        %v1840 = vpow.pop %v1839
        %v1841 = vsel %vm1496, %v1840, 0.0
        %1842 = vadd.xlane.f32.xlu0 %v1841
        %v1843 = vpop.xlane.xlu0 %1842
        %v1844 = vrcp.pop %v1843
        %v1845 = vmul.f32 %v1840, %v1844
        %v1846 = vpack.c.bf16 %v1845, %v1845
        %1847 = vrot.lane.b32.xlu0 %v1513, 104
        %v1848 = vpop.permute.xlu0 %1847
        %v1850 = vsel %vm1496, %v1846, 0
        %v1853 = vsel %vm1517, %v1848, 0
        %1855 = vmatprep.subr.bf16.mxu0 0
        %1856 = vmatpush1.bf16.msra.mxu0 %v1853
        %1857 = vmatprep.subr.bf16.mxu0 0
        %1858 = vmatpush1.bf16.msra.mxu0 0
        %1859 = vmatprep.subr.bf16.mxu0 0
        %1860 = vmatpush1.bf16.msra.mxu0 0
        %1861 = vmatprep.subr.bf16.mxu0 0
        %1862 = vmatpush1.bf16.msra.mxu0 0
        %1863 = vmatprep.subr.bf16.mxu0 0
        %1864 = vmatpush1.bf16.msra.mxu0 0
        %1865 = vmatprep.subr.bf16.mxu0 0
        %1866 = vmatpush1.bf16.msra.mxu0 0
        %1867 = vmatprep.subr.bf16.mxu0 0
        %1868 = vmatpush1.bf16.msra.mxu0 0
        %1869 = vmatprep.subr.bf16.mxu0 0
        %1870 = vmatpush1.bf16.msra.mxu0 0
        %1871 = vmatprep.subr.bf16.mxu0 0
        %1872 = vmatpush1.bf16.msra.mxu0 0
        %1873 = vmatprep.subr.bf16.mxu0 0
        %1874 = vmatpush1.bf16.msra.mxu0 0
        %1875 = vmatprep.subr.bf16.mxu0 0
        %1876 = vmatpush1.bf16.msra.mxu0 0
        %1877 = vmatprep.subr.bf16.mxu0 0
        %1878 = vmatpush1.bf16.msra.mxu0 0
        %1879 = vmatprep.subr.bf16.mxu0 0
        %1880 = vmatpush1.bf16.msra.mxu0 0
        %1881 = vmatprep.subr.bf16.mxu0 0
        %1882 = vmatpush1.bf16.msra.mxu0 0
        %1883 = vmatprep.subr.bf16.mxu0 0
        %1884 = vmatpush1.bf16.msra.mxu0 0
        %1885 = vmatprep.subr.bf16.mxu0 0
        %1886 = vmatpush1.bf16.msra.mxu0 0
        %1887 = vmatprep.mubr.bf16.mxu0 0
        %1888 = vmatmul.mubr.bf16.gmra.mrb[0].mxu0 %v1850
        %v1889 = vpop.f32.mrb[0].mxu0
        %v1890 = vadd.f32 0.0, %v1889
        %v1891 = vpop.f32.mrb[0].mxu0
        %v1892 = vpop.f32.mrb[0].mxu0
        %v1893 = vpop.f32.mrb[0].mxu0
        %1894 = vdwg.mxu0
        %1896 = vrot.lane.b32.xlu0 %v1668, 8
        %v1897 = vpop.permute.xlu0 %1896
        %1900 = vrot.lane.b32.xlu0 %v1779, 16
        %v1901 = vpop.permute.xlu0 %1900
        %1904 = vrot.lane.b32.xlu0 %v1890, 24
        %v1905 = vpop.permute.xlu0 %1904
        %v1907 = vsel %vm830, %v1556, %v1897
        %v1908 = vsel %vm1285, %v1907, %v1901
        %v1909 = vsel %vm1287, %v1908, %v1905
        %v1910 = vpack.c.bf16 %v1909, %v1909
        %v1911 = vld [vmem:[%s12] sm:$0xf]
        %v1912 = vld [vmem:[%s12 + $0x4] sm:$0xf]
        %v1913 = vld [vmem:[%s12 + $0x8] sm:$0xf]
        %v1914 = vld [vmem:[%s12 + $0xc] sm:$0xf]
        %v1915 = vld [vmem:[%s13] sm:$0x1]
        %v1917 = vlaneseq
        %v1918 = vshrl.u32 %v1917, 7
        %v1919 = vsub.s32 0, %v1918
        %v1920 = vrot.slane %v1915, %v1919
        %v1926 = vunpack.c.l.b16 %v1911
        %v1927 = vunpack.c.l.b16 %v1912
        %v1928 = vunpack.c.l.b16 %v1913
        %v1929 = vunpack.c.l.b16 %v1914
        %v1930 = vpack.c.b16 %v1927, %v1926
        %v1931 = vpack.c.b16 %v1929, %v1928
        %v1935 = vsel %vm742, %v1910, 0
        %1937 = vmatprep.subr.bf16.mxu0 0
        %1938 = vmatpush1.bf16.msra.mxu0 %v1930
        %1939 = vmatprep.subr.bf16.mxu0 0
        %1940 = vmatpush1.bf16.msra.mxu0 %v1931
        %1941 = vmatprep.subr.bf16.mxu0 0
        %1942 = vmatpush1.bf16.msra.mxu0 0
        %1943 = vmatprep.subr.bf16.mxu0 0
        %1944 = vmatpush1.bf16.msra.mxu0 0
        %1945 = vmatprep.subr.bf16.mxu0 0
        %1946 = vmatpush1.bf16.msra.mxu0 0
        %1947 = vmatprep.subr.bf16.mxu0 0
        %1948 = vmatpush1.bf16.msra.mxu0 0
        %1949 = vmatprep.subr.bf16.mxu0 0
        %1950 = vmatpush1.bf16.msra.mxu0 0
        %1951 = vmatprep.subr.bf16.mxu0 0
        %1952 = vmatpush1.bf16.msra.mxu0 0
        %1953 = vmatprep.subr.bf16.mxu0 0
        %1954 = vmatpush1.bf16.msra.mxu0 0
        %1955 = vmatprep.subr.bf16.mxu0 0
        %1956 = vmatpush1.bf16.msra.mxu0 0
        %1957 = vmatprep.subr.bf16.mxu0 0
        %1958 = vmatpush1.bf16.msra.mxu0 0
        %1959 = vmatprep.subr.bf16.mxu0 0
        %1960 = vmatpush1.bf16.msra.mxu0 0
        %1961 = vmatprep.subr.bf16.mxu0 0
        %1962 = vmatpush1.bf16.msra.mxu0 0
        %1963 = vmatprep.subr.bf16.mxu0 0
        %1964 = vmatpush1.bf16.msra.mxu0 0
        %1965 = vmatprep.subr.bf16.mxu0 0
        %1966 = vmatpush1.bf16.msra.mxu0 0
        %1967 = vmatprep.subr.bf16.mxu0 0
        %1968 = vmatpush1.bf16.msra.mxu0 0
        %1969 = vmatprep.mubr.bf16.mxu0 0
        %1970 = vmatmul.mubr.bf16.gmra.mrb[0].mxu0 %v1935
        %v1971 = vpop.f32.mrb[0].mxu0
        %v1972 = vadd.f32 %v1920, %v1971
        %v1973 = vpop.f32.mrb[0].mxu0
        %v1974 = vpop.f32.mrb[0].mxu0
        %v1975 = vpop.f32.mrb[0].mxu0
        %1976 = vdwg.mxu0
        %v1977 = vadd.f32 %v1371, %v1972
        %v1978 = vsel %vm742, %v1977, 0.0
        %1979 = vadd.xlane.f32.xlu0 %v1978
        %v1980 = vpop.xlane.xlu0 %1979
        %v1981 = vmul.f32 %v1980, %v746
        %v1982 = vsub.f32 %v1977, %v1981
        %v1983 = vmul.f32 %v1982, %v1982
        %v1984 = vsel %vm742, %v1983, 0.0
        %1985 = vadd.xlane.f32.xlu0 %v1984
        %v1986 = vpop.xlane.xlu0 %1985
        %v1987 = vmul.f32 %v1986, %v746
        %v1988 = vadd.f32 %v1987, 1e-05
        %v1989 = vrsqrt.pop %v1988
        %v1990 = vmul.f32 %v1982, %v1989
        %v1991 = vmul.f32 %v1990, %v732
        %v1992 = vadd.f32 %v1991, %v739
        %v1993 = vpack.c.bf16 %v1992, %v1992
        %v1994 = vld [vmem:[%s14] sm:$0xf]
        %v1995 = vld [vmem:[%s14 + $0x4] sm:$0xf]
        %v1996 = vld [vmem:[%s14 + $0x8] sm:$0xf]
        %v1997 = vld [vmem:[%s14 + $0xc] sm:$0xf]
        %v1998 = vld [vmem:[%s15] sm:$0x1]
        %v2000 = vlaneseq
        %v2001 = vshrl.u32 %v2000, 7
        %v2002 = vsub.s32 0, %v2001
        %v2003 = vrot.slane %v1998, %v2002
        %v2009 = vunpack.c.l.b16 %v1994
        %v2010 = vunpack.c.l.b16 %v1995
        %v2011 = vunpack.c.l.b16 %v1996
        %v2012 = vunpack.c.l.b16 %v1997
        %v2013 = vpack.c.b16 %v2010, %v2009
        %v2014 = vpack.c.b16 %v2012, %v2011
        %v2018 = vsel %vm742, %v1993, 0
        %2020 = vmatprep.subr.bf16.mxu0 0
        %2021 = vmatpush1.bf16.msra.mxu0 %v2013
        %2022 = vmatprep.subr.bf16.mxu0 0
        %2023 = vmatpush1.bf16.msra.mxu0 %v2014
        %2024 = vmatprep.subr.bf16.mxu0 0
        %2025 = vmatpush1.bf16.msra.mxu0 0
        %2026 = vmatprep.subr.bf16.mxu0 0
        %2027 = vmatpush1.bf16.msra.mxu0 0
        %2028 = vmatprep.subr.bf16.mxu0 0
        %2029 = vmatpush1.bf16.msra.mxu0 0
        %2030 = vmatprep.subr.bf16.mxu0 0
        %2031 = vmatpush1.bf16.msra.mxu0 0
        %2032 = vmatprep.subr.bf16.mxu0 0
        %2033 = vmatpush1.bf16.msra.mxu0 0
        %2034 = vmatprep.subr.bf16.mxu0 0
        %2035 = vmatpush1.bf16.msra.mxu0 0
        %2036 = vmatprep.subr.bf16.mxu0 0
        %2037 = vmatpush1.bf16.msra.mxu0 0
        %2038 = vmatprep.subr.bf16.mxu0 0
        %2039 = vmatpush1.bf16.msra.mxu0 0
        %2040 = vmatprep.subr.bf16.mxu0 0
        %2041 = vmatpush1.bf16.msra.mxu0 0
        %2042 = vmatprep.subr.bf16.mxu0 0
        %2043 = vmatpush1.bf16.msra.mxu0 0
        %2044 = vmatprep.subr.bf16.mxu0 0
        %2045 = vmatpush1.bf16.msra.mxu0 0
        %2046 = vmatprep.subr.bf16.mxu0 0
        %2047 = vmatpush1.bf16.msra.mxu0 0
        %2048 = vmatprep.subr.bf16.mxu0 0
        %2049 = vmatpush1.bf16.msra.mxu0 0
        %2050 = vmatprep.subr.bf16.mxu0 0
        %2051 = vmatpush1.bf16.msra.mxu0 0
        %2052 = vmatprep.mubr.bf16.mxu0 0
        %2053 = vmatmul.mubr.bf16.gmra.mrb[0].mxu0 %v2018
        %v2054 = vpop.f32.mrb[0].mxu0
        %v2055 = vadd.f32 %v2003, %v2054
        %v2056 = vpop.f32.mrb[0].mxu0
        %v2057 = vpop.f32.mrb[0].mxu0
        %v2058 = vpop.f32.mrb[0].mxu0
        %2059 = vdwg.mxu0
        %v2060 = vmax.f32 %v2055, 0.0
        %v2061 = vmul.f32 %v2060, %v2060
        %v2062 = vpack.c.bf16 %v2061, %v2061
        %v2063 = vld [vmem:[%s16] sm:$0xf]
        %v2064 = vld [vmem:[%s16 + $0x4] sm:$0xf]
        %v2065 = vld [vmem:[%s16 + $0x8] sm:$0xf]
        %v2066 = vld [vmem:[%s16 + $0xc] sm:$0xf]
        %v2067 = vld [vmem:[%s16 + $0x10] sm:$0xf]
        %v2068 = vld [vmem:[%s16 + $0x14] sm:$0xf]
        %v2069 = vld [vmem:[%s16 + $0x18] sm:$0xf]
        %v2070 = vld [vmem:[%s16 + $0x1c] sm:$0xf]
        %v2071 = vld [vmem:[%s17] sm:$0x1]
        %v2073 = vlaneseq
        %v2074 = vshrl.u32 %v2073, 7
        %v2075 = vsub.s32 0, %v2074
        %v2076 = vrot.slane %v2071, %v2075
        %v2086 = vunpack.c.l.b16 %v2063
        %v2087 = vunpack.c.l.b16 %v2064
        %v2088 = vunpack.c.l.b16 %v2065
        %v2089 = vunpack.c.l.b16 %v2066
        %v2090 = vunpack.c.l.b16 %v2067
        %v2091 = vunpack.c.l.b16 %v2068
        %v2092 = vunpack.c.l.b16 %v2069
        %v2093 = vunpack.c.l.b16 %v2070
        %v2094 = vpack.c.b16 %v2087, %v2086
        %v2095 = vpack.c.b16 %v2089, %v2088
        %v2096 = vpack.c.b16 %v2091, %v2090
        %v2097 = vpack.c.b16 %v2093, %v2092
        %vm2102 = vcmask 523264
        %v2104 = vsel %vm2102, %v2062, 0
        %2106 = vmatprep.subr.bf16.mxu0 0
        %2107 = vmatpush1.bf16.msra.mxu0 %v2094
        %2108 = vmatprep.subr.bf16.mxu0 0
        %2109 = vmatpush1.bf16.msra.mxu0 %v2095
        %2110 = vmatprep.subr.bf16.mxu0 0
        %2111 = vmatpush1.bf16.msra.mxu0 %v2096
        %2112 = vmatprep.subr.bf16.mxu0 0
        %2113 = vmatpush1.bf16.msra.mxu0 %v2097
        %2114 = vmatprep.subr.bf16.mxu0 0
        %2115 = vmatpush1.bf16.msra.mxu0 0
        %2116 = vmatprep.subr.bf16.mxu0 0
        %2117 = vmatpush1.bf16.msra.mxu0 0
        %2118 = vmatprep.subr.bf16.mxu0 0
        %2119 = vmatpush1.bf16.msra.mxu0 0
        %2120 = vmatprep.subr.bf16.mxu0 0
        %2121 = vmatpush1.bf16.msra.mxu0 0
        %2122 = vmatprep.subr.bf16.mxu0 0
        %2123 = vmatpush1.bf16.msra.mxu0 0
        %2124 = vmatprep.subr.bf16.mxu0 0
        %2125 = vmatpush1.bf16.msra.mxu0 0
        %2126 = vmatprep.subr.bf16.mxu0 0
        %2127 = vmatpush1.bf16.msra.mxu0 0
        %2128 = vmatprep.subr.bf16.mxu0 0
        %2129 = vmatpush1.bf16.msra.mxu0 0
        %2130 = vmatprep.subr.bf16.mxu0 0
        %2131 = vmatpush1.bf16.msra.mxu0 0
        %2132 = vmatprep.subr.bf16.mxu0 0
        %2133 = vmatpush1.bf16.msra.mxu0 0
        %2134 = vmatprep.subr.bf16.mxu0 0
        %2135 = vmatpush1.bf16.msra.mxu0 0
        %2136 = vmatprep.subr.bf16.mxu0 0
        %2137 = vmatpush1.bf16.msra.mxu0 0
        %2138 = vmatprep.mubr.bf16.mxu0 0
        %2139 = vmatmul.mubr.bf16.gmra.mrb[0].mxu0 %v2104
        %v2140 = vpop.f32.mrb[0].mxu0
        %v2141 = vadd.f32 %v2076, %v2140
        %v2142 = vpop.f32.mrb[0].mxu0
        %v2143 = vpop.f32.mrb[0].mxu0
        %v2144 = vpop.f32.mrb[0].mxu0
        %2145 = vdwg.mxu0
        %v2146 = vadd.f32 %v1992, %v2141
        %v2147 = vsel %vm742, %v2146, 0.0
        %2148 = vadd.xlane.f32.xlu0 %v2147
        %v2149 = vpop.xlane.xlu0 %2148
        %v2150 = vmul.f32 %v2149, %v746
        %v2151 = vsub.f32 %v2146, %v2150
        %v2152 = vmul.f32 %v2151, %v2151
        %v2153 = vsel %vm742, %v2152, 0.0
        %2154 = vadd.xlane.f32.xlu0 %v2153
        %v2155 = vpop.xlane.xlu0 %2154
        %v2156 = vmul.f32 %v2155, %v746
        %v2157 = vadd.f32 %v2156, 1e-05
        %v2158 = vrsqrt.pop %v2157
        %v2159 = vmul.f32 %v2151, %v2158
        %v2160 = vmul.f32 %v2159, %v732
        %v2161 = vadd.f32 %v2160, %v739
        %2162 = vst.msk [vmem:[%s619] sm:$0xff] %vm742, %v2161
        %s2163 = sand.u32 %s442, 1
        %s2164 = scalar_lea.sflag [#allocation6], %s2163
        %s2165 = sand.u32 %s442, 1
        %s2166 = smul.addr %s2165, 8
        %s2167 = scalar_lea.vmem [#allocation9], %s2166
        // Predicated region
        $region105: #{tpu_custom_call.1} parent=91 // pred_check
          %p2168 = pneg %p452
        $region106: #{tpu_custom_call.1} parent=91 // pred_check_branch
          %2170 = sbr.rel (%p2168) target = $region108
        $region107: #{tpu_custom_call.1} parent=91 // pred_region
          %s2172 = ssub.s32 128, 128
          %2173 = vsyncadd %s2164, %s2172
          %s2174 = smul.addr %s38, 128
          %s2175 = scalar_lea.hbm %s18, %s2174
          %s2177 = sshll.u32 %s2167, 4
          %s2178 = int_to_ptr.vmem [resolvable:$true] %s2177
          %2180 = dma.vmem_to_hbm [thread:$0]  %s2178, 128, %s2175, %s2164
        $region108: #{tpu_custom_call.1} parent=91 // pred_fallthru
          _
      $region92: #{tpu_custom_call.1} parent=5 // pred_fallthru
        _
      %p2181 = scmp.le.s32.totalorder 2, %s29
      // Predicated region
      $region109: #{tpu_custom_call.1} parent=5 // pred_check
        %p2182 = pneg %p2181
      $region110: #{tpu_custom_call.1} parent=5 // pred_check_branch
        %2184 = sbr.rel (%p2182) target = $region112
      $region111: #{tpu_custom_call.1} parent=5 // pred_region
        %s2185 = ssub.s32 %s29, 2
        // Predicated region
        $region113: #{tpu_custom_call.1} parent=111 // pred_check
          %p2186 = pneg %p458
        $region114: #{tpu_custom_call.1} parent=111 // pred_check_branch
          %2188 = sbr.rel (%p2186) target = $region116
        $region115: #{tpu_custom_call.1} parent=111 // pred_region
          %s2189 = sand.u32 %s443, 1
          %s2190 = scalar_lea.sflag [#allocation6], %s2189
          %s2191 = sand.u32 %s443, 1
          %s2192 = smul.addr %s2191, 8
          %s2193 = scalar_lea.vmem [#allocation9], %s2192
          %2194 = dma.done %s2190, 128
        $region116: #{tpu_custom_call.1} parent=111 // pred_fallthru
          _
      $region112: #{tpu_custom_call.1} parent=5 // pred_fallthru
        _
    $region6: #{tpu_custom_call.1} parent=1 // loop_footer
      %s33 = sadd.s32 1, %s29
    $region7: #{tpu_custom_call.1} parent=1 // loop_footer_branch
      %28 = sbr.rel target = $region3
    $region8: #{tpu_custom_call.1} parent=1 // loop_exit
      _
    %2195 = vsyncpa [#allocation5], 1
    %s2196 = scalar_lea.sflag [#allocation5], 1
    %2197 = vsyncpa %s2196, 1
    %2198 = vsyncpa [#allocation8], 1
    %2199 = vsyncpa [#allocation6], 1
    %s2200 = scalar_lea.sflag [#allocation6], 1
    %2201 = vsyncpa %s2200, 1

</llo_original>
